<compile_context>
chip_gen: v6e
topology: v6e:2x2x1
jax: 0.10.0
libtpu: 0.0.40
codegen_flags: <defaults>
</compile_context>

<pallas_src>
import jax
import jax.numpy as jnp
from jax.experimental import pallas as pl
from jax.experimental.pallas import tpu as pltpu


# -----------------------------------------------------------------------------
# Fused BasicBlock kernel (one image per grid step)
# -----------------------------------------------------------------------------
def _make_block_kernel(stride, ho, wo, cin, planes, has_proj):
    """relu( bn2(conv2( relu(bn1(conv1(x))) )) + shortcut(x) ), one image."""
    howo = ho * wo
    s = stride

    def kernel(*refs):
        if has_proj:
            (xs_ref, w1_ref, b1_ref, w2_ref, b2_ref, wsc_ref, bsc_ref,
             out_ref, out1p_ref) = refs
        else:
            (xs_ref, w1_ref, b1_ref, w2_ref, b2_ref,
             out_ref, out1p_ref) = refs

        # ---- conv1 (3x3, stride s) + bn1 + relu: 9 shifted bf16 matmuls, f32 acc
        acc1 = jnp.zeros((howo, planes), jnp.float32)
        center = None
        for ky in range(3):
            for kx in range(3):
                py, oy = ky % s, ky // s
                px, ox = kx % s, kx // s
                a = xs_ref[py * s + px, pl.ds(oy, ho), pl.ds(ox, wo), :]
                a = a.reshape(howo, cin)
                if (ky, kx) == (1, 1):
                    # tap (1,1) rows are exactly x[n, s*i, s*j, :] -> shortcut input
                    center = a
                acc1 = acc1 + jnp.dot(a, w1_ref[ky * 3 + kx],
                                      preferred_element_type=jnp.float32)
        out1 = jnp.maximum(acc1 + b1_ref[...], 0.0)

        # Stage out1 into a zero-padded VMEM scratch so conv2 taps are plain slices.
        out1p_ref[...] = jnp.zeros_like(out1p_ref)
        out1p_ref[pl.ds(1, ho), pl.ds(1, wo), :] = (
            out1.reshape(ho, wo, planes).astype(out1p_ref.dtype))

        # ---- conv2 (3x3, stride 1) + bn2
        acc2 = jnp.zeros((howo, planes), jnp.float32)
        for ky in range(3):
            for kx in range(3):
                a = out1p_ref[pl.ds(ky, ho), pl.ds(kx, wo), :].reshape(howo, planes)
                acc2 = acc2 + jnp.dot(a, w2_ref[ky * 3 + kx],
                                      preferred_element_type=jnp.float32)
        main = acc2 + b2_ref[...]

        # ---- shortcut: 1x1-conv + bn projection, or plain identity add
        if has_proj:
            short = jnp.dot(center, wsc_ref[...],
                            preferred_element_type=jnp.float32) + bsc_ref[...]
        else:
            short = center.astype(jnp.float32)

        out_ref[...] = jnp.maximum(main + short, 0.0).reshape(1, howo, planes)

    return kernel


# -----------------------------------------------------------------------------
# JAX glue: BN folding, space-to-depth input prep, VMEM budget, block wrapper
# -----------------------------------------------------------------------------
def _fold_bn(gamma, beta, mean, var, eps=1e-5):
    scale = (gamma / jnp.sqrt(var + eps)).astype(jnp.float32)     # (planes,)
    bias = (beta - mean * scale).astype(jnp.float32)              # (planes,)
    return scale, bias[None, :]                                   # bias (1, planes)


def _space_to_depth_pad1(x_nhwc, stride):
    """Zero-pad spatially by 1, regroup into stride-parity planes so that
    xs[n*s*s + py*s + px, a, b, :] == x_padded[n, a*s + py, b*s + px, :]."""
    n, h, w, c = x_nhwc.shape
    s = stride
    xp = jnp.pad(x_nhwc, ((0, 0), (1, 1), (1, 1), (0, 0)))
    hp, wp = h + 2, w + 2
    hq, wq = -(-hp // s), -(-wp // s)
    xp = jnp.pad(xp, ((0, 0), (0, hq * s - hp), (0, wq * s - wp), (0, 0)))
    xs = xp.reshape(n, hq, s, wq, s, c).transpose(0, 2, 4, 1, 3, 5)
    return xs.reshape(n * s * s, hq, wq, c), hq, wq


def _tile_vmem_bytes(shape, itemsize):
    """Rough VMEM footprint of a tile incl. (sublane, lane) layout padding."""
    sub = 8 if itemsize >= 4 else 16
    dims = list(shape)
    dims[-1] = -(-dims[-1] // 128) * 128
    if len(dims) >= 2:
        dims[-2] = -(-dims[-2] // sub) * sub
    total = itemsize
    for d in dims:
        total *= d
    return total


def basic_block_forward(x_nchw, params, stride):
    """Pallas-backed forward of BasicBlock. x_nchw: (N, Cin, H, W) float32."""
    x = jnp.transpose(x_nchw, (0, 2, 3, 1)).astype(jnp.float32)   # NHWC
    n, h, w, cin = x.shape
    planes = params['w1'].shape[0]
    ho = (h - 1) // stride + 1
    wo = (w - 1) // stride + 1
    has_proj = (stride != 1) or (cin != planes)

    # Fold BN scale into bf16 weights; keep per-channel bias in f32.
    s1, b1 = _fold_bn(params['bn1_gamma'], params['bn1_beta'],
                      params['bn1_mean'], params['bn1_var'])
    s2, b2 = _fold_bn(params['bn2_gamma'], params['bn2_beta'],
                      params['bn2_mean'], params['bn2_var'])
    w1m = ((jnp.transpose(params['w1'], (2, 3, 1, 0)) * s1)
           .reshape(9, cin, planes).astype(jnp.bfloat16))
    w2m = ((jnp.transpose(params['w2'], (2, 3, 1, 0)) * s2)
           .reshape(9, planes, planes).astype(jnp.bfloat16))

    xs, hq, wq = _space_to_depth_pad1(x, stride)
    xs = xs.astype(jnp.bfloat16)                                  # halves HBM traffic

    args = [xs, w1m, b1, w2m, b2]
    in_specs = [
        pl.BlockSpec((stride * stride, hq, wq, cin), lambda i: (i, 0, 0, 0)),
        pl.BlockSpec((9, cin, planes), lambda i: (0, 0, 0)),
        pl.BlockSpec((1, planes), lambda i: (0, 0)),
        pl.BlockSpec((9, planes, planes), lambda i: (0, 0, 0)),
        pl.BlockSpec((1, planes), lambda i: (0, 0)),
    ]
    if has_proj:
        ssc, bsc = _fold_bn(params['bnsc_gamma'], params['bnsc_beta'],
                            params['bnsc_mean'], params['bnsc_var'])
        wscm = (params['w_sc'][:, :, 0, 0].T * ssc).astype(jnp.bfloat16)
        args += [wscm, bsc]
        in_specs += [pl.BlockSpec((cin, planes), lambda i: (0, 0)),
                     pl.BlockSpec((1, planes), lambda i: (0, 0))]

    # Explicit VMEM budget: double-buffered image tiles + resident weights +
    # padded-intermediate scratch + f32 accumulators.  Clamped well under the
    # v7x 64 MiB physical ceiling (and above the v5e 16 MiB default scoped limit).
    tiles = [((stride * stride, hq, wq, cin), 2, 2),
             ((1, ho * wo, planes), 4, 2),
             ((9, cin, planes), 2, 2),
             ((9, planes, planes), 2, 2),
             ((1, planes), 4, 6),
             ((cin, planes), 2, 2),
             ((ho + 2, wo + 2, planes), 2, 1),
             ((ho * wo, planes), 4, 2)]
    est = sum(m * _tile_vmem_bytes(shp, isz) for shp, isz, m in tiles)
    vmem_limit = int(min(48 * 2**20, max(32 * 2**20, 4 * est)))

    kernel = _make_block_kernel(stride, ho, wo, cin, planes, has_proj)
    out = pl.pallas_call(
        kernel,
        out_shape=jax.ShapeDtypeStruct((n, ho * wo, planes), jnp.float32),
        grid=(n,),
        in_specs=in_specs,
        out_specs=pl.BlockSpec((1, ho * wo, planes), lambda i: (i, 0, 0)),
        scratch_shapes=[pltpu.VMEM((ho + 2, wo + 2, planes), jnp.bfloat16)],
        compiler_params=pltpu.CompilerParams(
            dimension_semantics=("parallel",),
            vmem_limit_bytes=vmem_limit),
    )(*args)

    out = out.reshape(n, ho, wo, planes)
    return jnp.transpose(out, (0, 3, 1, 2))                       # back to NCHW


# -----------------------------------------------------------------------------
# Parameter init + pure-JAX reference (exact module semantics, f32) for checking
# -----------------------------------------------------------------------------
def init_params(key, in_planes, planes, stride):
    ks = jax.random.split(key, 16)
    p = {
        'w1': jax.random.normal(ks[0], (planes, in_planes, 3, 3), jnp.float32) * 0.1,
        'bn1_gamma': 1.0 + 0.1 * jax.random.normal(ks[1], (planes,), jnp.float32),
        'bn1_beta': 0.1 * jax.random.normal(ks[2], (planes,), jnp.float32),
        'bn1_mean': 0.1 * jax.random.normal(ks[3], (planes,), jnp.float32),
        'bn1_var': 0.5 + jnp.abs(jax.random.normal(ks[4], (planes,), jnp.float32)) * 0.1,
        'w2': jax.random.normal(ks[5], (planes, planes, 3, 3), jnp.float32) * 0.1,
        'bn2_gamma': 1.0 + 0.1 * jax.random.normal(ks[6], (planes,), jnp.float32),
        'bn2_beta': 0.1 * jax.random.normal(ks[7], (planes,), jnp.float32),
        'bn2_mean': 0.1 * jax.random.normal(ks[8], (planes,), jnp.float32),
        'bn2_var': 0.5 + jnp.abs(jax.random.normal(ks[9], (planes,), jnp.float32)) * 0.1,
    }
    if stride != 1 or in_planes != planes:
        p.update({
            'w_sc': jax.random.normal(ks[10], (planes, in_planes, 1, 1), jnp.float32) * 0.1,
            'bnsc_gamma': 1.0 + 0.1 * jax.random.normal(ks[11], (planes,), jnp.float32),
            'bnsc_beta': 0.1 * jax.random.normal(ks[12], (planes,), jnp.float32),
            'bnsc_mean': 0.1 * jax.random.normal(ks[13], (planes,), jnp.float32),
            'bnsc_var': 0.5 + jnp.abs(jax.random.normal(ks[14], (planes,), jnp.float32)) * 0.1,
        })
    return p


def reference_forward(x, params, stride, eps=1e-5):
    dn = ('NCHW', 'OIHW', 'NCHW')

    def bn(y, g, b, m, v):
        g, b, m, v = (t[None, :, None, None] for t in (g, b, m, v))
        return (y - m) / jnp.sqrt(v + eps) * g + b

    cin = x.shape[1]
    planes = params['w1'].shape[0]
    out = jax.lax.conv_general_dilated(x, params['w1'], (stride, stride),
                                       ((1, 1), (1, 1)), dimension_numbers=dn)
    out = jax.nn.relu(bn(out, params['bn1_gamma'], params['bn1_beta'],
                         params['bn1_mean'], params['bn1_var']))
    out = jax.lax.conv_general_dilated(out, params['w2'], (1, 1),
                                       ((1, 1), (1, 1)), dimension_numbers=dn)
    out = bn(out, params['bn2_gamma'], params['bn2_beta'],
             params['bn2_mean'], params['bn2_var'])
    if stride != 1 or cin != planes:
        sc = jax.lax.conv_general_dilated(x, params['w_sc'], (stride, stride),
                                          ((0, 0), (0, 0)), dimension_numbers=dn)
        sc = bn(sc, params['bnsc_gamma'], params['bnsc_beta'],
                params['bnsc_mean'], params['bnsc_var'])
    else:
        sc = x
    return jax.nn.relu(out + sc)


# -----------------------------------------------------------------------------
if __name__ == "__main__":
    key = jax.random.PRNGKey(0)
    kx_, kp1, kp2 = jax.random.split(key, 3)
    x = jax.random.normal(kx_, (2, 4, 16, 16), jnp.float32)

    fwd = jax.jit(basic_block_forward, static_argnames="stride")
    # Tolerance reflects bf16 MXU operands vs. the pure-f32 reference.
    TOL = dict(rtol=5e-2, atol=5e-2)

    # Case 1: downsampling block (stride=2, channels 4 -> 8, projection shortcut)
    params_ds = init_params(kp1, in_planes=4, planes=8, stride=2)
    out_ds = jax.block_until_ready(fwd(x, params_ds, stride=2))
    ref_ds = reference_forward(x, params_ds, stride=2)
    assert out_ds.shape == (2, 8, 8, 8)
    assert jnp.allclose(out_ds, ref_ds, **TOL), "downsample block mismatch"

    # Case 2: identity block (stride=1, 4 -> 4, identity shortcut)
    params_id = init_params(kp2, in_planes=4, planes=4, stride=1)
    out_id = jax.block_until_ready(fwd(x, params_id, stride=1))
    ref_id = reference_forward(x, params_id, stride=1)
    assert out_id.shape == (2, 4, 16, 16)
    assert jnp.allclose(out_id, ref_id, **TOL), "identity block mismatch"

    print("KERNEL_OK")
</pallas_src>

<mosaic_0001>
module attributes {stable_mosaic.version = 11 : i64} {
  func.func @kernel(%arg0: i32, %arg1: memref<4x9x9x4xbf16, #tpu.memory_space<vmem>>, %arg2: memref<9x4x8xbf16, #tpu.memory_space<vmem>>, %arg3: memref<1x8xf32, #tpu.memory_space<vmem>>, %arg4: memref<9x8x8xbf16, #tpu.memory_space<vmem>>, %arg5: memref<1x8xf32, #tpu.memory_space<vmem>>, %arg6: memref<4x8xbf16, #tpu.memory_space<vmem>>, %arg7: memref<1x8xf32, #tpu.memory_space<vmem>>, %arg8: memref<1x64x8xf32, #tpu.memory_space<vmem>>, %arg9: memref<10x10x8xbf16, #tpu.memory_space<vmem>>) attributes {dimension_semantics = [#tpu.dimension_semantics<parallel>], iteration_bounds = array<i64: 2>, scalar_prefetch = 0 : i64, scratch_operands = 1 : i64, tpu.core_type = #tpu.core_type<tc>, window_params = [{transform_indices = @transform_0, window_bounds = array<i64: 4, 9, 9, 4>}, {pipeline_mode = #tpu.pipeline_mode<synchronous>, transform_indices = @transform_1, window_bounds = array<i64: 9, 4, 8>}, {pipeline_mode = #tpu.pipeline_mode<synchronous>, transform_indices = @transform_2, window_bounds = array<i64: 1, 8>}, {pipeline_mode = #tpu.pipeline_mode<synchronous>, transform_indices = @transform_3, window_bounds = array<i64: 9, 8, 8>}, {pipeline_mode = #tpu.pipeline_mode<synchronous>, transform_indices = @transform_4, window_bounds = array<i64: 1, 8>}, {pipeline_mode = #tpu.pipeline_mode<synchronous>, transform_indices = @transform_5, window_bounds = array<i64: 4, 8>}, {pipeline_mode = #tpu.pipeline_mode<synchronous>, transform_indices = @transform_6, window_bounds = array<i64: 1, 8>}, {transform_indices = @transform_7, window_bounds = array<i64: 1, 64, 8>}]} {
    %cst = arith.constant 0.000000e+00 : f32
    %0 = vector.broadcast %cst : f32 to vector<64x8xf32>
    %c0 = arith.constant 0 : index
    %c0_0 = arith.constant 0 : index
    %c0_1 = arith.constant 0 : index
    %c0_2 = arith.constant 0 : index
    %1 = vector.load %arg1[%c0, %c0_0, %c0_1, %c0_2] : memref<4x9x9x4xbf16, #tpu.memory_space<vmem>>, vector<1x8x8x4xbf16>
    %2 = vector.shape_cast %1 : vector<1x8x8x4xbf16> to vector<8x8x4xbf16>
    %3 = vector.shape_cast %2 : vector<8x8x4xbf16> to vector<64x4xbf16>
    %c0_3 = arith.constant 0 : index
    %c0_4 = arith.constant 0 : index
    %c0_5 = arith.constant 0 : index
    %4 = vector.load %arg2[%c0_3, %c0_4, %c0_5] : memref<9x4x8xbf16, #tpu.memory_space<vmem>>, vector<1x4x8xbf16>
    %5 = vector.shape_cast %4 : vector<1x4x8xbf16> to vector<4x8xbf16>
    %cst_6 = arith.constant dense<0.000000e+00> : vector<64x8xf32>
    %6 = tpu.matmul %3, %5, %cst_6 {dimension_numbers = #tpu.dot_dimension_numbers<[1], [0], [0], [1], [0, 0, 1, 1], [], []>} : vector<64x4xbf16>, vector<4x8xbf16>, vector<64x8xf32> -> vector<64x8xf32>
    %7 = arith.addf %0, %6 : vector<64x8xf32>
    %c1 = arith.constant 1 : index
    %c0_7 = arith.constant 0 : index
    %c0_8 = arith.constant 0 : index
    %c0_9 = arith.constant 0 : index
    %8 = vector.load %arg1[%c1, %c0_7, %c0_8, %c0_9] : memref<4x9x9x4xbf16, #tpu.memory_space<vmem>>, vector<1x8x8x4xbf16>
    %9 = vector.shape_cast %8 : vector<1x8x8x4xbf16> to vector<8x8x4xbf16>
    %10 = vector.shape_cast %9 : vector<8x8x4xbf16> to vector<64x4xbf16>
    %c1_10 = arith.constant 1 : index
    %c0_11 = arith.constant 0 : index
    %c0_12 = arith.constant 0 : index
    %11 = vector.load %arg2[%c1_10, %c0_11, %c0_12] : memref<9x4x8xbf16, #tpu.memory_space<vmem>>, vector<1x4x8xbf16>
    %12 = vector.shape_cast %11 : vector<1x4x8xbf16> to vector<4x8xbf16>
    %cst_13 = arith.constant dense<0.000000e+00> : vector<64x8xf32>
    %13 = tpu.matmul %10, %12, %cst_13 {dimension_numbers = #tpu.dot_dimension_numbers<[1], [0], [0], [1], [0, 0, 1, 1], [], []>} : vector<64x4xbf16>, vector<4x8xbf16>, vector<64x8xf32> -> vector<64x8xf32>
    %14 = arith.addf %7, %13 : vector<64x8xf32>
    %c0_14 = arith.constant 0 : index
    %c0_15 = arith.constant 0 : index
    %c1_16 = arith.constant 1 : index
    %c0_17 = arith.constant 0 : index
    %15 = vector.load %arg1[%c0_14, %c0_15, %c1_16, %c0_17] : memref<4x9x9x4xbf16, #tpu.memory_space<vmem>>, vector<1x8x8x4xbf16>
    %16 = vector.shape_cast %15 : vector<1x8x8x4xbf16> to vector<8x8x4xbf16>
    %17 = vector.shape_cast %16 : vector<8x8x4xbf16> to vector<64x4xbf16>
    %c2 = arith.constant 2 : index
    %c0_18 = arith.constant 0 : index
    %c0_19 = arith.constant 0 : index
    %18 = vector.load %arg2[%c2, %c0_18, %c0_19] : memref<9x4x8xbf16, #tpu.memory_space<vmem>>, vector<1x4x8xbf16>
    %19 = vector.shape_cast %18 : vector<1x4x8xbf16> to vector<4x8xbf16>
    %cst_20 = arith.constant dense<0.000000e+00> : vector<64x8xf32>
    %20 = tpu.matmul %17, %19, %cst_20 {dimension_numbers = #tpu.dot_dimension_numbers<[1], [0], [0], [1], [0, 0, 1, 1], [], []>} : vector<64x4xbf16>, vector<4x8xbf16>, vector<64x8xf32> -> vector<64x8xf32>
    %21 = arith.addf %14, %20 : vector<64x8xf32>
    %c2_21 = arith.constant 2 : index
    %c0_22 = arith.constant 0 : index
    %c0_23 = arith.constant 0 : index
    %c0_24 = arith.constant 0 : index
    %22 = vector.load %arg1[%c2_21, %c0_22, %c0_23, %c0_24] : memref<4x9x9x4xbf16, #tpu.memory_space<vmem>>, vector<1x8x8x4xbf16>
    %23 = vector.shape_cast %22 : vector<1x8x8x4xbf16> to vector<8x8x4xbf16>
    %24 = vector.shape_cast %23 : vector<8x8x4xbf16> to vector<64x4xbf16>
    %c3 = arith.constant 3 : index
    %c0_25 = arith.constant 0 : index
    %c0_26 = arith.constant 0 : index
    %25 = vector.load %arg2[%c3, %c0_25, %c0_26] : memref<9x4x8xbf16, #tpu.memory_space<vmem>>, vector<1x4x8xbf16>
    %26 = vector.shape_cast %25 : vector<1x4x8xbf16> to vector<4x8xbf16>
    %cst_27 = arith.constant dense<0.000000e+00> : vector<64x8xf32>
    %27 = tpu.matmul %24, %26, %cst_27 {dimension_numbers = #tpu.dot_dimension_numbers<[1], [0], [0], [1], [0, 0, 1, 1], [], []>} : vector<64x4xbf16>, vector<4x8xbf16>, vector<64x8xf32> -> vector<64x8xf32>
    %28 = arith.addf %21, %27 : vector<64x8xf32>
    %c3_28 = arith.constant 3 : index
    %c0_29 = arith.constant 0 : index
    %c0_30 = arith.constant 0 : index
    %c0_31 = arith.constant 0 : index
    %29 = vector.load %arg1[%c3_28, %c0_29, %c0_30, %c0_31] : memref<4x9x9x4xbf16, #tpu.memory_space<vmem>>, vector<1x8x8x4xbf16>
    %30 = vector.shape_cast %29 : vector<1x8x8x4xbf16> to vector<8x8x4xbf16>
    %31 = vector.shape_cast %30 : vector<8x8x4xbf16> to vector<64x4xbf16>
    %c4 = arith.constant 4 : index
    %c0_32 = arith.constant 0 : index
    %c0_33 = arith.constant 0 : index
    %32 = vector.load %arg2[%c4, %c0_32, %c0_33] : memref<9x4x8xbf16, #tpu.memory_space<vmem>>, vector<1x4x8xbf16>
    %33 = vector.shape_cast %32 : vector<1x4x8xbf16> to vector<4x8xbf16>
    %cst_34 = arith.constant dense<0.000000e+00> : vector<64x8xf32>
    %34 = tpu.matmul %31, %33, %cst_34 {dimension_numbers = #tpu.dot_dimension_numbers<[1], [0], [0], [1], [0, 0, 1, 1], [], []>} : vector<64x4xbf16>, vector<4x8xbf16>, vector<64x8xf32> -> vector<64x8xf32>
    %35 = arith.addf %28, %34 : vector<64x8xf32>
    %c2_35 = arith.constant 2 : index
    %c0_36 = arith.constant 0 : index
    %c1_37 = arith.constant 1 : index
    %c0_38 = arith.constant 0 : index
    %36 = vector.load %arg1[%c2_35, %c0_36, %c1_37, %c0_38] : memref<4x9x9x4xbf16, #tpu.memory_space<vmem>>, vector<1x8x8x4xbf16>
    %37 = vector.shape_cast %36 : vector<1x8x8x4xbf16> to vector<8x8x4xbf16>
    %38 = vector.shape_cast %37 : vector<8x8x4xbf16> to vector<64x4xbf16>
    %c5 = arith.constant 5 : index
    %c0_39 = arith.constant 0 : index
    %c0_40 = arith.constant 0 : index
    %39 = vector.load %arg2[%c5, %c0_39, %c0_40] : memref<9x4x8xbf16, #tpu.memory_space<vmem>>, vector<1x4x8xbf16>
    %40 = vector.shape_cast %39 : vector<1x4x8xbf16> to vector<4x8xbf16>
    %cst_41 = arith.constant dense<0.000000e+00> : vector<64x8xf32>
    %41 = tpu.matmul %38, %40, %cst_41 {dimension_numbers = #tpu.dot_dimension_numbers<[1], [0], [0], [1], [0, 0, 1, 1], [], []>} : vector<64x4xbf16>, vector<4x8xbf16>, vector<64x8xf32> -> vector<64x8xf32>
    %42 = arith.addf %35, %41 : vector<64x8xf32>
    %c0_42 = arith.constant 0 : index
    %c1_43 = arith.constant 1 : index
    %c0_44 = arith.constant 0 : index
    %c0_45 = arith.constant 0 : index
    %43 = vector.load %arg1[%c0_42, %c1_43, %c0_44, %c0_45] : memref<4x9x9x4xbf16, #tpu.memory_space<vmem>>, vector<1x8x8x4xbf16>
    %44 = vector.shape_cast %43 : vector<1x8x8x4xbf16> to vector<8x8x4xbf16>
    %45 = vector.shape_cast %44 : vector<8x8x4xbf16> to vector<64x4xbf16>
    %c6 = arith.constant 6 : index
    %c0_46 = arith.constant 0 : index
    %c0_47 = arith.constant 0 : index
    %46 = vector.load %arg2[%c6, %c0_46, %c0_47] : memref<9x4x8xbf16, #tpu.memory_space<vmem>>, vector<1x4x8xbf16>
    %47 = vector.shape_cast %46 : vector<1x4x8xbf16> to vector<4x8xbf16>
    %cst_48 = arith.constant dense<0.000000e+00> : vector<64x8xf32>
    %48 = tpu.matmul %45, %47, %cst_48 {dimension_numbers = #tpu.dot_dimension_numbers<[1], [0], [0], [1], [0, 0, 1, 1], [], []>} : vector<64x4xbf16>, vector<4x8xbf16>, vector<64x8xf32> -> vector<64x8xf32>
    %49 = arith.addf %42, %48 : vector<64x8xf32>
    %c1_49 = arith.constant 1 : index
    %c1_50 = arith.constant 1 : index
    %c0_51 = arith.constant 0 : index
    %c0_52 = arith.constant 0 : index
    %50 = vector.load %arg1[%c1_49, %c1_50, %c0_51, %c0_52] : memref<4x9x9x4xbf16, #tpu.memory_space<vmem>>, vector<1x8x8x4xbf16>
    %51 = vector.shape_cast %50 : vector<1x8x8x4xbf16> to vector<8x8x4xbf16>
    %52 = vector.shape_cast %51 : vector<8x8x4xbf16> to vector<64x4xbf16>
    %c7 = arith.constant 7 : index
    %c0_53 = arith.constant 0 : index
    %c0_54 = arith.constant 0 : index
    %53 = vector.load %arg2[%c7, %c0_53, %c0_54] : memref<9x4x8xbf16, #tpu.memory_space<vmem>>, vector<1x4x8xbf16>
    %54 = vector.shape_cast %53 : vector<1x4x8xbf16> to vector<4x8xbf16>
    %cst_55 = arith.constant dense<0.000000e+00> : vector<64x8xf32>
    %55 = tpu.matmul %52, %54, %cst_55 {dimension_numbers = #tpu.dot_dimension_numbers<[1], [0], [0], [1], [0, 0, 1, 1], [], []>} : vector<64x4xbf16>, vector<4x8xbf16>, vector<64x8xf32> -> vector<64x8xf32>
    %56 = arith.addf %49, %55 : vector<64x8xf32>
    %c0_56 = arith.constant 0 : index
    %c1_57 = arith.constant 1 : index
    %c1_58 = arith.constant 1 : index
    %c0_59 = arith.constant 0 : index
    %57 = vector.load %arg1[%c0_56, %c1_57, %c1_58, %c0_59] : memref<4x9x9x4xbf16, #tpu.memory_space<vmem>>, vector<1x8x8x4xbf16>
    %58 = vector.shape_cast %57 : vector<1x8x8x4xbf16> to vector<8x8x4xbf16>
    %59 = vector.shape_cast %58 : vector<8x8x4xbf16> to vector<64x4xbf16>
    %c8 = arith.constant 8 : index
    %c0_60 = arith.constant 0 : index
    %c0_61 = arith.constant 0 : index
    %60 = vector.load %arg2[%c8, %c0_60, %c0_61] : memref<9x4x8xbf16, #tpu.memory_space<vmem>>, vector<1x4x8xbf16>
    %61 = vector.shape_cast %60 : vector<1x4x8xbf16> to vector<4x8xbf16>
    %cst_62 = arith.constant dense<0.000000e+00> : vector<64x8xf32>
    %62 = tpu.matmul %59, %61, %cst_62 {dimension_numbers = #tpu.dot_dimension_numbers<[1], [0], [0], [1], [0, 0, 1, 1], [], []>} : vector<64x4xbf16>, vector<4x8xbf16>, vector<64x8xf32> -> vector<64x8xf32>
    %63 = arith.addf %56, %62 : vector<64x8xf32>
    %c0_63 = arith.constant 0 : index
    %c0_64 = arith.constant 0 : index
    %64 = vector.load %arg3[%c0_63, %c0_64] : memref<1x8xf32, #tpu.memory_space<vmem>>, vector<1x8xf32>
    %65 = vector.broadcast %64 : vector<1x8xf32> to vector<64x8xf32>
    %66 = arith.addf %63, %65 : vector<64x8xf32>
    %cst_65 = arith.constant 0.000000e+00 : f32
    %67 = vector.broadcast %cst_65 : f32 to vector<64x8xf32>
    %68 = arith.maximumf %66, %67 : vector<64x8xf32>
    %cst_66 = arith.constant 0.000000e+00 : bf16
    %69 = vector.broadcast %cst_66 : bf16 to vector<10x10x8xbf16>
    %c0_67 = arith.constant 0 : index
    %c0_68 = arith.constant 0 : index
    %c0_69 = arith.constant 0 : index
    %70 = vector.load %arg9[%c0_67, %c0_68, %c0_69] : memref<10x10x8xbf16, #tpu.memory_space<vmem>>, vector<10x10x8xbf16>
    tpu.vector_store %arg9[%c0_67, %c0_68, %c0_69], %69 {strides = array<i32>} : memref<10x10x8xbf16, #tpu.memory_space<vmem>>, vector<10x10x8xbf16>,
    %71 = vector.shape_cast %68 : vector<64x8xf32> to vector<8x8x8xf32>
    %72 = arith.truncf %71 : vector<8x8x8xf32> to vector<8x8x8xbf16>
    %c1_70 = arith.constant 1 : index
    %c1_71 = arith.constant 1 : index
    %c0_72 = arith.constant 0 : index
    %73 = vector.load %arg9[%c1_70, %c1_71, %c0_72] : memref<10x10x8xbf16, #tpu.memory_space<vmem>>, vector<8x8x8xbf16>
    tpu.vector_store %arg9[%c1_70, %c1_71, %c0_72], %72 {strides = array<i32>} : memref<10x10x8xbf16, #tpu.memory_space<vmem>>, vector<8x8x8xbf16>,
    %cst_73 = arith.constant 0.000000e+00 : f32
    %74 = vector.broadcast %cst_73 : f32 to vector<64x8xf32>
    %c0_74 = arith.constant 0 : index
    %c0_75 = arith.constant 0 : index
    %c0_76 = arith.constant 0 : index
    %75 = vector.load %arg9[%c0_74, %c0_75, %c0_76] : memref<10x10x8xbf16, #tpu.memory_space<vmem>>, vector<8x8x8xbf16>
    %76 = vector.shape_cast %75 : vector<8x8x8xbf16> to vector<64x8xbf16>
    %c0_77 = arith.constant 0 : index
    %c0_78 = arith.constant 0 : index
    %c0_79 = arith.constant 0 : index
    %77 = vector.load %arg4[%c0_77, %c0_78, %c0_79] : memref<9x8x8xbf16, #tpu.memory_space<vmem>>, vector<1x8x8xbf16>
    %78 = vector.shape_cast %77 : vector<1x8x8xbf16> to vector<8x8xbf16>
    %cst_80 = arith.constant dense<0.000000e+00> : vector<64x8xf32>
    %79 = tpu.matmul %76, %78, %cst_80 {dimension_numbers = #tpu.dot_dimension_numbers<[1], [0], [0], [1], [0, 0, 1, 1], [], []>} : vector<64x8xbf16>, vector<8x8xbf16>, vector<64x8xf32> -> vector<64x8xf32>
    %80 = arith.addf %74, %79 : vector<64x8xf32>
    %c0_81 = arith.constant 0 : index
    %c1_82 = arith.constant 1 : index
    %c0_83 = arith.constant 0 : index
    %81 = vector.load %arg9[%c0_81, %c1_82, %c0_83] : memref<10x10x8xbf16, #tpu.memory_space<vmem>>, vector<8x8x8xbf16>
    %82 = vector.shape_cast %81 : vector<8x8x8xbf16> to vector<64x8xbf16>
    %c1_84 = arith.constant 1 : index
    %c0_85 = arith.constant 0 : index
    %c0_86 = arith.constant 0 : index
    %83 = vector.load %arg4[%c1_84, %c0_85, %c0_86] : memref<9x8x8xbf16, #tpu.memory_space<vmem>>, vector<1x8x8xbf16>
    %84 = vector.shape_cast %83 : vector<1x8x8xbf16> to vector<8x8xbf16>
    %cst_87 = arith.constant dense<0.000000e+00> : vector<64x8xf32>
    %85 = tpu.matmul %82, %84, %cst_87 {dimension_numbers = #tpu.dot_dimension_numbers<[1], [0], [0], [1], [0, 0, 1, 1], [], []>} : vector<64x8xbf16>, vector<8x8xbf16>, vector<64x8xf32> -> vector<64x8xf32>
    %86 = arith.addf %80, %85 : vector<64x8xf32>
    %c0_88 = arith.constant 0 : index
    %c2_89 = arith.constant 2 : index
    %c0_90 = arith.constant 0 : index
    %87 = vector.load %arg9[%c0_88, %c2_89, %c0_90] : memref<10x10x8xbf16, #tpu.memory_space<vmem>>, vector<8x8x8xbf16>
    %88 = vector.shape_cast %87 : vector<8x8x8xbf16> to vector<64x8xbf16>
    %c2_91 = arith.constant 2 : index
    %c0_92 = arith.constant 0 : index
    %c0_93 = arith.constant 0 : index
    %89 = vector.load %arg4[%c2_91, %c0_92, %c0_93] : memref<9x8x8xbf16, #tpu.memory_space<vmem>>, vector<1x8x8xbf16>
    %90 = vector.shape_cast %89 : vector<1x8x8xbf16> to vector<8x8xbf16>
    %cst_94 = arith.constant dense<0.000000e+00> : vector<64x8xf32>
    %91 = tpu.matmul %88, %90, %cst_94 {dimension_numbers = #tpu.dot_dimension_numbers<[1], [0], [0], [1], [0, 0, 1, 1], [], []>} : vector<64x8xbf16>, vector<8x8xbf16>, vector<64x8xf32> -> vector<64x8xf32>
    %92 = arith.addf %86, %91 : vector<64x8xf32>
    %c1_95 = arith.constant 1 : index
    %c0_96 = arith.constant 0 : index
    %c0_97 = arith.constant 0 : index
    %93 = vector.load %arg9[%c1_95, %c0_96, %c0_97] : memref<10x10x8xbf16, #tpu.memory_space<vmem>>, vector<8x8x8xbf16>
    %94 = vector.shape_cast %93 : vector<8x8x8xbf16> to vector<64x8xbf16>
    %c3_98 = arith.constant 3 : index
    %c0_99 = arith.constant 0 : index
    %c0_100 = arith.constant 0 : index
    %95 = vector.load %arg4[%c3_98, %c0_99, %c0_100] : memref<9x8x8xbf16, #tpu.memory_space<vmem>>, vector<1x8x8xbf16>
    %96 = vector.shape_cast %95 : vector<1x8x8xbf16> to vector<8x8xbf16>
    %cst_101 = arith.constant dense<0.000000e+00> : vector<64x8xf32>
    %97 = tpu.matmul %94, %96, %cst_101 {dimension_numbers = #tpu.dot_dimension_numbers<[1], [0], [0], [1], [0, 0, 1, 1], [], []>} : vector<64x8xbf16>, vector<8x8xbf16>, vector<64x8xf32> -> vector<64x8xf32>
    %98 = arith.addf %92, %97 : vector<64x8xf32>
    %c1_102 = arith.constant 1 : index
    %c1_103 = arith.constant 1 : index
    %c0_104 = arith.constant 0 : index
    %99 = vector.load %arg9[%c1_102, %c1_103, %c0_104] : memref<10x10x8xbf16, #tpu.memory_space<vmem>>, vector<8x8x8xbf16>
    %100 = vector.shape_cast %99 : vector<8x8x8xbf16> to vector<64x8xbf16>
    %c4_105 = arith.constant 4 : index
    %c0_106 = arith.constant 0 : index
    %c0_107 = arith.constant 0 : index
    %101 = vector.load %arg4[%c4_105, %c0_106, %c0_107] : memref<9x8x8xbf16, #tpu.memory_space<vmem>>, vector<1x8x8xbf16>
    %102 = vector.shape_cast %101 : vector<1x8x8xbf16> to vector<8x8xbf16>
    %cst_108 = arith.constant dense<0.000000e+00> : vector<64x8xf32>
    %103 = tpu.matmul %100, %102, %cst_108 {dimension_numbers = #tpu.dot_dimension_numbers<[1], [0], [0], [1], [0, 0, 1, 1], [], []>} : vector<64x8xbf16>, vector<8x8xbf16>, vector<64x8xf32> -> vector<64x8xf32>
    %104 = arith.addf %98, %103 : vector<64x8xf32>
    %c1_109 = arith.constant 1 : index
    %c2_110 = arith.constant 2 : index
    %c0_111 = arith.constant 0 : index
    %105 = vector.load %arg9[%c1_109, %c2_110, %c0_111] : memref<10x10x8xbf16, #tpu.memory_space<vmem>>, vector<8x8x8xbf16>
    %106 = vector.shape_cast %105 : vector<8x8x8xbf16> to vector<64x8xbf16>
    %c5_112 = arith.constant 5 : index
    %c0_113 = arith.constant 0 : index
    %c0_114 = arith.constant 0 : index
    %107 = vector.load %arg4[%c5_112, %c0_113, %c0_114] : memref<9x8x8xbf16, #tpu.memory_space<vmem>>, vector<1x8x8xbf16>
    %108 = vector.shape_cast %107 : vector<1x8x8xbf16> to vector<8x8xbf16>
    %cst_115 = arith.constant dense<0.000000e+00> : vector<64x8xf32>
    %109 = tpu.matmul %106, %108, %cst_115 {dimension_numbers = #tpu.dot_dimension_numbers<[1], [0], [0], [1], [0, 0, 1, 1], [], []>} : vector<64x8xbf16>, vector<8x8xbf16>, vector<64x8xf32> -> vector<64x8xf32>
    %110 = arith.addf %104, %109 : vector<64x8xf32>
    %c2_116 = arith.constant 2 : index
    %c0_117 = arith.constant 0 : index
    %c0_118 = arith.constant 0 : index
    %111 = vector.load %arg9[%c2_116, %c0_117, %c0_118] : memref<10x10x8xbf16, #tpu.memory_space<vmem>>, vector<8x8x8xbf16>
    %112 = vector.shape_cast %111 : vector<8x8x8xbf16> to vector<64x8xbf16>
    %c6_119 = arith.constant 6 : index
    %c0_120 = arith.constant 0 : index
    %c0_121 = arith.constant 0 : index
    %113 = vector.load %arg4[%c6_119, %c0_120, %c0_121] : memref<9x8x8xbf16, #tpu.memory_space<vmem>>, vector<1x8x8xbf16>
    %114 = vector.shape_cast %113 : vector<1x8x8xbf16> to vector<8x8xbf16>
    %cst_122 = arith.constant dense<0.000000e+00> : vector<64x8xf32>
    %115 = tpu.matmul %112, %114, %cst_122 {dimension_numbers = #tpu.dot_dimension_numbers<[1], [0], [0], [1], [0, 0, 1, 1], [], []>} : vector<64x8xbf16>, vector<8x8xbf16>, vector<64x8xf32> -> vector<64x8xf32>
    %116 = arith.addf %110, %115 : vector<64x8xf32>
    %c2_123 = arith.constant 2 : index
    %c1_124 = arith.constant 1 : index
    %c0_125 = arith.constant 0 : index
    %117 = vector.load %arg9[%c2_123, %c1_124, %c0_125] : memref<10x10x8xbf16, #tpu.memory_space<vmem>>, vector<8x8x8xbf16>
    %118 = vector.shape_cast %117 : vector<8x8x8xbf16> to vector<64x8xbf16>
    %c7_126 = arith.constant 7 : index
    %c0_127 = arith.constant 0 : index
    %c0_128 = arith.constant 0 : index
    %119 = vector.load %arg4[%c7_126, %c0_127, %c0_128] : memref<9x8x8xbf16, #tpu.memory_space<vmem>>, vector<1x8x8xbf16>
    %120 = vector.shape_cast %119 : vector<1x8x8xbf16> to vector<8x8xbf16>
    %cst_129 = arith.constant dense<0.000000e+00> : vector<64x8xf32>
    %121 = tpu.matmul %118, %120, %cst_129 {dimension_numbers = #tpu.dot_dimension_numbers<[1], [0], [0], [1], [0, 0, 1, 1], [], []>} : vector<64x8xbf16>, vector<8x8xbf16>, vector<64x8xf32> -> vector<64x8xf32>
    %122 = arith.addf %116, %121 : vector<64x8xf32>
    %c2_130 = arith.constant 2 : index
    %c2_131 = arith.constant 2 : index
    %c0_132 = arith.constant 0 : index
    %123 = vector.load %arg9[%c2_130, %c2_131, %c0_132] : memref<10x10x8xbf16, #tpu.memory_space<vmem>>, vector<8x8x8xbf16>
    %124 = vector.shape_cast %123 : vector<8x8x8xbf16> to vector<64x8xbf16>
    %c8_133 = arith.constant 8 : index
    %c0_134 = arith.constant 0 : index
    %c0_135 = arith.constant 0 : index
    %125 = vector.load %arg4[%c8_133, %c0_134, %c0_135] : memref<9x8x8xbf16, #tpu.memory_space<vmem>>, vector<1x8x8xbf16>
    %126 = vector.shape_cast %125 : vector<1x8x8xbf16> to vector<8x8xbf16>
    %cst_136 = arith.constant dense<0.000000e+00> : vector<64x8xf32>
    %127 = tpu.matmul %124, %126, %cst_136 {dimension_numbers = #tpu.dot_dimension_numbers<[1], [0], [0], [1], [0, 0, 1, 1], [], []>} : vector<64x8xbf16>, vector<8x8xbf16>, vector<64x8xf32> -> vector<64x8xf32>
    %128 = arith.addf %122, %127 : vector<64x8xf32>
    %c0_137 = arith.constant 0 : index
    %c0_138 = arith.constant 0 : index
    %129 = vector.load %arg5[%c0_137, %c0_138] : memref<1x8xf32, #tpu.memory_space<vmem>>, vector<1x8xf32>
    %130 = vector.broadcast %129 : vector<1x8xf32> to vector<64x8xf32>
    %131 = arith.addf %128, %130 : vector<64x8xf32>
    %c0_139 = arith.constant 0 : index
    %c0_140 = arith.constant 0 : index
    %132 = vector.load %arg6[%c0_139, %c0_140] : memref<4x8xbf16, #tpu.memory_space<vmem>>, vector<4x8xbf16>
    %cst_141 = arith.constant dense<0.000000e+00> : vector<64x8xf32>
    %133 = tpu.matmul %31, %132, %cst_141 {dimension_numbers = #tpu.dot_dimension_numbers<[1], [0], [0], [1], [0, 0, 1, 1], [], []>} : vector<64x4xbf16>, vector<4x8xbf16>, vector<64x8xf32> -> vector<64x8xf32>
    %c0_142 = arith.constant 0 : index
    %c0_143 = arith.constant 0 : index
    %134 = vector.load %arg7[%c0_142, %c0_143] : memref<1x8xf32, #tpu.memory_space<vmem>>, vector<1x8xf32>
    %135 = vector.broadcast %134 : vector<1x8xf32> to vector<64x8xf32>
    %136 = arith.addf %133, %135 : vector<64x8xf32>
    %137 = arith.addf %131, %136 : vector<64x8xf32>
    %cst_144 = arith.constant 0.000000e+00 : f32
    %138 = vector.broadcast %cst_144 : f32 to vector<64x8xf32>
    %139 = arith.maximumf %137, %138 : vector<64x8xf32>
    %140 = vector.shape_cast %139 : vector<64x8xf32> to vector<1x64x8xf32>
    %c0_145 = arith.constant 0 : index
    %c0_146 = arith.constant 0 : index
    %c0_147 = arith.constant 0 : index
    %141 = vector.load %arg8[%c0_145, %c0_146, %c0_147] : memref<1x64x8xf32, #tpu.memory_space<vmem>>, vector<1x64x8xf32>
    tpu.vector_store %arg8[%c0_145, %c0_146, %c0_147], %140 {strides = array<i32>} : memref<1x64x8xf32, #tpu.memory_space<vmem>>, vector<1x64x8xf32>,
    return
  }
  func.func @transform_0(%arg0: i32) -> (i32, i32, i32, i32) {
    %c0_i32 = arith.constant 0 : i32
    %c0_i32_0 = arith.constant 0 : i32
    %c0_i32_1 = arith.constant 0 : i32
    %c0_i32_2 = arith.constant 0 : i32
    return %arg0, %c0_i32, %c0_i32_0, %c0_i32_1 : i32, i32, i32, i32
  }
  func.func @transform_1(%arg0: i32) -> (i32, i32, i32) {
    %c0_i32 = arith.constant 0 : i32
    %c0_i32_0 = arith.constant 0 : i32
    %c0_i32_1 = arith.constant 0 : i32
    %c0_i32_2 = arith.constant 0 : i32
    return %c0_i32, %c0_i32_0, %c0_i32_1 : i32, i32, i32
  }
  func.func @transform_2(%arg0: i32) -> (i32, i32) {
    %c0_i32 = arith.constant 0 : i32
    %c0_i32_0 = arith.constant 0 : i32
    %c0_i32_1 = arith.constant 0 : i32
    return %c0_i32, %c0_i32_0 : i32, i32
  }
  func.func @transform_3(%arg0: i32) -> (i32, i32, i32) {
    %c0_i32 = arith.constant 0 : i32
    %c0_i32_0 = arith.constant 0 : i32
    %c0_i32_1 = arith.constant 0 : i32
    %c0_i32_2 = arith.constant 0 : i32
    return %c0_i32, %c0_i32_0, %c0_i32_1 : i32, i32, i32
  }
  func.func @transform_4(%arg0: i32) -> (i32, i32) {
    %c0_i32 = arith.constant 0 : i32
    %c0_i32_0 = arith.constant 0 : i32
    %c0_i32_1 = arith.constant 0 : i32
    return %c0_i32, %c0_i32_0 : i32, i32
  }
  func.func @transform_5(%arg0: i32) -> (i32, i32) {
    %c0_i32 = arith.constant 0 : i32
    %c0_i32_0 = arith.constant 0 : i32
    %c0_i32_1 = arith.constant 0 : i32
    return %c0_i32, %c0_i32_0 : i32, i32
  }
  func.func @transform_6(%arg0: i32) -> (i32, i32) {
    %c0_i32 = arith.constant 0 : i32
    %c0_i32_0 = arith.constant 0 : i32
    %c0_i32_1 = arith.constant 0 : i32
    return %c0_i32, %c0_i32_0 : i32, i32
  }
  func.func @transform_7(%arg0: i32) -> (i32, i32, i32) {
    %c0_i32 = arith.constant 0 : i32
    %c0_i32_0 = arith.constant 0 : i32
    %c0_i32_1 = arith.constant 0 : i32
    return %arg0, %c0_i32, %c0_i32_0 : i32, i32, i32
  }
}

</mosaic_0001>

<llo_original>
// kernel: basic_block_forward.1
$region0: #{basic_block_forward.1}
  #allocation0 [shape = 'u32[]', space=smem, size = 0x4, offset = 0x4, fixed_abs, tag = 'smem constant byte address 0x4 - core index']
  #allocation1 [shape = 'u32[144,128]{1,0:T(1,128)}', space=vmem, size = 0x12000, scoped, tag = 'internal scratch']
  #allocation2 [shape = 'bf16[10,10,8]{2,1,0:T(8,128)(2,1)}', space=vmem, size = 0xa000, scoped, tag = 'scratch operand']
  %s0 = inlined_call_operand.vmem [shape: bf16[8,9,9,4], index: 0, kind: input, shape index: {}]
  %s1 = inlined_call_operand.vmem [shape: bf16[9,4,8], index: 1, kind: input, shape index: {}]
  %s2 = inlined_call_operand.vmem [shape: f32[1,8], index: 2, kind: input, shape index: {}]
  %s3 = inlined_call_operand.vmem [shape: bf16[9,8,8], index: 3, kind: input, shape index: {}]
  %s4 = inlined_call_operand.vmem [shape: f32[1,8], index: 4, kind: input, shape index: {}]
  %s5 = inlined_call_operand.vmem [shape: bf16[4,8], index: 5, kind: input, shape index: {}]
  %s6 = inlined_call_operand.vmem [shape: f32[1,8], index: 6, kind: input, shape index: {}]
  %s7 = inlined_call_operand.vmem [shape: f32[2,64,8], index: 7, kind: output, shape index: {}]
  %s8 = sld [smem:[#allocation0]]
  $region61: #{basic_block_forward.1} parent=0
    _
  %s10 = ssub.s32 1, %s8
  %s11 = scalar_select 0, %s10, %s8
  loop: start=0, step=1, limit=4
  $region2: #{basic_block_forward.1} parent=0 // loop_pre_header
    _
  $region3: #{basic_block_forward.1} parent=0 // loop_header
    %s13 = sphi 0, %s17
    %p14 = scmp.ge.s32.totalorder %s13, 4
    %s23 = sphi 0, %s25
    %s26 = sphi 0, %s23
    %s27 = sphi 0, %s26
    %s43 = sphi 0, %s27
    %s47 = sphi 0, %s47
    %s49 = sphi 0, %s47
    %s50 = sphi 0, %s49
    %s64 = sphi 0, %s50
    %s68 = sphi 0, %s68
    %s70 = sphi 0, %s68
    %s71 = sphi 0, %s70
    %s85 = sphi 0, %s71
    %s89 = sphi 0, %s89
    %s91 = sphi 0, %s89
    %s92 = sphi 0, %s91
    %s106 = sphi 0, %s92
    %s110 = sphi 0, %s110
    %s112 = sphi 0, %s110
    %s113 = sphi 0, %s112
    %s127 = sphi 0, %s113
    %s131 = sphi 0, %s131
    %s133 = sphi 0, %s131
    %s134 = sphi 0, %s133
    %s148 = sphi 0, %s134
    %s152 = sphi 0, %s152
    %s154 = sphi 0, %s152
    %s155 = sphi 0, %s154
    %s169 = sphi 0, %s155
    %s175 = sphi 0, %s177
    %s178 = sphi 0, %s175
    %s179 = sphi 0, %s178
    %s195 = sphi 0, %s179
  $region4: #{basic_block_forward.1} parent=0 // loop_header_branch
    %16 = sbr.rel (%p14) target = $region8
  $region5: #{basic_block_forward.1} parent=0 // loop_body
    %s18 = ssub.s32 %s13, 1
    %s19 = ssub.s32 %s13, 2
    %s20 = sadd.s32 %s13, 1
    %s21 = ssub.s32 %s13, %s20
    %p22 = scmp.eq.s32.totalorder %s21, 0
    %s24 = sadd.s32 %s23, 1
    %s25 = scalar_select %p22, %s23, %s24
    %p28 = pneg %p22
    %p29 = scmp.eq.s32.totalorder %s13, 1
    %p30 = por %p28, %p29
    %p31 = scmp.ne.s32.totalorder %s23, %s26
    %p32 = scmp.eq.s32.totalorder %s13, 0
    %p33 = por %p31, %p32
    %p34 = scmp.ne.s32.totalorder %s23, %s26
    %p35 = scmp.eq.s32.totalorder %s18, 1
    %p36 = por %p34, %p35
    %p37 = scmp.ne.s32.totalorder %s26, %s27
    %p38 = scmp.eq.s32.totalorder %s18, 0
    %p39 = por %p37, %p38
    %p40 = scmp.ne.s32.totalorder %s26, %s27
    %p41 = scmp.eq.s32.totalorder %s19, 1
    %p42 = por %p40, %p41
    %p44 = scmp.ne.s32.totalorder %s27, %s43
    %p45 = scmp.eq.s32.totalorder %s19, 0
    %p46 = por %p44, %p45
    %s48 = sadd.s32 %s47, 1
    %p51 = scmp.eq.s32.totalorder %s13, 1
    %p52 = scmp.ne.s32.totalorder %s47, %s49
    %p53 = scmp.eq.s32.totalorder %s13, 0
    %p54 = por %p52, %p53
    %p55 = scmp.ne.s32.totalorder %s47, %s49
    %p56 = scmp.eq.s32.totalorder %s18, 1
    %p57 = por %p55, %p56
    %p58 = scmp.ne.s32.totalorder %s49, %s50
    %p59 = scmp.eq.s32.totalorder %s18, 0
    %p60 = por %p58, %p59
    %p61 = scmp.ne.s32.totalorder %s49, %s50
    %p62 = scmp.eq.s32.totalorder %s19, 1
    %p63 = por %p61, %p62
    %p65 = scmp.ne.s32.totalorder %s50, %s64
    %p66 = scmp.eq.s32.totalorder %s19, 0
    %p67 = por %p65, %p66
    %s69 = sadd.s32 %s68, 1
    %p72 = scmp.eq.s32.totalorder %s13, 1
    %p73 = scmp.ne.s32.totalorder %s68, %s70
    %p74 = scmp.eq.s32.totalorder %s13, 0
    %p75 = por %p73, %p74
    %p76 = scmp.ne.s32.totalorder %s68, %s70
    %p77 = scmp.eq.s32.totalorder %s18, 1
    %p78 = por %p76, %p77
    %p79 = scmp.ne.s32.totalorder %s70, %s71
    %p80 = scmp.eq.s32.totalorder %s18, 0
    %p81 = por %p79, %p80
    %p82 = scmp.ne.s32.totalorder %s70, %s71
    %p83 = scmp.eq.s32.totalorder %s19, 1
    %p84 = por %p82, %p83
    %p86 = scmp.ne.s32.totalorder %s71, %s85
    %p87 = scmp.eq.s32.totalorder %s19, 0
    %p88 = por %p86, %p87
    %s90 = sadd.s32 %s89, 1
    %p93 = scmp.eq.s32.totalorder %s13, 1
    %p94 = scmp.ne.s32.totalorder %s89, %s91
    %p95 = scmp.eq.s32.totalorder %s13, 0
    %p96 = por %p94, %p95
    %p97 = scmp.ne.s32.totalorder %s89, %s91
    %p98 = scmp.eq.s32.totalorder %s18, 1
    %p99 = por %p97, %p98
    %p100 = scmp.ne.s32.totalorder %s91, %s92
    %p101 = scmp.eq.s32.totalorder %s18, 0
    %p102 = por %p100, %p101
    %p103 = scmp.ne.s32.totalorder %s91, %s92
    %p104 = scmp.eq.s32.totalorder %s19, 1
    %p105 = por %p103, %p104
    %p107 = scmp.ne.s32.totalorder %s92, %s106
    %p108 = scmp.eq.s32.totalorder %s19, 0
    %p109 = por %p107, %p108
    %s111 = sadd.s32 %s110, 1
    %p114 = scmp.eq.s32.totalorder %s13, 1
    %p115 = scmp.ne.s32.totalorder %s110, %s112
    %p116 = scmp.eq.s32.totalorder %s13, 0
    %p117 = por %p115, %p116
    %p118 = scmp.ne.s32.totalorder %s110, %s112
    %p119 = scmp.eq.s32.totalorder %s18, 1
    %p120 = por %p118, %p119
    %p121 = scmp.ne.s32.totalorder %s112, %s113
    %p122 = scmp.eq.s32.totalorder %s18, 0
    %p123 = por %p121, %p122
    %p124 = scmp.ne.s32.totalorder %s112, %s113
    %p125 = scmp.eq.s32.totalorder %s19, 1
    %p126 = por %p124, %p125
    %p128 = scmp.ne.s32.totalorder %s113, %s127
    %p129 = scmp.eq.s32.totalorder %s19, 0
    %p130 = por %p128, %p129
    %s132 = sadd.s32 %s131, 1
    %p135 = scmp.eq.s32.totalorder %s13, 1
    %p136 = scmp.ne.s32.totalorder %s131, %s133
    %p137 = scmp.eq.s32.totalorder %s13, 0
    %p138 = por %p136, %p137
    %p139 = scmp.ne.s32.totalorder %s131, %s133
    %p140 = scmp.eq.s32.totalorder %s18, 1
    %p141 = por %p139, %p140
    %p142 = scmp.ne.s32.totalorder %s133, %s134
    %p143 = scmp.eq.s32.totalorder %s18, 0
    %p144 = por %p142, %p143
    %p145 = scmp.ne.s32.totalorder %s133, %s134
    %p146 = scmp.eq.s32.totalorder %s19, 1
    %p147 = por %p145, %p146
    %p149 = scmp.ne.s32.totalorder %s134, %s148
    %p150 = scmp.eq.s32.totalorder %s19, 0
    %p151 = por %p149, %p150
    %s153 = sadd.s32 %s152, 1
    %p156 = scmp.eq.s32.totalorder %s13, 1
    %p157 = scmp.ne.s32.totalorder %s152, %s154
    %p158 = scmp.eq.s32.totalorder %s13, 0
    %p159 = por %p157, %p158
    %p160 = scmp.ne.s32.totalorder %s152, %s154
    %p161 = scmp.eq.s32.totalorder %s18, 1
    %p162 = por %p160, %p161
    %p163 = scmp.ne.s32.totalorder %s154, %s155
    %p164 = scmp.eq.s32.totalorder %s18, 0
    %p165 = por %p163, %p164
    %p166 = scmp.ne.s32.totalorder %s154, %s155
    %p167 = scmp.eq.s32.totalorder %s19, 1
    %p168 = por %p166, %p167
    %p170 = scmp.ne.s32.totalorder %s155, %s169
    %p171 = scmp.eq.s32.totalorder %s19, 0
    %p172 = por %p170, %p171
    %s173 = ssub.s32 %s13, %s20
    %p174 = scmp.eq.s32.totalorder %s173, 0
    %s176 = sadd.s32 %s175, 1
    %s177 = scalar_select %p174, %s175, %s176
    %p180 = pneg %p174
    %p181 = scmp.eq.s32.totalorder %s13, 1
    %p182 = por %p180, %p181
    %p183 = scmp.ne.s32.totalorder %s175, %s178
    %p184 = scmp.eq.s32.totalorder %s13, 0
    %p185 = por %p183, %p184
    %p186 = scmp.ne.s32.totalorder %s175, %s178
    %p187 = scmp.eq.s32.totalorder %s18, 1
    %p188 = por %p186, %p187
    %p189 = scmp.ne.s32.totalorder %s178, %s179
    %p190 = scmp.eq.s32.totalorder %s18, 0
    %p191 = por %p189, %p190
    %p192 = scmp.ne.s32.totalorder %s178, %s179
    %p193 = scmp.eq.s32.totalorder %s19, 1
    %p194 = por %p192, %p193
    %p196 = scmp.ne.s32.totalorder %s179, %s195
    %p197 = scmp.eq.s32.totalorder %s19, 0
    %p198 = por %p196, %p197
    %p199 = scmp.le.s32.totalorder 1, %s13
    %p200 = scmp.lt.s32.totalorder %s13, 3
    %p201 = pnand %p199, %p200
    %p202 = pneg %p201
    // Predicated region
    $region9: #{basic_block_forward.1} parent=5 // pred_check
      _
    $region10: #{basic_block_forward.1} parent=5 // pred_check_branch
      %204 = sbr.rel (%p201) target = $region12
    $region11: #{basic_block_forward.1} parent=5 // pred_region
      %s205 = ssub.s32 %s13, 1
      // Predicated region
      $region13: #{basic_block_forward.1} parent=11 // pred_check
        %p206 = pneg %p60
      $region14: #{basic_block_forward.1} parent=11 // pred_check_branch
        %208 = sbr.rel (%p206) target = $region16
      $region15: #{basic_block_forward.1} parent=11 // pred_region
        _
      $region16: #{basic_block_forward.1} parent=11 // pred_fallthru
        _
      // Predicated region
      $region17: #{basic_block_forward.1} parent=11 // pred_check
        %p209 = pneg %p81
      $region18: #{basic_block_forward.1} parent=11 // pred_check_branch
        %211 = sbr.rel (%p209) target = $region20
      $region19: #{basic_block_forward.1} parent=11 // pred_region
        _
      $region20: #{basic_block_forward.1} parent=11 // pred_fallthru
        _
      // Predicated region
      $region21: #{basic_block_forward.1} parent=11 // pred_check
        %p212 = pneg %p102
      $region22: #{basic_block_forward.1} parent=11 // pred_check_branch
        %214 = sbr.rel (%p212) target = $region24
      $region23: #{basic_block_forward.1} parent=11 // pred_region
        _
      $region24: #{basic_block_forward.1} parent=11 // pred_fallthru
        _
      // Predicated region
      $region25: #{basic_block_forward.1} parent=11 // pred_check
        %p215 = pneg %p123
      $region26: #{basic_block_forward.1} parent=11 // pred_check_branch
        %217 = sbr.rel (%p215) target = $region28
      $region27: #{basic_block_forward.1} parent=11 // pred_region
        _
      $region28: #{basic_block_forward.1} parent=11 // pred_fallthru
        _
      // Predicated region
      $region29: #{basic_block_forward.1} parent=11 // pred_check
        %p218 = pneg %p144
      $region30: #{basic_block_forward.1} parent=11 // pred_check_branch
        %220 = sbr.rel (%p218) target = $region32
      $region31: #{basic_block_forward.1} parent=11 // pred_region
        _
      $region32: #{basic_block_forward.1} parent=11 // pred_fallthru
        _
      // Predicated region
      $region33: #{basic_block_forward.1} parent=11 // pred_check
        %p221 = pneg %p165
      $region34: #{basic_block_forward.1} parent=11 // pred_check_branch
        %223 = sbr.rel (%p221) target = $region36
      $region35: #{basic_block_forward.1} parent=11 // pred_region
        _
      $region36: #{basic_block_forward.1} parent=11 // pred_fallthru
        _
    $region12: #{basic_block_forward.1} parent=5 // pred_fallthru
      _
    %p224 = scmp.lt.s32.totalorder %s13, 2
    // Predicated region
    $region37: #{basic_block_forward.1} parent=5 // pred_check
      %p225 = pneg %p224
    $region38: #{basic_block_forward.1} parent=5 // pred_check_branch
      %227 = sbr.rel (%p225) target = $region40
    $region39: #{basic_block_forward.1} parent=5 // pred_region
      // Predicated region
      $region41: #{basic_block_forward.1} parent=39 // pred_check
        %p228 = pneg %p33
      $region42: #{basic_block_forward.1} parent=39 // pred_check_branch
        %230 = sbr.rel (%p228) target = $region44
      $region43: #{basic_block_forward.1} parent=39 // pred_region
        %s231 = smul.u32 4, %s13
        %p232 = scmp.lt.s32.totalorder %s231, 7
        %s233 = scalar_select %p232, %s231, 7
        %s234 = smul.addr %s233, 18
        %s235 = smul.addr %s234, 4
        %s236 = scalar_lea.vmem %s0, %s235
        %s237 = smul.u32 4, %s13
      $region44: #{basic_block_forward.1} parent=39 // pred_fallthru
        _
    $region40: #{basic_block_forward.1} parent=5 // pred_fallthru
      _
    %p238 = scmp.le.s32.totalorder 1, %s13
    %p239 = scmp.lt.s32.totalorder %s13, 3
    %p240 = pnand %p238, %p239
    %p241 = pneg %p240
    // Predicated region
    $region45: #{basic_block_forward.1} parent=5 // pred_check
      _
    $region46: #{basic_block_forward.1} parent=5 // pred_check_branch
      %243 = sbr.rel (%p240) target = $region48
    $region47: #{basic_block_forward.1} parent=5 // pred_region
      %s244 = ssub.s32 %s13, 1
      %s245 = smul.u32 4, %s18
      %p246 = scmp.lt.s32.totalorder %s245, 7
      %s247 = scalar_select %p246, %s245, 7
      %s248 = smul.addr %s247, 18
      %s249 = smul.addr %s248, 4
      %s250 = scalar_lea.vmem %s0, %s249
      %p251 = pneg %p39
      %p252 = pneg %p36
      %p253 = pneg %p60
      %p254 = pneg %p57
      %p255 = pneg %p81
      %p256 = pneg %p78
      %p257 = pneg %p102
      %p258 = pneg %p99
      %p259 = pneg %p123
      %p260 = pneg %p120
      %p261 = pneg %p144
      %p262 = pneg %p141
      %p263 = pneg %p165
      %p264 = pneg %p162
      %p265 = pneg %p191
      %p266 = pneg %p188
      %p267 = scmp.lt.s32.totalorder %s18, 1
      %s268 = scalar_select %p267, %s18, 1
      %s269 = smul.addr %s268, 8
      %s270 = smul.addr %s269, 8
      %s271 = scalar_lea.vmem %s7, %s270
      %s272 = smul.u32 4, %s18
      %p273 = scmp.lt.s32.totalorder %s272, 7
      %s274 = scalar_select %p273, %s272, 7
      %s275 = smul.addr %s274, 18
      %s276 = smul.addr %s275, 4
      %s277 = scalar_lea.vmem %s0, %s276
      %s278 = smul.u32 4, %s18
      %p279 = scmp.lt.s32.totalorder %s18, 1
      %s280 = scalar_select %p279, %s18, 1
      %s281 = smul.addr %s280, 8
      %s282 = smul.addr %s281, 8
      %s283 = scalar_lea.vmem %s7, %s282
      %v285 = vld [vmem:[%s277] sm:$0xf]
      %v286 = vld [vmem:[%s277 + $0x8] sm:$0xf]
      %v287 = vld [vmem:[%s277 + $0x10] sm:$0xf]
      %v288 = vld [vmem:[%s277 + $0x18] sm:$0xf]
      %v289 = vld [vmem:[%s277 + $0x20] sm:$0xf]
      %v290 = vld [vmem:[%s277 + $0x28] sm:$0xf]
      %v291 = vld [vmem:[%s277 + $0x30] sm:$0xf]
      %v292 = vld [vmem:[%s277 + $0x38] sm:$0xf]
      %v293 = vld [vmem:[%s1] sm:$0x3]
      %s294 = scalar_lea.vmem %s277, 72
      %v295 = vld [vmem:[%s294] sm:$0xf]
      %v296 = vld [vmem:[%s294 + $0x8] sm:$0xf]
      %v297 = vld [vmem:[%s294 + $0x10] sm:$0xf]
      %v298 = vld [vmem:[%s294 + $0x18] sm:$0xf]
      %v299 = vld [vmem:[%s294 + $0x20] sm:$0xf]
      %v300 = vld [vmem:[%s294 + $0x28] sm:$0xf]
      %v301 = vld [vmem:[%s294 + $0x30] sm:$0xf]
      %v302 = vld [vmem:[%s294 + $0x38] sm:$0xf]
      %s303 = scalar_lea.vmem %s1, 2
      %v304 = vld [vmem:[%s303] sm:$0x3]
      %v313 = vunpack.c.l.b16 %v295
      %v314 = vunpack.c.l.b16 %v296
      %v315 = vunpack.c.l.b16 %v297
      %v316 = vunpack.c.l.b16 %v298
      %v317 = vunpack.c.l.b16 %v299
      %v318 = vunpack.c.l.b16 %v300
      %v319 = vunpack.c.l.b16 %v301
      %v320 = vunpack.c.l.b16 %v302
      %v321 = vpack.c.b16 %v314, %v313
      %v322 = vpack.c.b16 %v316, %v315
      %v323 = vpack.c.b16 %v318, %v317
      %v324 = vpack.c.b16 %v320, %v319
      %vm325 = vcmask 31744
      %v327 = vsel %vm325, %v321, 0
      %v330 = vsel %vm325, %v322, 0
      %v333 = vsel %vm325, %v323, 0
      %v336 = vsel %vm325, %v324, 0
      %vm338 = vcmask 1041408
      %v340 = vsel %vm338, %v304, 0
      %342 = vmatprep.subr.bf16.mxu0 0
      %343 = vmatpush1.bf16.msra.mxu0 0
      %344 = vmatprep.subr.bf16.mxu0 0
      %345 = vmatpush1.bf16.msra.mxu0 0
      %346 = vmatprep.subr.bf16.mxu0 0
      %347 = vmatpush1.bf16.msra.mxu0 0
      %348 = vmatprep.subr.bf16.mxu0 0
      %349 = vmatpush1.bf16.msra.mxu0 0
      %350 = vmatprep.subr.bf16.mxu0 0
      %351 = vmatpush1.bf16.msra.mxu0 0
      %352 = vmatprep.subr.bf16.mxu0 0
      %353 = vmatpush1.bf16.msra.mxu0 0
      %354 = vmatprep.subr.bf16.mxu0 0
      %355 = vmatpush1.bf16.msra.mxu0 0
      %356 = vmatprep.subr.bf16.mxu0 0
      %357 = vmatpush1.bf16.msra.mxu0 %v340
      %358 = vmatprep.subr.bf16.mxu0 0
      %359 = vmatpush2.bf16.msra.mxu0 0
      %360 = vmatprep.subr.bf16.mxu0 0
      %361 = vmatpush2.bf16.msra.mxu0 0
      %362 = vmatprep.subr.bf16.mxu0 0
      %363 = vmatpush2.bf16.msra.mxu0 0
      %364 = vmatprep.subr.bf16.mxu0 0
      %365 = vmatpush2.bf16.msra.mxu0 0
      %366 = vmatprep.subr.bf16.mxu0 0
      %367 = vmatpush2.bf16.msra.mxu0 0
      %368 = vmatprep.subr.bf16.mxu0 0
      %369 = vmatpush2.bf16.msra.mxu0 0
      %370 = vmatprep.subr.bf16.mxu0 0
      %371 = vmatpush2.bf16.msra.mxu0 0
      %372 = vmatprep.subr.bf16.mxu0 0
      %373 = vmatpush2.bf16.msra.mxu0 0
      %374 = vmatprep.mubr.bf16.mxu0 0
      %375 = vmatmul.mubr.bf16.gmra.mxu0 %v327
      %v376 = vpop.f32.mrf.mxu0
      %v377 = vadd.f32 0.0, %v376
      %v378 = vpop.f32.mrf.mxu0
      %v379 = vpop.f32.mrf.mxu0
      %v380 = vadd.f32 0.0, %v379
      %v381 = vpop.f32.mrf.mxu0
      %382 = vmatprep.mubr.bf16.mxu0 0
      %383 = vmatmul.mubr.bf16.gmra.mxu0 %v330
      %v384 = vpop.f32.mrf.mxu0
      %v385 = vadd.f32 0.0, %v384
      %v386 = vpop.f32.mrf.mxu0
      %v387 = vpop.f32.mrf.mxu0
      %v388 = vadd.f32 0.0, %v387
      %v389 = vpop.f32.mrf.mxu0
      %390 = vmatprep.mubr.bf16.mxu0 0
      %391 = vmatmul.mubr.bf16.gmra.mxu0 %v333
      %v392 = vpop.f32.mrf.mxu0
      %v393 = vadd.f32 0.0, %v392
      %v394 = vpop.f32.mrf.mxu0
      %v395 = vpop.f32.mrf.mxu0
      %v396 = vadd.f32 0.0, %v395
      %v397 = vpop.f32.mrf.mxu0
      %398 = vmatprep.mubr.bf16.mxu0 0
      %399 = vmatmul.mubr.bf16.gmra.mxu0 %v336
      %v400 = vpop.f32.mrf.mxu0
      %v401 = vadd.f32 0.0, %v400
      %v402 = vpop.f32.mrf.mxu0
      %v403 = vpop.f32.mrf.mxu0
      %v404 = vadd.f32 0.0, %v403
      %v405 = vpop.f32.mrf.mxu0
      %406 = vdwg.mxu0
      %v415 = vunpack.c.l.b16 %v285
      %v416 = vunpack.c.l.b16 %v286
      %v417 = vunpack.c.l.b16 %v287
      %v418 = vunpack.c.l.b16 %v288
      %v419 = vunpack.c.l.b16 %v289
      %v420 = vunpack.c.l.b16 %v290
      %v421 = vunpack.c.l.b16 %v291
      %v422 = vunpack.c.l.b16 %v292
      %v423 = vpack.c.b16 %v416, %v415
      %v424 = vpack.c.b16 %v418, %v417
      %v425 = vpack.c.b16 %v420, %v419
      %v426 = vpack.c.b16 %v422, %v421
      %v428 = vsel %vm325, %v423, 0
      %v431 = vsel %vm325, %v424, 0
      %v434 = vsel %vm325, %v425, 0
      %v437 = vsel %vm325, %v426, 0
      %v440 = vsel %vm338, %v293, 0
      %442 = vmatprep.subr.bf16.mxu0 0
      %443 = vmatpush1.bf16.msra.mxu0 0
      %444 = vmatprep.subr.bf16.mxu0 0
      %445 = vmatpush1.bf16.msra.mxu0 0
      %446 = vmatprep.subr.bf16.mxu0 0
      %447 = vmatpush1.bf16.msra.mxu0 0
      %448 = vmatprep.subr.bf16.mxu0 0
      %449 = vmatpush1.bf16.msra.mxu0 0
      %450 = vmatprep.subr.bf16.mxu0 0
      %451 = vmatpush1.bf16.msra.mxu0 0
      %452 = vmatprep.subr.bf16.mxu0 0
      %453 = vmatpush1.bf16.msra.mxu0 0
      %454 = vmatprep.subr.bf16.mxu0 0
      %455 = vmatpush1.bf16.msra.mxu0 0
      %456 = vmatprep.subr.bf16.mxu0 0
      %457 = vmatpush1.bf16.msra.mxu0 %v440
      %458 = vmatprep.subr.bf16.mxu0 0
      %459 = vmatpush2.bf16.msra.mxu0 0
      %460 = vmatprep.subr.bf16.mxu0 0
      %461 = vmatpush2.bf16.msra.mxu0 0
      %462 = vmatprep.subr.bf16.mxu0 0
      %463 = vmatpush2.bf16.msra.mxu0 0
      %464 = vmatprep.subr.bf16.mxu0 0
      %465 = vmatpush2.bf16.msra.mxu0 0
      %466 = vmatprep.subr.bf16.mxu0 0
      %467 = vmatpush2.bf16.msra.mxu0 0
      %468 = vmatprep.subr.bf16.mxu0 0
      %469 = vmatpush2.bf16.msra.mxu0 0
      %470 = vmatprep.subr.bf16.mxu0 0
      %471 = vmatpush2.bf16.msra.mxu0 0
      %472 = vmatprep.subr.bf16.mxu0 0
      %473 = vmatpush2.bf16.msra.mxu0 0
      %474 = vmatprep.mubr.bf16.mxu0 0
      %475 = vmatmul.mubr.bf16.gmra.mxu0 %v428
      %v476 = vpop.f32.mrf.mxu0
      %v477 = vadd.f32 %v377, %v476
      %v478 = vpop.f32.mrf.mxu0
      %v479 = vpop.f32.mrf.mxu0
      %v480 = vadd.f32 %v380, %v479
      %v481 = vpop.f32.mrf.mxu0
      %482 = vmatprep.mubr.bf16.mxu0 0
      %483 = vmatmul.mubr.bf16.gmra.mxu0 %v431
      %v484 = vpop.f32.mrf.mxu0
      %v485 = vadd.f32 %v385, %v484
      %v486 = vpop.f32.mrf.mxu0
      %v487 = vpop.f32.mrf.mxu0
      %v488 = vadd.f32 %v388, %v487
      %v489 = vpop.f32.mrf.mxu0
      %490 = vmatprep.mubr.bf16.mxu0 0
      %491 = vmatmul.mubr.bf16.gmra.mxu0 %v434
      %v492 = vpop.f32.mrf.mxu0
      %v493 = vadd.f32 %v393, %v492
      %v494 = vpop.f32.mrf.mxu0
      %v495 = vpop.f32.mrf.mxu0
      %v496 = vadd.f32 %v396, %v495
      %v497 = vpop.f32.mrf.mxu0
      %498 = vmatprep.mubr.bf16.mxu0 0
      %499 = vmatmul.mubr.bf16.gmra.mxu0 %v437
      %v500 = vpop.f32.mrf.mxu0
      %v501 = vadd.f32 %v401, %v500
      %v502 = vpop.f32.mrf.mxu0
      %v503 = vpop.f32.mrf.mxu0
      %v504 = vadd.f32 %v404, %v503
      %v505 = vpop.f32.mrf.mxu0
      %506 = vdwg.mxu0
      %v507 = vld [vmem:[%s277] sm:$0xf]
      %v508 = vld [vmem:[%s277 + $0x4] sm:$0x1]
      %v509 = vld [vmem:[%s277 + $0x8] sm:$0xf]
      %v510 = vld [vmem:[%s277 + $0xc] sm:$0x1]
      %v511 = vld [vmem:[%s277 + $0x10] sm:$0xf]
      %v512 = vld [vmem:[%s277 + $0x14] sm:$0x1]
      %v513 = vld [vmem:[%s277 + $0x18] sm:$0xf]
      %v514 = vld [vmem:[%s277 + $0x1c] sm:$0x1]
      %v515 = vld [vmem:[%s277 + $0x20] sm:$0xf]
      %v516 = vld [vmem:[%s277 + $0x24] sm:$0x1]
      %v517 = vld [vmem:[%s277 + $0x28] sm:$0xf]
      %v518 = vld [vmem:[%s277 + $0x2c] sm:$0x1]
      %v519 = vld [vmem:[%s277 + $0x30] sm:$0xf]
      %v520 = vld [vmem:[%s277 + $0x34] sm:$0x1]
      %v521 = vld [vmem:[%s277 + $0x38] sm:$0xf]
      %v522 = vld [vmem:[%s277 + $0x3c] sm:$0x1]
      %vm523 = vsmask.f32 3328
      %vm524 = vsmask.f32 7440
      %vm525 = vmor %vm523, %vm524
      %v527 = vshrl.u32 %v507, 16
      %v529 = vrot.slane %v527, 4
      %v530 = vshll.u32 %v507, 16
      %v532 = vrot.slane %v530, 5
      %v533 = vor.u32 %v529, %v532
      %v534 = vrot.slane %v533, 4
      %v536 = vshll.u32 %v508, 16
      %v538 = vrot.slane %v536, 5
      %v539 = vsel %vm525, %v534, %v538
      %v541 = vshrl.u32 %v509, 16
      %v543 = vrot.slane %v541, 4
      %v544 = vshll.u32 %v509, 16
      %v546 = vrot.slane %v544, 5
      %v547 = vor.u32 %v543, %v546
      %v548 = vrot.slane %v547, 4
      %v550 = vshll.u32 %v510, 16
      %v552 = vrot.slane %v550, 5
      %v553 = vsel %vm525, %v548, %v552
      %v555 = vshrl.u32 %v511, 16
      %v557 = vrot.slane %v555, 4
      %v558 = vshll.u32 %v511, 16
      %v560 = vrot.slane %v558, 5
      %v561 = vor.u32 %v557, %v560
      %v562 = vrot.slane %v561, 4
      %v564 = vshll.u32 %v512, 16
      %v566 = vrot.slane %v564, 5
      %v567 = vsel %vm525, %v562, %v566
      %v569 = vshrl.u32 %v513, 16
      %v571 = vrot.slane %v569, 4
      %v572 = vshll.u32 %v513, 16
      %v574 = vrot.slane %v572, 5
      %v575 = vor.u32 %v571, %v574
      %v576 = vrot.slane %v575, 4
      %v578 = vshll.u32 %v514, 16
      %v580 = vrot.slane %v578, 5
      %v581 = vsel %vm525, %v576, %v580
      %v583 = vshrl.u32 %v515, 16
      %v585 = vrot.slane %v583, 4
      %v586 = vshll.u32 %v515, 16
      %v588 = vrot.slane %v586, 5
      %v589 = vor.u32 %v585, %v588
      %v590 = vrot.slane %v589, 4
      %v592 = vshll.u32 %v516, 16
      %v594 = vrot.slane %v592, 5
      %v595 = vsel %vm525, %v590, %v594
      %v597 = vshrl.u32 %v517, 16
      %v599 = vrot.slane %v597, 4
      %v600 = vshll.u32 %v517, 16
      %v602 = vrot.slane %v600, 5
      %v603 = vor.u32 %v599, %v602
      %v604 = vrot.slane %v603, 4
      %v606 = vshll.u32 %v518, 16
      %v608 = vrot.slane %v606, 5
      %v609 = vsel %vm525, %v604, %v608
      %v611 = vshrl.u32 %v519, 16
      %v613 = vrot.slane %v611, 4
      %v614 = vshll.u32 %v519, 16
      %v616 = vrot.slane %v614, 5
      %v617 = vor.u32 %v613, %v616
      %v618 = vrot.slane %v617, 4
      %v620 = vshll.u32 %v520, 16
      %v622 = vrot.slane %v620, 5
      %v623 = vsel %vm525, %v618, %v622
      %v625 = vshrl.u32 %v521, 16
      %v627 = vrot.slane %v625, 4
      %v628 = vshll.u32 %v521, 16
      %v630 = vrot.slane %v628, 5
      %v631 = vor.u32 %v627, %v630
      %v632 = vrot.slane %v631, 4
      %v634 = vshll.u32 %v522, 16
      %v636 = vrot.slane %v634, 5
      %v637 = vsel %vm525, %v632, %v636
      %s638 = scalar_lea.vmem %s1, 4
      %v639 = vld [vmem:[%s638] sm:$0x3]
      %v640 = vunpack.c.l.b16 %v539
      %v641 = vunpack.c.l.b16 %v553
      %v642 = vunpack.c.l.b16 %v567
      %v643 = vunpack.c.l.b16 %v581
      %v644 = vunpack.c.l.b16 %v595
      %v645 = vunpack.c.l.b16 %v609
      %v646 = vunpack.c.l.b16 %v623
      %v647 = vunpack.c.l.b16 %v637
      %v648 = vpack.c.b16 %v641, %v640
      %v649 = vpack.c.b16 %v643, %v642
      %v650 = vpack.c.b16 %v645, %v644
      %v651 = vpack.c.b16 %v647, %v646
      %v653 = vsel %vm325, %v648, 0
      %v656 = vsel %vm325, %v649, 0
      %v659 = vsel %vm325, %v650, 0
      %v662 = vsel %vm325, %v651, 0
      %v665 = vsel %vm338, %v639, 0
      %667 = vmatprep.subr.bf16.mxu0 0
      %668 = vmatpush1.bf16.msra.mxu0 0
      %669 = vmatprep.subr.bf16.mxu0 0
      %670 = vmatpush1.bf16.msra.mxu0 0
      %671 = vmatprep.subr.bf16.mxu0 0
      %672 = vmatpush1.bf16.msra.mxu0 0
      %673 = vmatprep.subr.bf16.mxu0 0
      %674 = vmatpush1.bf16.msra.mxu0 0
      %675 = vmatprep.subr.bf16.mxu0 0
      %676 = vmatpush1.bf16.msra.mxu0 0
      %677 = vmatprep.subr.bf16.mxu0 0
      %678 = vmatpush1.bf16.msra.mxu0 0
      %679 = vmatprep.subr.bf16.mxu0 0
      %680 = vmatpush1.bf16.msra.mxu0 0
      %681 = vmatprep.subr.bf16.mxu0 0
      %682 = vmatpush1.bf16.msra.mxu0 %v665
      %683 = vmatprep.subr.bf16.mxu0 0
      %684 = vmatpush2.bf16.msra.mxu0 0
      %685 = vmatprep.subr.bf16.mxu0 0
      %686 = vmatpush2.bf16.msra.mxu0 0
      %687 = vmatprep.subr.bf16.mxu0 0
      %688 = vmatpush2.bf16.msra.mxu0 0
      %689 = vmatprep.subr.bf16.mxu0 0
      %690 = vmatpush2.bf16.msra.mxu0 0
      %691 = vmatprep.subr.bf16.mxu0 0
      %692 = vmatpush2.bf16.msra.mxu0 0
      %693 = vmatprep.subr.bf16.mxu0 0
      %694 = vmatpush2.bf16.msra.mxu0 0
      %695 = vmatprep.subr.bf16.mxu0 0
      %696 = vmatpush2.bf16.msra.mxu0 0
      %697 = vmatprep.subr.bf16.mxu0 0
      %698 = vmatpush2.bf16.msra.mxu0 0
      %699 = vmatprep.mubr.bf16.mxu0 0
      %700 = vmatmul.mubr.bf16.gmra.mxu0 %v653
      %v701 = vpop.f32.mrf.mxu0
      %v702 = vadd.f32 0.0, %v701
      %v703 = vpop.f32.mrf.mxu0
      %v704 = vpop.f32.mrf.mxu0
      %v705 = vadd.f32 0.0, %v704
      %v706 = vpop.f32.mrf.mxu0
      %707 = vmatprep.mubr.bf16.mxu0 0
      %708 = vmatmul.mubr.bf16.gmra.mxu0 %v656
      %v709 = vpop.f32.mrf.mxu0
      %v710 = vadd.f32 0.0, %v709
      %v711 = vpop.f32.mrf.mxu0
      %v712 = vpop.f32.mrf.mxu0
      %v713 = vadd.f32 0.0, %v712
      %v714 = vpop.f32.mrf.mxu0
      %715 = vmatprep.mubr.bf16.mxu0 0
      %716 = vmatmul.mubr.bf16.gmra.mxu0 %v659
      %v717 = vpop.f32.mrf.mxu0
      %v718 = vadd.f32 0.0, %v717
      %v719 = vpop.f32.mrf.mxu0
      %v720 = vpop.f32.mrf.mxu0
      %v721 = vadd.f32 0.0, %v720
      %v722 = vpop.f32.mrf.mxu0
      %723 = vmatprep.mubr.bf16.mxu0 0
      %724 = vmatmul.mubr.bf16.gmra.mxu0 %v662
      %v725 = vpop.f32.mrf.mxu0
      %v726 = vadd.f32 0.0, %v725
      %v727 = vpop.f32.mrf.mxu0
      %v728 = vpop.f32.mrf.mxu0
      %v729 = vadd.f32 0.0, %v728
      %v730 = vpop.f32.mrf.mxu0
      %731 = vdwg.mxu0
      %v732 = vadd.f32 %v477, %v702
      %v733 = vadd.f32 %v480, %v705
      %v734 = vadd.f32 %v485, %v710
      %v735 = vadd.f32 %v488, %v713
      %v736 = vadd.f32 %v493, %v718
      %v737 = vadd.f32 %v496, %v721
      %v738 = vadd.f32 %v501, %v726
      %v739 = vadd.f32 %v504, %v729
      %s740 = scalar_lea.vmem %s277, 144
      %v741 = vld [vmem:[%s740] sm:$0xf]
      %v742 = vld [vmem:[%s740 + $0x8] sm:$0xf]
      %v743 = vld [vmem:[%s740 + $0x10] sm:$0xf]
      %v744 = vld [vmem:[%s740 + $0x18] sm:$0xf]
      %v745 = vld [vmem:[%s740 + $0x20] sm:$0xf]
      %v746 = vld [vmem:[%s740 + $0x28] sm:$0xf]
      %v747 = vld [vmem:[%s740 + $0x30] sm:$0xf]
      %v748 = vld [vmem:[%s740 + $0x38] sm:$0xf]
      %s749 = scalar_lea.vmem %s1, 6
      %v750 = vld [vmem:[%s749] sm:$0x3]
      %v759 = vunpack.c.l.b16 %v741
      %v760 = vunpack.c.l.b16 %v742
      %v761 = vunpack.c.l.b16 %v743
      %v762 = vunpack.c.l.b16 %v744
      %v763 = vunpack.c.l.b16 %v745
      %v764 = vunpack.c.l.b16 %v746
      %v765 = vunpack.c.l.b16 %v747
      %v766 = vunpack.c.l.b16 %v748
      %v767 = vpack.c.b16 %v760, %v759
      %v768 = vpack.c.b16 %v762, %v761
      %v769 = vpack.c.b16 %v764, %v763
      %v770 = vpack.c.b16 %v766, %v765
      %v772 = vsel %vm325, %v767, 0
      %v775 = vsel %vm325, %v768, 0
      %v778 = vsel %vm325, %v769, 0
      %v781 = vsel %vm325, %v770, 0
      %v784 = vsel %vm338, %v750, 0
      %786 = vmatprep.subr.bf16.mxu0 0
      %787 = vmatpush1.bf16.msra.mxu0 0
      %788 = vmatprep.subr.bf16.mxu0 0
      %789 = vmatpush1.bf16.msra.mxu0 0
      %790 = vmatprep.subr.bf16.mxu0 0
      %791 = vmatpush1.bf16.msra.mxu0 0
      %792 = vmatprep.subr.bf16.mxu0 0
      %793 = vmatpush1.bf16.msra.mxu0 0
      %794 = vmatprep.subr.bf16.mxu0 0
      %795 = vmatpush1.bf16.msra.mxu0 0
      %796 = vmatprep.subr.bf16.mxu0 0
      %797 = vmatpush1.bf16.msra.mxu0 0
      %798 = vmatprep.subr.bf16.mxu0 0
      %799 = vmatpush1.bf16.msra.mxu0 0
      %800 = vmatprep.subr.bf16.mxu0 0
      %801 = vmatpush1.bf16.msra.mxu0 %v784
      %802 = vmatprep.subr.bf16.mxu0 0
      %803 = vmatpush2.bf16.msra.mxu0 0
      %804 = vmatprep.subr.bf16.mxu0 0
      %805 = vmatpush2.bf16.msra.mxu0 0
      %806 = vmatprep.subr.bf16.mxu0 0
      %807 = vmatpush2.bf16.msra.mxu0 0
      %808 = vmatprep.subr.bf16.mxu0 0
      %809 = vmatpush2.bf16.msra.mxu0 0
      %810 = vmatprep.subr.bf16.mxu0 0
      %811 = vmatpush2.bf16.msra.mxu0 0
      %812 = vmatprep.subr.bf16.mxu0 0
      %813 = vmatpush2.bf16.msra.mxu0 0
      %814 = vmatprep.subr.bf16.mxu0 0
      %815 = vmatpush2.bf16.msra.mxu0 0
      %816 = vmatprep.subr.bf16.mxu0 0
      %817 = vmatpush2.bf16.msra.mxu0 0
      %818 = vmatprep.mubr.bf16.mxu0 0
      %819 = vmatmul.mubr.bf16.gmra.mxu0 %v772
      %v820 = vpop.f32.mrf.mxu0
      %v821 = vadd.f32 0.0, %v820
      %v822 = vpop.f32.mrf.mxu0
      %v823 = vpop.f32.mrf.mxu0
      %v824 = vadd.f32 0.0, %v823
      %v825 = vpop.f32.mrf.mxu0
      %826 = vmatprep.mubr.bf16.mxu0 0
      %827 = vmatmul.mubr.bf16.gmra.mxu0 %v775
      %v828 = vpop.f32.mrf.mxu0
      %v829 = vadd.f32 0.0, %v828
      %v830 = vpop.f32.mrf.mxu0
      %v831 = vpop.f32.mrf.mxu0
      %v832 = vadd.f32 0.0, %v831
      %v833 = vpop.f32.mrf.mxu0
      %834 = vmatprep.mubr.bf16.mxu0 0
      %835 = vmatmul.mubr.bf16.gmra.mxu0 %v778
      %v836 = vpop.f32.mrf.mxu0
      %v837 = vadd.f32 0.0, %v836
      %v838 = vpop.f32.mrf.mxu0
      %v839 = vpop.f32.mrf.mxu0
      %v840 = vadd.f32 0.0, %v839
      %v841 = vpop.f32.mrf.mxu0
      %842 = vmatprep.mubr.bf16.mxu0 0
      %843 = vmatmul.mubr.bf16.gmra.mxu0 %v781
      %v844 = vpop.f32.mrf.mxu0
      %v845 = vadd.f32 0.0, %v844
      %v846 = vpop.f32.mrf.mxu0
      %v847 = vpop.f32.mrf.mxu0
      %v848 = vadd.f32 0.0, %v847
      %v849 = vpop.f32.mrf.mxu0
      %850 = vdwg.mxu0
      %v851 = vadd.f32 %v732, %v821
      %v852 = vadd.f32 %v733, %v824
      %v853 = vadd.f32 %v734, %v829
      %v854 = vadd.f32 %v735, %v832
      %v855 = vadd.f32 %v736, %v837
      %v856 = vadd.f32 %v737, %v840
      %v857 = vadd.f32 %v738, %v845
      %v858 = vadd.f32 %v739, %v848
      %s859 = scalar_lea.vmem %s277, 216
      %v860 = vld [vmem:[%s859] sm:$0xf]
      %v861 = vld [vmem:[%s859 + $0x8] sm:$0xf]
      %v862 = vld [vmem:[%s859 + $0x10] sm:$0xf]
      %v863 = vld [vmem:[%s859 + $0x18] sm:$0xf]
      %v864 = vld [vmem:[%s859 + $0x20] sm:$0xf]
      %v865 = vld [vmem:[%s859 + $0x28] sm:$0xf]
      %v866 = vld [vmem:[%s859 + $0x30] sm:$0xf]
      %v867 = vld [vmem:[%s859 + $0x38] sm:$0xf]
      %s868 = scalar_lea.vmem %s1, 8
      %v869 = vld [vmem:[%s868] sm:$0x3]
      %v878 = vunpack.c.l.b16 %v860
      %v879 = vunpack.c.l.b16 %v861
      %v880 = vunpack.c.l.b16 %v862
      %v881 = vunpack.c.l.b16 %v863
      %v882 = vunpack.c.l.b16 %v864
      %v883 = vunpack.c.l.b16 %v865
      %v884 = vunpack.c.l.b16 %v866
      %v885 = vunpack.c.l.b16 %v867
      %v886 = vpack.c.b16 %v879, %v878
      %v887 = vpack.c.b16 %v881, %v880
      %v888 = vpack.c.b16 %v883, %v882
      %v889 = vpack.c.b16 %v885, %v884
      %v891 = vsel %vm325, %v886, 0
      %v894 = vsel %vm325, %v887, 0
      %v897 = vsel %vm325, %v888, 0
      %v900 = vsel %vm325, %v889, 0
      %v903 = vsel %vm338, %v869, 0
      %905 = vmatprep.subr.bf16.mxu0 0
      %906 = vmatpush1.bf16.msra.mxu0 0
      %907 = vmatprep.subr.bf16.mxu0 0
      %908 = vmatpush1.bf16.msra.mxu0 0
      %909 = vmatprep.subr.bf16.mxu0 0
      %910 = vmatpush1.bf16.msra.mxu0 0
      %911 = vmatprep.subr.bf16.mxu0 0
      %912 = vmatpush1.bf16.msra.mxu0 0
      %913 = vmatprep.subr.bf16.mxu0 0
      %914 = vmatpush1.bf16.msra.mxu0 0
      %915 = vmatprep.subr.bf16.mxu0 0
      %916 = vmatpush1.bf16.msra.mxu0 0
      %917 = vmatprep.subr.bf16.mxu0 0
      %918 = vmatpush1.bf16.msra.mxu0 0
      %919 = vmatprep.subr.bf16.mxu0 0
      %920 = vmatpush1.bf16.msra.mxu0 %v903
      %921 = vmatprep.subr.bf16.mxu0 0
      %922 = vmatpush2.bf16.msra.mxu0 0
      %923 = vmatprep.subr.bf16.mxu0 0
      %924 = vmatpush2.bf16.msra.mxu0 0
      %925 = vmatprep.subr.bf16.mxu0 0
      %926 = vmatpush2.bf16.msra.mxu0 0
      %927 = vmatprep.subr.bf16.mxu0 0
      %928 = vmatpush2.bf16.msra.mxu0 0
      %929 = vmatprep.subr.bf16.mxu0 0
      %930 = vmatpush2.bf16.msra.mxu0 0
      %931 = vmatprep.subr.bf16.mxu0 0
      %932 = vmatpush2.bf16.msra.mxu0 0
      %933 = vmatprep.subr.bf16.mxu0 0
      %934 = vmatpush2.bf16.msra.mxu0 0
      %935 = vmatprep.subr.bf16.mxu0 0
      %936 = vmatpush2.bf16.msra.mxu0 0
      %937 = vmatprep.mubr.bf16.mxu0 0
      %938 = vmatmul.mubr.bf16.gmra.mxu0 %v891
      %v939 = vpop.f32.mrf.mxu0
      %v940 = vadd.f32 0.0, %v939
      %v941 = vpop.f32.mrf.mxu0
      %v942 = vpop.f32.mrf.mxu0
      %v943 = vadd.f32 0.0, %v942
      %v944 = vpop.f32.mrf.mxu0
      %945 = vmatprep.mubr.bf16.mxu0 0
      %946 = vmatmul.mubr.bf16.gmra.mxu0 %v894
      %v947 = vpop.f32.mrf.mxu0
      %v948 = vadd.f32 0.0, %v947
      %v949 = vpop.f32.mrf.mxu0
      %v950 = vpop.f32.mrf.mxu0
      %v951 = vadd.f32 0.0, %v950
      %v952 = vpop.f32.mrf.mxu0
      %953 = vmatprep.mubr.bf16.mxu0 0
      %954 = vmatmul.mubr.bf16.gmra.mxu0 %v897
      %v955 = vpop.f32.mrf.mxu0
      %v956 = vadd.f32 0.0, %v955
      %v957 = vpop.f32.mrf.mxu0
      %v958 = vpop.f32.mrf.mxu0
      %v959 = vadd.f32 0.0, %v958
      %v960 = vpop.f32.mrf.mxu0
      %961 = vmatprep.mubr.bf16.mxu0 0
      %962 = vmatmul.mubr.bf16.gmra.mxu0 %v900
      %v963 = vpop.f32.mrf.mxu0
      %v964 = vadd.f32 0.0, %v963
      %v965 = vpop.f32.mrf.mxu0
      %v966 = vpop.f32.mrf.mxu0
      %v967 = vadd.f32 0.0, %v966
      %v968 = vpop.f32.mrf.mxu0
      %969 = vdwg.mxu0
      %v970 = vadd.f32 %v851, %v940
      %v971 = vadd.f32 %v852, %v943
      %v972 = vadd.f32 %v853, %v948
      %v973 = vadd.f32 %v854, %v951
      %v974 = vadd.f32 %v855, %v956
      %v975 = vadd.f32 %v856, %v959
      %v976 = vadd.f32 %v857, %v964
      %v977 = vadd.f32 %v858, %v967
      %v978 = vld [vmem:[%s740] sm:$0xf]
      %v979 = vld [vmem:[%s740 + $0x4] sm:$0x1]
      %v980 = vld [vmem:[%s740 + $0x8] sm:$0xf]
      %v981 = vld [vmem:[%s740 + $0xc] sm:$0x1]
      %v982 = vld [vmem:[%s740 + $0x10] sm:$0xf]
      %v983 = vld [vmem:[%s740 + $0x14] sm:$0x1]
      %v984 = vld [vmem:[%s740 + $0x18] sm:$0xf]
      %v985 = vld [vmem:[%s740 + $0x1c] sm:$0x1]
      %v986 = vld [vmem:[%s740 + $0x20] sm:$0xf]
      %v987 = vld [vmem:[%s740 + $0x24] sm:$0x1]
      %v988 = vld [vmem:[%s740 + $0x28] sm:$0xf]
      %v989 = vld [vmem:[%s740 + $0x2c] sm:$0x1]
      %v990 = vld [vmem:[%s740 + $0x30] sm:$0xf]
      %v991 = vld [vmem:[%s740 + $0x34] sm:$0x1]
      %v992 = vld [vmem:[%s740 + $0x38] sm:$0xf]
      %v993 = vld [vmem:[%s740 + $0x3c] sm:$0x1]
      %v995 = vshrl.u32 %v978, 16
      %v997 = vrot.slane %v995, 4
      %v998 = vshll.u32 %v978, 16
      %v1000 = vrot.slane %v998, 5
      %v1001 = vor.u32 %v997, %v1000
      %v1002 = vrot.slane %v1001, 4
      %v1004 = vshll.u32 %v979, 16
      %v1006 = vrot.slane %v1004, 5
      %v1007 = vsel %vm525, %v1002, %v1006
      %v1009 = vshrl.u32 %v980, 16
      %v1011 = vrot.slane %v1009, 4
      %v1012 = vshll.u32 %v980, 16
      %v1014 = vrot.slane %v1012, 5
      %v1015 = vor.u32 %v1011, %v1014
      %v1016 = vrot.slane %v1015, 4
      %v1018 = vshll.u32 %v981, 16
      %v1020 = vrot.slane %v1018, 5
      %v1021 = vsel %vm525, %v1016, %v1020
      %v1023 = vshrl.u32 %v982, 16
      %v1025 = vrot.slane %v1023, 4
      %v1026 = vshll.u32 %v982, 16
      %v1028 = vrot.slane %v1026, 5
      %v1029 = vor.u32 %v1025, %v1028
      %v1030 = vrot.slane %v1029, 4
      %v1032 = vshll.u32 %v983, 16
      %v1034 = vrot.slane %v1032, 5
      %v1035 = vsel %vm525, %v1030, %v1034
      %v1037 = vshrl.u32 %v984, 16
      %v1039 = vrot.slane %v1037, 4
      %v1040 = vshll.u32 %v984, 16
      %v1042 = vrot.slane %v1040, 5
      %v1043 = vor.u32 %v1039, %v1042
      %v1044 = vrot.slane %v1043, 4
      %v1046 = vshll.u32 %v985, 16
      %v1048 = vrot.slane %v1046, 5
      %v1049 = vsel %vm525, %v1044, %v1048
      %v1051 = vshrl.u32 %v986, 16
      %v1053 = vrot.slane %v1051, 4
      %v1054 = vshll.u32 %v986, 16
      %v1056 = vrot.slane %v1054, 5
      %v1057 = vor.u32 %v1053, %v1056
      %v1058 = vrot.slane %v1057, 4
      %v1060 = vshll.u32 %v987, 16
      %v1062 = vrot.slane %v1060, 5
      %v1063 = vsel %vm525, %v1058, %v1062
      %v1065 = vshrl.u32 %v988, 16
      %v1067 = vrot.slane %v1065, 4
      %v1068 = vshll.u32 %v988, 16
      %v1070 = vrot.slane %v1068, 5
      %v1071 = vor.u32 %v1067, %v1070
      %v1072 = vrot.slane %v1071, 4
      %v1074 = vshll.u32 %v989, 16
      %v1076 = vrot.slane %v1074, 5
      %v1077 = vsel %vm525, %v1072, %v1076
      %v1079 = vshrl.u32 %v990, 16
      %v1081 = vrot.slane %v1079, 4
      %v1082 = vshll.u32 %v990, 16
      %v1084 = vrot.slane %v1082, 5
      %v1085 = vor.u32 %v1081, %v1084
      %v1086 = vrot.slane %v1085, 4
      %v1088 = vshll.u32 %v991, 16
      %v1090 = vrot.slane %v1088, 5
      %v1091 = vsel %vm525, %v1086, %v1090
      %v1093 = vshrl.u32 %v992, 16
      %v1095 = vrot.slane %v1093, 4
      %v1096 = vshll.u32 %v992, 16
      %v1098 = vrot.slane %v1096, 5
      %v1099 = vor.u32 %v1095, %v1098
      %v1100 = vrot.slane %v1099, 4
      %v1102 = vshll.u32 %v993, 16
      %v1104 = vrot.slane %v1102, 5
      %v1105 = vsel %vm525, %v1100, %v1104
      %s1106 = scalar_lea.vmem %s1, 10
      %v1107 = vld [vmem:[%s1106] sm:$0x3]
      %v1108 = vunpack.c.l.b16 %v1007
      %v1109 = vunpack.c.l.b16 %v1021
      %v1110 = vunpack.c.l.b16 %v1035
      %v1111 = vunpack.c.l.b16 %v1049
      %v1112 = vunpack.c.l.b16 %v1063
      %v1113 = vunpack.c.l.b16 %v1077
      %v1114 = vunpack.c.l.b16 %v1091
      %v1115 = vunpack.c.l.b16 %v1105
      %v1116 = vpack.c.b16 %v1109, %v1108
      %v1117 = vpack.c.b16 %v1111, %v1110
      %v1118 = vpack.c.b16 %v1113, %v1112
      %v1119 = vpack.c.b16 %v1115, %v1114
      %v1121 = vsel %vm325, %v1116, 0
      %v1124 = vsel %vm325, %v1117, 0
      %v1127 = vsel %vm325, %v1118, 0
      %v1130 = vsel %vm325, %v1119, 0
      %v1133 = vsel %vm338, %v1107, 0
      %1135 = vmatprep.subr.bf16.mxu0 0
      %1136 = vmatpush1.bf16.msra.mxu0 0
      %1137 = vmatprep.subr.bf16.mxu0 0
      %1138 = vmatpush1.bf16.msra.mxu0 0
      %1139 = vmatprep.subr.bf16.mxu0 0
      %1140 = vmatpush1.bf16.msra.mxu0 0
      %1141 = vmatprep.subr.bf16.mxu0 0
      %1142 = vmatpush1.bf16.msra.mxu0 0
      %1143 = vmatprep.subr.bf16.mxu0 0
      %1144 = vmatpush1.bf16.msra.mxu0 0
      %1145 = vmatprep.subr.bf16.mxu0 0
      %1146 = vmatpush1.bf16.msra.mxu0 0
      %1147 = vmatprep.subr.bf16.mxu0 0
      %1148 = vmatpush1.bf16.msra.mxu0 0
      %1149 = vmatprep.subr.bf16.mxu0 0
      %1150 = vmatpush1.bf16.msra.mxu0 %v1133
      %1151 = vmatprep.subr.bf16.mxu0 0
      %1152 = vmatpush2.bf16.msra.mxu0 0
      %1153 = vmatprep.subr.bf16.mxu0 0
      %1154 = vmatpush2.bf16.msra.mxu0 0
      %1155 = vmatprep.subr.bf16.mxu0 0
      %1156 = vmatpush2.bf16.msra.mxu0 0
      %1157 = vmatprep.subr.bf16.mxu0 0
      %1158 = vmatpush2.bf16.msra.mxu0 0
      %1159 = vmatprep.subr.bf16.mxu0 0
      %1160 = vmatpush2.bf16.msra.mxu0 0
      %1161 = vmatprep.subr.bf16.mxu0 0
      %1162 = vmatpush2.bf16.msra.mxu0 0
      %1163 = vmatprep.subr.bf16.mxu0 0
      %1164 = vmatpush2.bf16.msra.mxu0 0
      %1165 = vmatprep.subr.bf16.mxu0 0
      %1166 = vmatpush2.bf16.msra.mxu0 0
      %1167 = vmatprep.mubr.bf16.mxu0 0
      %1168 = vmatmul.mubr.bf16.gmra.mxu0 %v1121
      %v1169 = vpop.f32.mrf.mxu0
      %v1170 = vadd.f32 0.0, %v1169
      %v1171 = vpop.f32.mrf.mxu0
      %v1172 = vpop.f32.mrf.mxu0
      %v1173 = vadd.f32 0.0, %v1172
      %v1174 = vpop.f32.mrf.mxu0
      %1175 = vmatprep.mubr.bf16.mxu0 0
      %1176 = vmatmul.mubr.bf16.gmra.mxu0 %v1124
      %v1177 = vpop.f32.mrf.mxu0
      %v1178 = vadd.f32 0.0, %v1177
      %v1179 = vpop.f32.mrf.mxu0
      %v1180 = vpop.f32.mrf.mxu0
      %v1181 = vadd.f32 0.0, %v1180
      %v1182 = vpop.f32.mrf.mxu0
      %1183 = vmatprep.mubr.bf16.mxu0 0
      %1184 = vmatmul.mubr.bf16.gmra.mxu0 %v1127
      %v1185 = vpop.f32.mrf.mxu0
      %v1186 = vadd.f32 0.0, %v1185
      %v1187 = vpop.f32.mrf.mxu0
      %v1188 = vpop.f32.mrf.mxu0
      %v1189 = vadd.f32 0.0, %v1188
      %v1190 = vpop.f32.mrf.mxu0
      %1191 = vmatprep.mubr.bf16.mxu0 0
      %1192 = vmatmul.mubr.bf16.gmra.mxu0 %v1130
      %v1193 = vpop.f32.mrf.mxu0
      %v1194 = vadd.f32 0.0, %v1193
      %v1195 = vpop.f32.mrf.mxu0
      %v1196 = vpop.f32.mrf.mxu0
      %v1197 = vadd.f32 0.0, %v1196
      %v1198 = vpop.f32.mrf.mxu0
      %1199 = vdwg.mxu0
      %v1200 = vadd.f32 %v970, %v1170
      %v1201 = vadd.f32 %v971, %v1173
      %v1202 = vadd.f32 %v972, %v1178
      %v1203 = vadd.f32 %v973, %v1181
      %v1204 = vadd.f32 %v974, %v1186
      %v1205 = vadd.f32 %v975, %v1189
      %v1206 = vadd.f32 %v976, %v1194
      %v1207 = vadd.f32 %v977, %v1197
      %s1208 = scalar_lea.vmem %s277, 8
      %v1209 = vld [vmem:[%s1208] sm:$0xf]
      %v1210 = vld [vmem:[%s1208 + $0x8] sm:$0xf]
      %v1211 = vld [vmem:[%s1208 + $0x10] sm:$0xf]
      %v1212 = vld [vmem:[%s1208 + $0x18] sm:$0xf]
      %v1213 = vld [vmem:[%s1208 + $0x20] sm:$0xf]
      %v1214 = vld [vmem:[%s1208 + $0x28] sm:$0xf]
      %v1215 = vld [vmem:[%s1208 + $0x30] sm:$0xf]
      %v1216 = vld [vmem:[%s1208 + $0x38] sm:$0xf]
      %s1217 = scalar_lea.vmem %s1, 12
      %v1218 = vld [vmem:[%s1217] sm:$0x3]
      %v1227 = vunpack.c.l.b16 %v1209
      %v1228 = vunpack.c.l.b16 %v1210
      %v1229 = vunpack.c.l.b16 %v1211
      %v1230 = vunpack.c.l.b16 %v1212
      %v1231 = vunpack.c.l.b16 %v1213
      %v1232 = vunpack.c.l.b16 %v1214
      %v1233 = vunpack.c.l.b16 %v1215
      %v1234 = vunpack.c.l.b16 %v1216
      %v1235 = vpack.c.b16 %v1228, %v1227
      %v1236 = vpack.c.b16 %v1230, %v1229
      %v1237 = vpack.c.b16 %v1232, %v1231
      %v1238 = vpack.c.b16 %v1234, %v1233
      %v1240 = vsel %vm325, %v1235, 0
      %v1243 = vsel %vm325, %v1236, 0
      %v1246 = vsel %vm325, %v1237, 0
      %v1249 = vsel %vm325, %v1238, 0
      %v1252 = vsel %vm338, %v1218, 0
      %1254 = vmatprep.subr.bf16.mxu0 0
      %1255 = vmatpush1.bf16.msra.mxu0 0
      %1256 = vmatprep.subr.bf16.mxu0 0
      %1257 = vmatpush1.bf16.msra.mxu0 0
      %1258 = vmatprep.subr.bf16.mxu0 0
      %1259 = vmatpush1.bf16.msra.mxu0 0
      %1260 = vmatprep.subr.bf16.mxu0 0
      %1261 = vmatpush1.bf16.msra.mxu0 0
      %1262 = vmatprep.subr.bf16.mxu0 0
      %1263 = vmatpush1.bf16.msra.mxu0 0
      %1264 = vmatprep.subr.bf16.mxu0 0
      %1265 = vmatpush1.bf16.msra.mxu0 0
      %1266 = vmatprep.subr.bf16.mxu0 0
      %1267 = vmatpush1.bf16.msra.mxu0 0
      %1268 = vmatprep.subr.bf16.mxu0 0
      %1269 = vmatpush1.bf16.msra.mxu0 %v1252
      %1270 = vmatprep.subr.bf16.mxu0 0
      %1271 = vmatpush2.bf16.msra.mxu0 0
      %1272 = vmatprep.subr.bf16.mxu0 0
      %1273 = vmatpush2.bf16.msra.mxu0 0
      %1274 = vmatprep.subr.bf16.mxu0 0
      %1275 = vmatpush2.bf16.msra.mxu0 0
      %1276 = vmatprep.subr.bf16.mxu0 0
      %1277 = vmatpush2.bf16.msra.mxu0 0
      %1278 = vmatprep.subr.bf16.mxu0 0
      %1279 = vmatpush2.bf16.msra.mxu0 0
      %1280 = vmatprep.subr.bf16.mxu0 0
      %1281 = vmatpush2.bf16.msra.mxu0 0
      %1282 = vmatprep.subr.bf16.mxu0 0
      %1283 = vmatpush2.bf16.msra.mxu0 0
      %1284 = vmatprep.subr.bf16.mxu0 0
      %1285 = vmatpush2.bf16.msra.mxu0 0
      %1286 = vmatprep.mubr.bf16.mxu0 0
      %1287 = vmatmul.mubr.bf16.gmra.mxu0 %v1240
      %v1288 = vpop.f32.mrf.mxu0
      %v1289 = vadd.f32 0.0, %v1288
      %v1290 = vpop.f32.mrf.mxu0
      %v1291 = vpop.f32.mrf.mxu0
      %v1292 = vadd.f32 0.0, %v1291
      %v1293 = vpop.f32.mrf.mxu0
      %1294 = vmatprep.mubr.bf16.mxu0 0
      %1295 = vmatmul.mubr.bf16.gmra.mxu0 %v1243
      %v1296 = vpop.f32.mrf.mxu0
      %v1297 = vadd.f32 0.0, %v1296
      %v1298 = vpop.f32.mrf.mxu0
      %v1299 = vpop.f32.mrf.mxu0
      %v1300 = vadd.f32 0.0, %v1299
      %v1301 = vpop.f32.mrf.mxu0
      %1302 = vmatprep.mubr.bf16.mxu0 0
      %1303 = vmatmul.mubr.bf16.gmra.mxu0 %v1246
      %v1304 = vpop.f32.mrf.mxu0
      %v1305 = vadd.f32 0.0, %v1304
      %v1306 = vpop.f32.mrf.mxu0
      %v1307 = vpop.f32.mrf.mxu0
      %v1308 = vadd.f32 0.0, %v1307
      %v1309 = vpop.f32.mrf.mxu0
      %1310 = vmatprep.mubr.bf16.mxu0 0
      %1311 = vmatmul.mubr.bf16.gmra.mxu0 %v1249
      %v1312 = vpop.f32.mrf.mxu0
      %v1313 = vadd.f32 0.0, %v1312
      %v1314 = vpop.f32.mrf.mxu0
      %v1315 = vpop.f32.mrf.mxu0
      %v1316 = vadd.f32 0.0, %v1315
      %v1317 = vpop.f32.mrf.mxu0
      %1318 = vdwg.mxu0
      %v1319 = vadd.f32 %v1200, %v1289
      %v1320 = vadd.f32 %v1201, %v1292
      %v1321 = vadd.f32 %v1202, %v1297
      %v1322 = vadd.f32 %v1203, %v1300
      %v1323 = vadd.f32 %v1204, %v1305
      %v1324 = vadd.f32 %v1205, %v1308
      %v1325 = vadd.f32 %v1206, %v1313
      %v1326 = vadd.f32 %v1207, %v1316
      %s1327 = scalar_lea.vmem %s277, 80
      %v1328 = vld [vmem:[%s1327] sm:$0xf]
      %v1329 = vld [vmem:[%s1327 + $0x8] sm:$0xf]
      %v1330 = vld [vmem:[%s1327 + $0x10] sm:$0xf]
      %v1331 = vld [vmem:[%s1327 + $0x18] sm:$0xf]
      %v1332 = vld [vmem:[%s1327 + $0x20] sm:$0xf]
      %v1333 = vld [vmem:[%s1327 + $0x28] sm:$0xf]
      %v1334 = vld [vmem:[%s1327 + $0x30] sm:$0xf]
      %v1335 = vld [vmem:[%s1327 + $0x38] sm:$0xf]
      %s1336 = scalar_lea.vmem %s1, 14
      %v1337 = vld [vmem:[%s1336] sm:$0x3]
      %v1346 = vunpack.c.l.b16 %v1328
      %v1347 = vunpack.c.l.b16 %v1329
      %v1348 = vunpack.c.l.b16 %v1330
      %v1349 = vunpack.c.l.b16 %v1331
      %v1350 = vunpack.c.l.b16 %v1332
      %v1351 = vunpack.c.l.b16 %v1333
      %v1352 = vunpack.c.l.b16 %v1334
      %v1353 = vunpack.c.l.b16 %v1335
      %v1354 = vpack.c.b16 %v1347, %v1346
      %v1355 = vpack.c.b16 %v1349, %v1348
      %v1356 = vpack.c.b16 %v1351, %v1350
      %v1357 = vpack.c.b16 %v1353, %v1352
      %v1359 = vsel %vm325, %v1354, 0
      %v1362 = vsel %vm325, %v1355, 0
      %v1365 = vsel %vm325, %v1356, 0
      %v1368 = vsel %vm325, %v1357, 0
      %v1371 = vsel %vm338, %v1337, 0
      %1373 = vmatprep.subr.bf16.mxu0 0
      %1374 = vmatpush1.bf16.msra.mxu0 0
      %1375 = vmatprep.subr.bf16.mxu0 0
      %1376 = vmatpush1.bf16.msra.mxu0 0
      %1377 = vmatprep.subr.bf16.mxu0 0
      %1378 = vmatpush1.bf16.msra.mxu0 0
      %1379 = vmatprep.subr.bf16.mxu0 0
      %1380 = vmatpush1.bf16.msra.mxu0 0
      %1381 = vmatprep.subr.bf16.mxu0 0
      %1382 = vmatpush1.bf16.msra.mxu0 0
      %1383 = vmatprep.subr.bf16.mxu0 0
      %1384 = vmatpush1.bf16.msra.mxu0 0
      %1385 = vmatprep.subr.bf16.mxu0 0
      %1386 = vmatpush1.bf16.msra.mxu0 0
      %1387 = vmatprep.subr.bf16.mxu0 0
      %1388 = vmatpush1.bf16.msra.mxu0 %v1371
      %1389 = vmatprep.subr.bf16.mxu0 0
      %1390 = vmatpush2.bf16.msra.mxu0 0
      %1391 = vmatprep.subr.bf16.mxu0 0
      %1392 = vmatpush2.bf16.msra.mxu0 0
      %1393 = vmatprep.subr.bf16.mxu0 0
      %1394 = vmatpush2.bf16.msra.mxu0 0
      %1395 = vmatprep.subr.bf16.mxu0 0
      %1396 = vmatpush2.bf16.msra.mxu0 0
      %1397 = vmatprep.subr.bf16.mxu0 0
      %1398 = vmatpush2.bf16.msra.mxu0 0
      %1399 = vmatprep.subr.bf16.mxu0 0
      %1400 = vmatpush2.bf16.msra.mxu0 0
      %1401 = vmatprep.subr.bf16.mxu0 0
      %1402 = vmatpush2.bf16.msra.mxu0 0
      %1403 = vmatprep.subr.bf16.mxu0 0
      %1404 = vmatpush2.bf16.msra.mxu0 0
      %1405 = vmatprep.mubr.bf16.mxu0 0
      %1406 = vmatmul.mubr.bf16.gmra.mxu0 %v1359
      %v1407 = vpop.f32.mrf.mxu0
      %v1408 = vadd.f32 0.0, %v1407
      %v1409 = vpop.f32.mrf.mxu0
      %v1410 = vpop.f32.mrf.mxu0
      %v1411 = vadd.f32 0.0, %v1410
      %v1412 = vpop.f32.mrf.mxu0
      %1413 = vmatprep.mubr.bf16.mxu0 0
      %1414 = vmatmul.mubr.bf16.gmra.mxu0 %v1362
      %v1415 = vpop.f32.mrf.mxu0
      %v1416 = vadd.f32 0.0, %v1415
      %v1417 = vpop.f32.mrf.mxu0
      %v1418 = vpop.f32.mrf.mxu0
      %v1419 = vadd.f32 0.0, %v1418
      %v1420 = vpop.f32.mrf.mxu0
      %1421 = vmatprep.mubr.bf16.mxu0 0
      %1422 = vmatmul.mubr.bf16.gmra.mxu0 %v1365
      %v1423 = vpop.f32.mrf.mxu0
      %v1424 = vadd.f32 0.0, %v1423
      %v1425 = vpop.f32.mrf.mxu0
      %v1426 = vpop.f32.mrf.mxu0
      %v1427 = vadd.f32 0.0, %v1426
      %v1428 = vpop.f32.mrf.mxu0
      %1429 = vmatprep.mubr.bf16.mxu0 0
      %1430 = vmatmul.mubr.bf16.gmra.mxu0 %v1368
      %v1431 = vpop.f32.mrf.mxu0
      %v1432 = vadd.f32 0.0, %v1431
      %v1433 = vpop.f32.mrf.mxu0
      %v1434 = vpop.f32.mrf.mxu0
      %v1435 = vadd.f32 0.0, %v1434
      %v1436 = vpop.f32.mrf.mxu0
      %1437 = vdwg.mxu0
      %v1438 = vadd.f32 %v1319, %v1408
      %v1439 = vadd.f32 %v1320, %v1411
      %v1440 = vadd.f32 %v1321, %v1416
      %v1441 = vadd.f32 %v1322, %v1419
      %v1442 = vadd.f32 %v1323, %v1424
      %v1443 = vadd.f32 %v1324, %v1427
      %v1444 = vadd.f32 %v1325, %v1432
      %v1445 = vadd.f32 %v1326, %v1435
      %v1446 = vld [vmem:[%s1208] sm:$0xf]
      %v1447 = vld [vmem:[%s1208 + $0x4] sm:$0x1]
      %v1448 = vld [vmem:[%s1208 + $0x8] sm:$0xf]
      %v1449 = vld [vmem:[%s1208 + $0xc] sm:$0x1]
      %v1450 = vld [vmem:[%s1208 + $0x10] sm:$0xf]
      %v1451 = vld [vmem:[%s1208 + $0x14] sm:$0x1]
      %v1452 = vld [vmem:[%s1208 + $0x18] sm:$0xf]
      %v1453 = vld [vmem:[%s1208 + $0x1c] sm:$0x1]
      %v1454 = vld [vmem:[%s1208 + $0x20] sm:$0xf]
      %v1455 = vld [vmem:[%s1208 + $0x24] sm:$0x1]
      %v1456 = vld [vmem:[%s1208 + $0x28] sm:$0xf]
      %v1457 = vld [vmem:[%s1208 + $0x2c] sm:$0x1]
      %v1458 = vld [vmem:[%s1208 + $0x30] sm:$0xf]
      %v1459 = vld [vmem:[%s1208 + $0x34] sm:$0x1]
      %v1460 = vld [vmem:[%s1208 + $0x38] sm:$0xf]
      %v1461 = vld [vmem:[%s1208 + $0x3c] sm:$0x1]
      %v1463 = vshrl.u32 %v1446, 16
      %v1465 = vrot.slane %v1463, 4
      %v1466 = vshll.u32 %v1446, 16
      %v1468 = vrot.slane %v1466, 5
      %v1469 = vor.u32 %v1465, %v1468
      %v1470 = vrot.slane %v1469, 4
      %v1472 = vshll.u32 %v1447, 16
      %v1474 = vrot.slane %v1472, 5
      %v1475 = vsel %vm525, %v1470, %v1474
      %v1477 = vshrl.u32 %v1448, 16
      %v1479 = vrot.slane %v1477, 4
      %v1480 = vshll.u32 %v1448, 16
      %v1482 = vrot.slane %v1480, 5
      %v1483 = vor.u32 %v1479, %v1482
      %v1484 = vrot.slane %v1483, 4
      %v1486 = vshll.u32 %v1449, 16
      %v1488 = vrot.slane %v1486, 5
      %v1489 = vsel %vm525, %v1484, %v1488
      %v1491 = vshrl.u32 %v1450, 16
      %v1493 = vrot.slane %v1491, 4
      %v1494 = vshll.u32 %v1450, 16
      %v1496 = vrot.slane %v1494, 5
      %v1497 = vor.u32 %v1493, %v1496
      %v1498 = vrot.slane %v1497, 4
      %v1500 = vshll.u32 %v1451, 16
      %v1502 = vrot.slane %v1500, 5
      %v1503 = vsel %vm525, %v1498, %v1502
      %v1505 = vshrl.u32 %v1452, 16
      %v1507 = vrot.slane %v1505, 4
      %v1508 = vshll.u32 %v1452, 16
      %v1510 = vrot.slane %v1508, 5
      %v1511 = vor.u32 %v1507, %v1510
      %v1512 = vrot.slane %v1511, 4
      %v1514 = vshll.u32 %v1453, 16
      %v1516 = vrot.slane %v1514, 5
      %v1517 = vsel %vm525, %v1512, %v1516
      %v1519 = vshrl.u32 %v1454, 16
      %v1521 = vrot.slane %v1519, 4
      %v1522 = vshll.u32 %v1454, 16
      %v1524 = vrot.slane %v1522, 5
      %v1525 = vor.u32 %v1521, %v1524
      %v1526 = vrot.slane %v1525, 4
      %v1528 = vshll.u32 %v1455, 16
      %v1530 = vrot.slane %v1528, 5
      %v1531 = vsel %vm525, %v1526, %v1530
      %v1533 = vshrl.u32 %v1456, 16
      %v1535 = vrot.slane %v1533, 4
      %v1536 = vshll.u32 %v1456, 16
      %v1538 = vrot.slane %v1536, 5
      %v1539 = vor.u32 %v1535, %v1538
      %v1540 = vrot.slane %v1539, 4
      %v1542 = vshll.u32 %v1457, 16
      %v1544 = vrot.slane %v1542, 5
      %v1545 = vsel %vm525, %v1540, %v1544
      %v1547 = vshrl.u32 %v1458, 16
      %v1549 = vrot.slane %v1547, 4
      %v1550 = vshll.u32 %v1458, 16
      %v1552 = vrot.slane %v1550, 5
      %v1553 = vor.u32 %v1549, %v1552
      %v1554 = vrot.slane %v1553, 4
      %v1556 = vshll.u32 %v1459, 16
      %v1558 = vrot.slane %v1556, 5
      %v1559 = vsel %vm525, %v1554, %v1558
      %v1561 = vshrl.u32 %v1460, 16
      %v1563 = vrot.slane %v1561, 4
      %v1564 = vshll.u32 %v1460, 16
      %v1566 = vrot.slane %v1564, 5
      %v1567 = vor.u32 %v1563, %v1566
      %v1568 = vrot.slane %v1567, 4
      %v1570 = vshll.u32 %v1461, 16
      %v1572 = vrot.slane %v1570, 5
      %v1573 = vsel %vm525, %v1568, %v1572
      %s1574 = scalar_lea.vmem %s1, 16
      %v1575 = vld [vmem:[%s1574] sm:$0x3]
      %v1576 = vunpack.c.l.b16 %v1475
      %v1577 = vunpack.c.l.b16 %v1489
      %v1578 = vunpack.c.l.b16 %v1503
      %v1579 = vunpack.c.l.b16 %v1517
      %v1580 = vunpack.c.l.b16 %v1531
      %v1581 = vunpack.c.l.b16 %v1545
      %v1582 = vunpack.c.l.b16 %v1559
      %v1583 = vunpack.c.l.b16 %v1573
      %v1584 = vpack.c.b16 %v1577, %v1576
      %v1585 = vpack.c.b16 %v1579, %v1578
      %v1586 = vpack.c.b16 %v1581, %v1580
      %v1587 = vpack.c.b16 %v1583, %v1582
      %v1589 = vsel %vm325, %v1584, 0
      %v1592 = vsel %vm325, %v1585, 0
      %v1595 = vsel %vm325, %v1586, 0
      %v1598 = vsel %vm325, %v1587, 0
      %v1601 = vsel %vm338, %v1575, 0
      %1603 = vmatprep.subr.bf16.mxu0 0
      %1604 = vmatpush1.bf16.msra.mxu0 0
      %1605 = vmatprep.subr.bf16.mxu0 0
      %1606 = vmatpush1.bf16.msra.mxu0 0
      %1607 = vmatprep.subr.bf16.mxu0 0
      %1608 = vmatpush1.bf16.msra.mxu0 0
      %1609 = vmatprep.subr.bf16.mxu0 0
      %1610 = vmatpush1.bf16.msra.mxu0 0
      %1611 = vmatprep.subr.bf16.mxu0 0
      %1612 = vmatpush1.bf16.msra.mxu0 0
      %1613 = vmatprep.subr.bf16.mxu0 0
      %1614 = vmatpush1.bf16.msra.mxu0 0
      %1615 = vmatprep.subr.bf16.mxu0 0
      %1616 = vmatpush1.bf16.msra.mxu0 0
      %1617 = vmatprep.subr.bf16.mxu0 0
      %1618 = vmatpush1.bf16.msra.mxu0 %v1601
      %1619 = vmatprep.subr.bf16.mxu0 0
      %1620 = vmatpush2.bf16.msra.mxu0 0
      %1621 = vmatprep.subr.bf16.mxu0 0
      %1622 = vmatpush2.bf16.msra.mxu0 0
      %1623 = vmatprep.subr.bf16.mxu0 0
      %1624 = vmatpush2.bf16.msra.mxu0 0
      %1625 = vmatprep.subr.bf16.mxu0 0
      %1626 = vmatpush2.bf16.msra.mxu0 0
      %1627 = vmatprep.subr.bf16.mxu0 0
      %1628 = vmatpush2.bf16.msra.mxu0 0
      %1629 = vmatprep.subr.bf16.mxu0 0
      %1630 = vmatpush2.bf16.msra.mxu0 0
      %1631 = vmatprep.subr.bf16.mxu0 0
      %1632 = vmatpush2.bf16.msra.mxu0 0
      %1633 = vmatprep.subr.bf16.mxu0 0
      %1634 = vmatpush2.bf16.msra.mxu0 0
      %1635 = vmatprep.mubr.bf16.mxu0 0
      %1636 = vmatmul.mubr.bf16.gmra.mxu0 %v1589
      %v1637 = vpop.f32.mrf.mxu0
      %v1638 = vadd.f32 0.0, %v1637
      %v1639 = vpop.f32.mrf.mxu0
      %v1640 = vpop.f32.mrf.mxu0
      %v1641 = vadd.f32 0.0, %v1640
      %v1642 = vpop.f32.mrf.mxu0
      %1643 = vmatprep.mubr.bf16.mxu0 0
      %1644 = vmatmul.mubr.bf16.gmra.mxu0 %v1592
      %v1645 = vpop.f32.mrf.mxu0
      %v1646 = vadd.f32 0.0, %v1645
      %v1647 = vpop.f32.mrf.mxu0
      %v1648 = vpop.f32.mrf.mxu0
      %v1649 = vadd.f32 0.0, %v1648
      %v1650 = vpop.f32.mrf.mxu0
      %1651 = vmatprep.mubr.bf16.mxu0 0
      %1652 = vmatmul.mubr.bf16.gmra.mxu0 %v1595
      %v1653 = vpop.f32.mrf.mxu0
      %v1654 = vadd.f32 0.0, %v1653
      %v1655 = vpop.f32.mrf.mxu0
      %v1656 = vpop.f32.mrf.mxu0
      %v1657 = vadd.f32 0.0, %v1656
      %v1658 = vpop.f32.mrf.mxu0
      %1659 = vmatprep.mubr.bf16.mxu0 0
      %1660 = vmatmul.mubr.bf16.gmra.mxu0 %v1598
      %v1661 = vpop.f32.mrf.mxu0
      %v1662 = vadd.f32 0.0, %v1661
      %v1663 = vpop.f32.mrf.mxu0
      %v1664 = vpop.f32.mrf.mxu0
      %v1665 = vadd.f32 0.0, %v1664
      %v1666 = vpop.f32.mrf.mxu0
      %1667 = vdwg.mxu0
      %v1668 = vadd.f32 %v1438, %v1638
      %v1669 = vadd.f32 %v1439, %v1641
      %v1670 = vadd.f32 %v1440, %v1646
      %v1671 = vadd.f32 %v1441, %v1649
      %v1672 = vadd.f32 %v1442, %v1654
      %v1673 = vadd.f32 %v1443, %v1657
      %v1674 = vadd.f32 %v1444, %v1662
      %v1675 = vadd.f32 %v1445, %v1665
      %v1676 = vld [vmem:[%s2] sm:$0x1]
      %v1678 = vlaneseq
      %v1679 = vshrl.u32 %v1678, 7
      %v1680 = vsub.s32 0, %v1679
      %v1681 = vrot.slane %v1676, %v1680
      %v1683 = vadd.f32 %v1668, %v1681
      %v1684 = vadd.f32 %v1669, %v1681
      %v1685 = vadd.f32 %v1670, %v1681
      %v1686 = vadd.f32 %v1671, %v1681
      %v1687 = vadd.f32 %v1672, %v1681
      %v1688 = vadd.f32 %v1673, %v1681
      %v1689 = vadd.f32 %v1674, %v1681
      %v1690 = vadd.f32 %v1675, %v1681
      %v1691 = vmax.f32 %v1683, 0.0
      %v1692 = vmax.f32 %v1684, 0.0
      %v1693 = vmax.f32 %v1685, 0.0
      %v1694 = vmax.f32 %v1686, 0.0
      %v1695 = vmax.f32 %v1687, 0.0
      %v1696 = vmax.f32 %v1688, 0.0
      %v1697 = vmax.f32 %v1689, 0.0
      %v1698 = vmax.f32 %v1690, 0.0
      %vm1699 = vcmask 60416
      %1700 = vst.msk [vmem:[#allocation2] sm:$0xf] %vm1699, 0
      %vm1701 = vcmask 57344
      %1702 = vst.msk [vmem:[#allocation2 + $0x4] sm:$0x1] %vm1701, 0
      %1703 = vst.msk [vmem:[#allocation2 + $0x8] sm:$0xf] %vm1699, 0
      %1704 = vst.msk [vmem:[#allocation2 + $0xc] sm:$0x1] %vm1701, 0
      %1705 = vst.msk [vmem:[#allocation2 + $0x10] sm:$0xf] %vm1699, 0
      %1706 = vst.msk [vmem:[#allocation2 + $0x14] sm:$0x1] %vm1701, 0
      %1707 = vst.msk [vmem:[#allocation2 + $0x18] sm:$0xf] %vm1699, 0
      %1708 = vst.msk [vmem:[#allocation2 + $0x1c] sm:$0x1] %vm1701, 0
      %1709 = vst.msk [vmem:[#allocation2 + $0x20] sm:$0xf] %vm1699, 0
      %1710 = vst.msk [vmem:[#allocation2 + $0x24] sm:$0x1] %vm1701, 0
      %1711 = vst.msk [vmem:[#allocation2 + $0x28] sm:$0xf] %vm1699, 0
      %1712 = vst.msk [vmem:[#allocation2 + $0x2c] sm:$0x1] %vm1701, 0
      %1713 = vst.msk [vmem:[#allocation2 + $0x30] sm:$0xf] %vm1699, 0
      %1714 = vst.msk [vmem:[#allocation2 + $0x34] sm:$0x1] %vm1701, 0
      %1715 = vst.msk [vmem:[#allocation2 + $0x38] sm:$0xf] %vm1699, 0
      %1716 = vst.msk [vmem:[#allocation2 + $0x3c] sm:$0x1] %vm1701, 0
      %1717 = vst.msk [vmem:[#allocation2 + $0x40] sm:$0xf] %vm1699, 0
      %1718 = vst.msk [vmem:[#allocation2 + $0x44] sm:$0x1] %vm1701, 0
      %1719 = vst.msk [vmem:[#allocation2 + $0x48] sm:$0xf] %vm1699, 0
      %1720 = vst.msk [vmem:[#allocation2 + $0x4c] sm:$0x1] %vm1701, 0
      %v1721 = vpack.c.bf16 %v1691, %v1691
      %v1722 = vpack.c.bf16 %v1692, %v1692
      %v1723 = vpack.c.bf16 %v1693, %v1693
      %v1724 = vpack.c.bf16 %v1694, %v1694
      %v1725 = vpack.c.bf16 %v1695, %v1695
      %v1726 = vpack.c.bf16 %v1696, %v1696
      %v1727 = vpack.c.bf16 %v1697, %v1697
      %v1728 = vpack.c.bf16 %v1698, %v1698
      %v1737 = vunpack.c.l.b16 %v1721
      %v1738 = vunpack.c.l.b16 %v1722
      %v1739 = vunpack.c.l.b16 %v1723
      %v1740 = vunpack.c.l.b16 %v1724
      %v1741 = vunpack.c.l.b16 %v1725
      %v1742 = vunpack.c.l.b16 %v1726
      %v1743 = vunpack.c.l.b16 %v1727
      %v1744 = vunpack.c.l.b16 %v1728
      %v1745 = vpack.c.b16 %v1737, %v1737
      %v1746 = vpack.c.b16 %v1738, %v1738
      %v1747 = vpack.c.b16 %v1739, %v1739
      %v1748 = vpack.c.b16 %v1740, %v1740
      %v1749 = vpack.c.b16 %v1741, %v1741
      %v1750 = vpack.c.b16 %v1742, %v1742
      %v1751 = vpack.c.b16 %v1743, %v1743
      %v1752 = vpack.c.b16 %v1744, %v1744
      %v1754 = vshrl.u32 %v1745, 16
      %v1756 = vrot.slane %v1754, 7
      %v1757 = vshll.u32 %v1745, 16
      %v1759 = vor.u32 %v1756, %v1757
      %v1760 = vrot.slane %v1756, 4
      %v1762 = vshrl.u32 %v1746, 16
      %v1764 = vrot.slane %v1762, 7
      %v1765 = vshll.u32 %v1746, 16
      %v1767 = vor.u32 %v1764, %v1765
      %v1768 = vrot.slane %v1764, 4
      %v1770 = vshrl.u32 %v1747, 16
      %v1772 = vrot.slane %v1770, 7
      %v1773 = vshll.u32 %v1747, 16
      %v1775 = vor.u32 %v1772, %v1773
      %v1776 = vrot.slane %v1772, 4
      %v1778 = vshrl.u32 %v1748, 16
      %v1780 = vrot.slane %v1778, 7
      %v1781 = vshll.u32 %v1748, 16
      %v1783 = vor.u32 %v1780, %v1781
      %v1784 = vrot.slane %v1780, 4
      %v1786 = vshrl.u32 %v1749, 16
      %v1788 = vrot.slane %v1786, 7
      %v1789 = vshll.u32 %v1749, 16
      %v1791 = vor.u32 %v1788, %v1789
      %v1792 = vrot.slane %v1788, 4
      %v1794 = vshrl.u32 %v1750, 16
      %v1796 = vrot.slane %v1794, 7
      %v1797 = vshll.u32 %v1750, 16
      %v1799 = vor.u32 %v1796, %v1797
      %v1800 = vrot.slane %v1796, 4
      %v1802 = vshrl.u32 %v1751, 16
      %v1804 = vrot.slane %v1802, 7
      %v1805 = vshll.u32 %v1751, 16
      %v1807 = vor.u32 %v1804, %v1805
      %v1808 = vrot.slane %v1804, 4
      %v1810 = vshrl.u32 %v1752, 16
      %v1812 = vrot.slane %v1810, 7
      %v1813 = vshll.u32 %v1752, 16
      %v1815 = vor.u32 %v1812, %v1813
      %v1816 = vrot.slane %v1812, 4
      %s1833 = scalar_lea.vmem [#allocation2], 8
      %vm1834 = vcmask 60416
      %vm1835 = vsmask.f32 7938
      %vm1836 = vmand %vm1834, %vm1835
      %v1837 = vld [vmem:[%s1833] sm:$0xf]
      %v1838 = vsel %vm1836, %v1759, %v1837
      %1839 = vst [vmem:[%s1833] sm:$0xf] %v1838
      %vm1840 = vcmask 57344
      %vm1841 = vsmask.f32 256
      %vm1842 = vmand %vm1840, %vm1841
      %v1843 = vld [vmem:[%s1833 + $0x4] sm:$0x1]
      %v1844 = vsel %vm1842, %v1760, %v1843
      %1845 = vst [vmem:[%s1833 + $0x4] sm:$0x1] %v1844
      %v1846 = vld [vmem:[%s1833 + $0x8] sm:$0xf]
      %v1847 = vsel %vm1836, %v1767, %v1846
      %1848 = vst [vmem:[%s1833 + $0x8] sm:$0xf] %v1847
      %v1849 = vld [vmem:[%s1833 + $0xc] sm:$0x1]
      %v1850 = vsel %vm1842, %v1768, %v1849
      %1851 = vst [vmem:[%s1833 + $0xc] sm:$0x1] %v1850
      %v1852 = vld [vmem:[%s1833 + $0x10] sm:$0xf]
      %v1853 = vsel %vm1836, %v1775, %v1852
      %1854 = vst [vmem:[%s1833 + $0x10] sm:$0xf] %v1853
      %v1855 = vld [vmem:[%s1833 + $0x14] sm:$0x1]
      %v1856 = vsel %vm1842, %v1776, %v1855
      %1857 = vst [vmem:[%s1833 + $0x14] sm:$0x1] %v1856
      %v1858 = vld [vmem:[%s1833 + $0x18] sm:$0xf]
      %v1859 = vsel %vm1836, %v1783, %v1858
      %1860 = vst [vmem:[%s1833 + $0x18] sm:$0xf] %v1859
      %v1861 = vld [vmem:[%s1833 + $0x1c] sm:$0x1]
      %v1862 = vsel %vm1842, %v1784, %v1861
      %1863 = vst [vmem:[%s1833 + $0x1c] sm:$0x1] %v1862
      %v1864 = vld [vmem:[%s1833 + $0x20] sm:$0xf]
      %v1865 = vsel %vm1836, %v1791, %v1864
      %1866 = vst [vmem:[%s1833 + $0x20] sm:$0xf] %v1865
      %v1867 = vld [vmem:[%s1833 + $0x24] sm:$0x1]
      %v1868 = vsel %vm1842, %v1792, %v1867
      %1869 = vst [vmem:[%s1833 + $0x24] sm:$0x1] %v1868
      %v1870 = vld [vmem:[%s1833 + $0x28] sm:$0xf]
      %v1871 = vsel %vm1836, %v1799, %v1870
      %1872 = vst [vmem:[%s1833 + $0x28] sm:$0xf] %v1871
      %v1873 = vld [vmem:[%s1833 + $0x2c] sm:$0x1]
      %v1874 = vsel %vm1842, %v1800, %v1873
      %1875 = vst [vmem:[%s1833 + $0x2c] sm:$0x1] %v1874
      %v1876 = vld [vmem:[%s1833 + $0x30] sm:$0xf]
      %v1877 = vsel %vm1836, %v1807, %v1876
      %1878 = vst [vmem:[%s1833 + $0x30] sm:$0xf] %v1877
      %v1879 = vld [vmem:[%s1833 + $0x34] sm:$0x1]
      %v1880 = vsel %vm1842, %v1808, %v1879
      %1881 = vst [vmem:[%s1833 + $0x34] sm:$0x1] %v1880
      %v1882 = vld [vmem:[%s1833 + $0x38] sm:$0xf]
      %v1883 = vsel %vm1836, %v1815, %v1882
      %1884 = vst [vmem:[%s1833 + $0x38] sm:$0xf] %v1883
      %v1885 = vld [vmem:[%s1833 + $0x3c] sm:$0x1]
      %v1886 = vsel %vm1842, %v1816, %v1885
      %1887 = vst [vmem:[%s1833 + $0x3c] sm:$0x1] %v1886
      %v1888 = vld [vmem:[#allocation2] sm:$0xf]
      %v1889 = vld [vmem:[#allocation2 + $0x8] sm:$0xf]
      %v1890 = vld [vmem:[#allocation2 + $0x10] sm:$0xf]
      %v1891 = vld [vmem:[#allocation2 + $0x18] sm:$0xf]
      %v1892 = vld [vmem:[#allocation2 + $0x20] sm:$0xf]
      %v1893 = vld [vmem:[#allocation2 + $0x28] sm:$0xf]
      %v1894 = vld [vmem:[#allocation2 + $0x30] sm:$0xf]
      %v1895 = vld [vmem:[#allocation2 + $0x38] sm:$0xf]
      %v1896 = vld [vmem:[%s3] sm:$0xf]
      %v1897 = vld [vmem:[#allocation2 + $0x4] sm:$0x1]
      %v1898 = vld [vmem:[#allocation2 + $0xc] sm:$0x1]
      %v1899 = vld [vmem:[#allocation2 + $0x14] sm:$0x1]
      %v1900 = vld [vmem:[#allocation2 + $0x1c] sm:$0x1]
      %v1901 = vld [vmem:[#allocation2 + $0x24] sm:$0x1]
      %v1902 = vld [vmem:[#allocation2 + $0x2c] sm:$0x1]
      %v1903 = vld [vmem:[#allocation2 + $0x34] sm:$0x1]
      %v1904 = vld [vmem:[#allocation2 + $0x3c] sm:$0x1]
      %v1906 = vshrl.u32 %v1888, 16
      %v1908 = vrot.slane %v1906, 4
      %v1909 = vshll.u32 %v1888, 16
      %v1911 = vrot.slane %v1909, 5
      %v1912 = vor.u32 %v1908, %v1911
      %v1913 = vrot.slane %v1912, 4
      %v1915 = vshll.u32 %v1897, 16
      %v1917 = vrot.slane %v1915, 5
      %v1918 = vsel %vm525, %v1913, %v1917
      %v1920 = vshrl.u32 %v1889, 16
      %v1922 = vrot.slane %v1920, 4
      %v1923 = vshll.u32 %v1889, 16
      %v1925 = vrot.slane %v1923, 5
      %v1926 = vor.u32 %v1922, %v1925
      %v1927 = vrot.slane %v1926, 4
      %v1929 = vshll.u32 %v1898, 16
      %v1931 = vrot.slane %v1929, 5
      %v1932 = vsel %vm525, %v1927, %v1931
      %v1934 = vshrl.u32 %v1890, 16
      %v1936 = vrot.slane %v1934, 4
      %v1937 = vshll.u32 %v1890, 16
      %v1939 = vrot.slane %v1937, 5
      %v1940 = vor.u32 %v1936, %v1939
      %v1941 = vrot.slane %v1940, 4
      %v1943 = vshll.u32 %v1899, 16
      %v1945 = vrot.slane %v1943, 5
      %v1946 = vsel %vm525, %v1941, %v1945
      %v1948 = vshrl.u32 %v1891, 16
      %v1950 = vrot.slane %v1948, 4
      %v1951 = vshll.u32 %v1891, 16
      %v1953 = vrot.slane %v1951, 5
      %v1954 = vor.u32 %v1950, %v1953
      %v1955 = vrot.slane %v1954, 4
      %v1957 = vshll.u32 %v1900, 16
      %v1959 = vrot.slane %v1957, 5
      %v1960 = vsel %vm525, %v1955, %v1959
      %v1962 = vshrl.u32 %v1892, 16
      %v1964 = vrot.slane %v1962, 4
      %v1965 = vshll.u32 %v1892, 16
      %v1967 = vrot.slane %v1965, 5
      %v1968 = vor.u32 %v1964, %v1967
      %v1969 = vrot.slane %v1968, 4
      %v1971 = vshll.u32 %v1901, 16
      %v1973 = vrot.slane %v1971, 5
      %v1974 = vsel %vm525, %v1969, %v1973
      %v1976 = vshrl.u32 %v1893, 16
      %v1978 = vrot.slane %v1976, 4
      %v1979 = vshll.u32 %v1893, 16
      %v1981 = vrot.slane %v1979, 5
      %v1982 = vor.u32 %v1978, %v1981
      %v1983 = vrot.slane %v1982, 4
      %v1985 = vshll.u32 %v1902, 16
      %v1987 = vrot.slane %v1985, 5
      %v1988 = vsel %vm525, %v1983, %v1987
      %v1990 = vshrl.u32 %v1894, 16
      %v1992 = vrot.slane %v1990, 4
      %v1993 = vshll.u32 %v1894, 16
      %v1995 = vrot.slane %v1993, 5
      %v1996 = vor.u32 %v1992, %v1995
      %v1997 = vrot.slane %v1996, 4
      %v1999 = vshll.u32 %v1903, 16
      %v2001 = vrot.slane %v1999, 5
      %v2002 = vsel %vm525, %v1997, %v2001
      %v2004 = vshrl.u32 %v1895, 16
      %v2006 = vrot.slane %v2004, 4
      %v2007 = vshll.u32 %v1895, 16
      %v2009 = vrot.slane %v2007, 5
      %v2010 = vor.u32 %v2006, %v2009
      %v2011 = vrot.slane %v2010, 4
      %v2013 = vshll.u32 %v1904, 16
      %v2015 = vrot.slane %v2013, 5
      %v2016 = vsel %vm525, %v2011, %v2015
      %s2017 = scalar_lea.vmem %s3, 4
      %v2018 = vld [vmem:[%s2017] sm:$0xf]
      %v2019 = vunpack.c.l.b16 %v1918
      %v2020 = vunpack.c.l.b16 %v1932
      %v2021 = vunpack.c.l.b16 %v1946
      %v2022 = vunpack.c.l.b16 %v1960
      %v2023 = vunpack.c.l.b16 %v1974
      %v2024 = vunpack.c.l.b16 %v1988
      %v2025 = vunpack.c.l.b16 %v2002
      %v2026 = vunpack.c.l.b16 %v2016
      %v2027 = vpack.c.b16 %v2020, %v2019
      %v2028 = vpack.c.b16 %v2022, %v2021
      %v2029 = vpack.c.b16 %v2024, %v2023
      %v2030 = vpack.c.b16 %v2026, %v2025
      %vm2031 = vcmask 64512
      %v2033 = vsel %vm2031, %v2027, 0
      %v2036 = vsel %vm2031, %v2028, 0
      %v2039 = vsel %vm2031, %v2029, 0
      %v2042 = vsel %vm2031, %v2030, 0
      %vm2044 = vcmask 1043456
      %v2046 = vsel %vm2044, %v2018, 0
      %2048 = vmatprep.subr.bf16.mxu0 0
      %2049 = vmatpush1.bf16.msra.mxu0 0
      %2050 = vmatprep.subr.bf16.mxu0 0
      %2051 = vmatpush1.bf16.msra.mxu0 0
      %2052 = vmatprep.subr.bf16.mxu0 0
      %2053 = vmatpush1.bf16.msra.mxu0 0
      %2054 = vmatprep.subr.bf16.mxu0 0
      %2055 = vmatpush1.bf16.msra.mxu0 0
      %2056 = vmatprep.subr.bf16.mxu0 0
      %2057 = vmatpush1.bf16.msra.mxu0 0
      %2058 = vmatprep.subr.bf16.mxu0 0
      %2059 = vmatpush1.bf16.msra.mxu0 0
      %2060 = vmatprep.subr.bf16.mxu0 0
      %2061 = vmatpush1.bf16.msra.mxu0 0
      %2062 = vmatprep.subr.bf16.mxu0 0
      %2063 = vmatpush1.bf16.msra.mxu0 %v2046
      %2064 = vmatprep.subr.bf16.mxu0 0
      %2065 = vmatpush2.bf16.msra.mxu0 0
      %2066 = vmatprep.subr.bf16.mxu0 0
      %2067 = vmatpush2.bf16.msra.mxu0 0
      %2068 = vmatprep.subr.bf16.mxu0 0
      %2069 = vmatpush2.bf16.msra.mxu0 0
      %2070 = vmatprep.subr.bf16.mxu0 0
      %2071 = vmatpush2.bf16.msra.mxu0 0
      %2072 = vmatprep.subr.bf16.mxu0 0
      %2073 = vmatpush2.bf16.msra.mxu0 0
      %2074 = vmatprep.subr.bf16.mxu0 0
      %2075 = vmatpush2.bf16.msra.mxu0 0
      %2076 = vmatprep.subr.bf16.mxu0 0
      %2077 = vmatpush2.bf16.msra.mxu0 0
      %2078 = vmatprep.subr.bf16.mxu0 0
      %2079 = vmatpush2.bf16.msra.mxu0 0
      %2080 = vmatprep.mubr.bf16.mxu0 0
      %2081 = vmatmul.mubr.bf16.gmra.mxu0 %v2033
      %v2082 = vpop.f32.mrf.mxu0
      %v2083 = vadd.f32 0.0, %v2082
      %v2084 = vpop.f32.mrf.mxu0
      %v2085 = vpop.f32.mrf.mxu0
      %v2086 = vadd.f32 0.0, %v2085
      %v2087 = vpop.f32.mrf.mxu0
      %2088 = vmatprep.mubr.bf16.mxu0 0
      %2089 = vmatmul.mubr.bf16.gmra.mxu0 %v2036
      %v2090 = vpop.f32.mrf.mxu0
      %v2091 = vadd.f32 0.0, %v2090
      %v2092 = vpop.f32.mrf.mxu0
      %v2093 = vpop.f32.mrf.mxu0
      %v2094 = vadd.f32 0.0, %v2093
      %v2095 = vpop.f32.mrf.mxu0
      %2096 = vmatprep.mubr.bf16.mxu0 0
      %2097 = vmatmul.mubr.bf16.gmra.mxu0 %v2039
      %v2098 = vpop.f32.mrf.mxu0
      %v2099 = vadd.f32 0.0, %v2098
      %v2100 = vpop.f32.mrf.mxu0
      %v2101 = vpop.f32.mrf.mxu0
      %v2102 = vadd.f32 0.0, %v2101
      %v2103 = vpop.f32.mrf.mxu0
      %2104 = vmatprep.mubr.bf16.mxu0 0
      %2105 = vmatmul.mubr.bf16.gmra.mxu0 %v2042
      %v2106 = vpop.f32.mrf.mxu0
      %v2107 = vadd.f32 0.0, %v2106
      %v2108 = vpop.f32.mrf.mxu0
      %v2109 = vpop.f32.mrf.mxu0
      %v2110 = vadd.f32 0.0, %v2109
      %v2111 = vpop.f32.mrf.mxu0
      %2112 = vdwg.mxu0
      %v2121 = vunpack.c.l.b16 %v1888
      %v2122 = vunpack.c.l.b16 %v1889
      %v2123 = vunpack.c.l.b16 %v1890
      %v2124 = vunpack.c.l.b16 %v1891
      %v2125 = vunpack.c.l.b16 %v1892
      %v2126 = vunpack.c.l.b16 %v1893
      %v2127 = vunpack.c.l.b16 %v1894
      %v2128 = vunpack.c.l.b16 %v1895
      %v2129 = vpack.c.b16 %v2122, %v2121
      %v2130 = vpack.c.b16 %v2124, %v2123
      %v2131 = vpack.c.b16 %v2126, %v2125
      %v2132 = vpack.c.b16 %v2128, %v2127
      %v2134 = vsel %vm2031, %v2129, 0
      %v2137 = vsel %vm2031, %v2130, 0
      %v2140 = vsel %vm2031, %v2131, 0
      %v2143 = vsel %vm2031, %v2132, 0
      %v2146 = vsel %vm2044, %v1896, 0
      %2148 = vmatprep.subr.bf16.mxu0 0
      %2149 = vmatpush1.bf16.msra.mxu0 0
      %2150 = vmatprep.subr.bf16.mxu0 0
      %2151 = vmatpush1.bf16.msra.mxu0 0
      %2152 = vmatprep.subr.bf16.mxu0 0
      %2153 = vmatpush1.bf16.msra.mxu0 0
      %2154 = vmatprep.subr.bf16.mxu0 0
      %2155 = vmatpush1.bf16.msra.mxu0 0
      %2156 = vmatprep.subr.bf16.mxu0 0
      %2157 = vmatpush1.bf16.msra.mxu0 0
      %2158 = vmatprep.subr.bf16.mxu0 0
      %2159 = vmatpush1.bf16.msra.mxu0 0
      %2160 = vmatprep.subr.bf16.mxu0 0
      %2161 = vmatpush1.bf16.msra.mxu0 0
      %2162 = vmatprep.subr.bf16.mxu0 0
      %2163 = vmatpush1.bf16.msra.mxu0 %v2146
      %2164 = vmatprep.subr.bf16.mxu0 0
      %2165 = vmatpush2.bf16.msra.mxu0 0
      %2166 = vmatprep.subr.bf16.mxu0 0
      %2167 = vmatpush2.bf16.msra.mxu0 0
      %2168 = vmatprep.subr.bf16.mxu0 0
      %2169 = vmatpush2.bf16.msra.mxu0 0
      %2170 = vmatprep.subr.bf16.mxu0 0
      %2171 = vmatpush2.bf16.msra.mxu0 0
      %2172 = vmatprep.subr.bf16.mxu0 0
      %2173 = vmatpush2.bf16.msra.mxu0 0
      %2174 = vmatprep.subr.bf16.mxu0 0
      %2175 = vmatpush2.bf16.msra.mxu0 0
      %2176 = vmatprep.subr.bf16.mxu0 0
      %2177 = vmatpush2.bf16.msra.mxu0 0
      %2178 = vmatprep.subr.bf16.mxu0 0
      %2179 = vmatpush2.bf16.msra.mxu0 0
      %2180 = vmatprep.mubr.bf16.mxu0 0
      %2181 = vmatmul.mubr.bf16.gmra.mxu0 %v2134
      %v2182 = vpop.f32.mrf.mxu0
      %v2183 = vadd.f32 %v2083, %v2182
      %v2184 = vpop.f32.mrf.mxu0
      %v2185 = vpop.f32.mrf.mxu0
      %v2186 = vadd.f32 %v2086, %v2185
      %v2187 = vpop.f32.mrf.mxu0
      %2188 = vmatprep.mubr.bf16.mxu0 0
      %2189 = vmatmul.mubr.bf16.gmra.mxu0 %v2137
      %v2190 = vpop.f32.mrf.mxu0
      %v2191 = vadd.f32 %v2091, %v2190
      %v2192 = vpop.f32.mrf.mxu0
      %v2193 = vpop.f32.mrf.mxu0
      %v2194 = vadd.f32 %v2094, %v2193
      %v2195 = vpop.f32.mrf.mxu0
      %2196 = vmatprep.mubr.bf16.mxu0 0
      %2197 = vmatmul.mubr.bf16.gmra.mxu0 %v2140
      %v2198 = vpop.f32.mrf.mxu0
      %v2199 = vadd.f32 %v2099, %v2198
      %v2200 = vpop.f32.mrf.mxu0
      %v2201 = vpop.f32.mrf.mxu0
      %v2202 = vadd.f32 %v2102, %v2201
      %v2203 = vpop.f32.mrf.mxu0
      %2204 = vmatprep.mubr.bf16.mxu0 0
      %2205 = vmatmul.mubr.bf16.gmra.mxu0 %v2143
      %v2206 = vpop.f32.mrf.mxu0
      %v2207 = vadd.f32 %v2107, %v2206
      %v2208 = vpop.f32.mrf.mxu0
      %v2209 = vpop.f32.mrf.mxu0
      %v2210 = vadd.f32 %v2110, %v2209
      %v2211 = vpop.f32.mrf.mxu0
      %2212 = vdwg.mxu0
      %v2213 = vld [vmem:[#allocation2] sm:$0xe]
      %v2214 = vld [vmem:[#allocation2 + $0x8] sm:$0xe]
      %v2215 = vld [vmem:[#allocation2 + $0x10] sm:$0xe]
      %v2216 = vld [vmem:[#allocation2 + $0x18] sm:$0xe]
      %v2217 = vld [vmem:[#allocation2 + $0x20] sm:$0xe]
      %v2218 = vld [vmem:[#allocation2 + $0x28] sm:$0xe]
      %v2219 = vld [vmem:[#allocation2 + $0x30] sm:$0xe]
      %v2220 = vld [vmem:[#allocation2 + $0x38] sm:$0xe]
      %vm2237 = vcmask 1042432
      %vm2238 = vcmask 1046532
      %vm2239 = vmor %vm2237, %vm2238
      %v2240 = vrot.slane %v2213, 5
      %v2241 = vrot.slane %v2240, 4
      %v2242 = vrot.slane %v1897, 5
      %v2243 = vsel %vm2239, %v2241, %v2242
      %v2244 = vrot.slane %v2214, 5
      %v2245 = vrot.slane %v2244, 4
      %v2246 = vrot.slane %v1898, 5
      %v2247 = vsel %vm2239, %v2245, %v2246
      %v2248 = vrot.slane %v2215, 5
      %v2249 = vrot.slane %v2248, 4
      %v2250 = vrot.slane %v1899, 5
      %v2251 = vsel %vm2239, %v2249, %v2250
      %v2252 = vrot.slane %v2216, 5
      %v2253 = vrot.slane %v2252, 4
      %v2254 = vrot.slane %v1900, 5
      %v2255 = vsel %vm2239, %v2253, %v2254
      %v2256 = vrot.slane %v2217, 5
      %v2257 = vrot.slane %v2256, 4
      %v2258 = vrot.slane %v1901, 5
      %v2259 = vsel %vm2239, %v2257, %v2258
      %v2260 = vrot.slane %v2218, 5
      %v2261 = vrot.slane %v2260, 4
      %v2262 = vrot.slane %v1902, 5
      %v2263 = vsel %vm2239, %v2261, %v2262
      %v2264 = vrot.slane %v2219, 5
      %v2265 = vrot.slane %v2264, 4
      %v2266 = vrot.slane %v1903, 5
      %v2267 = vsel %vm2239, %v2265, %v2266
      %v2268 = vrot.slane %v2220, 5
      %v2269 = vrot.slane %v2268, 4
      %v2270 = vrot.slane %v1904, 5
      %v2271 = vsel %vm2239, %v2269, %v2270
      %s2272 = scalar_lea.vmem %s3, 8
      %v2273 = vld [vmem:[%s2272] sm:$0xf]
      %v2274 = vunpack.c.l.b16 %v2243
      %v2275 = vunpack.c.l.b16 %v2247
      %v2276 = vunpack.c.l.b16 %v2251
      %v2277 = vunpack.c.l.b16 %v2255
      %v2278 = vunpack.c.l.b16 %v2259
      %v2279 = vunpack.c.l.b16 %v2263
      %v2280 = vunpack.c.l.b16 %v2267
      %v2281 = vunpack.c.l.b16 %v2271
      %v2282 = vpack.c.b16 %v2275, %v2274
      %v2283 = vpack.c.b16 %v2277, %v2276
      %v2284 = vpack.c.b16 %v2279, %v2278
      %v2285 = vpack.c.b16 %v2281, %v2280
      %v2287 = vsel %vm2031, %v2282, 0
      %v2290 = vsel %vm2031, %v2283, 0
      %v2293 = vsel %vm2031, %v2284, 0
      %v2296 = vsel %vm2031, %v2285, 0
      %v2299 = vsel %vm2044, %v2273, 0
      %2301 = vmatprep.subr.bf16.mxu0 0
      %2302 = vmatpush1.bf16.msra.mxu0 0
      %2303 = vmatprep.subr.bf16.mxu0 0
      %2304 = vmatpush1.bf16.msra.mxu0 0
      %2305 = vmatprep.subr.bf16.mxu0 0
      %2306 = vmatpush1.bf16.msra.mxu0 0
      %2307 = vmatprep.subr.bf16.mxu0 0
      %2308 = vmatpush1.bf16.msra.mxu0 0
      %2309 = vmatprep.subr.bf16.mxu0 0
      %2310 = vmatpush1.bf16.msra.mxu0 0
      %2311 = vmatprep.subr.bf16.mxu0 0
      %2312 = vmatpush1.bf16.msra.mxu0 0
      %2313 = vmatprep.subr.bf16.mxu0 0
      %2314 = vmatpush1.bf16.msra.mxu0 0
      %2315 = vmatprep.subr.bf16.mxu0 0
      %2316 = vmatpush1.bf16.msra.mxu0 %v2299
      %2317 = vmatprep.subr.bf16.mxu0 0
      %2318 = vmatpush2.bf16.msra.mxu0 0
      %2319 = vmatprep.subr.bf16.mxu0 0
      %2320 = vmatpush2.bf16.msra.mxu0 0
      %2321 = vmatprep.subr.bf16.mxu0 0
      %2322 = vmatpush2.bf16.msra.mxu0 0
      %2323 = vmatprep.subr.bf16.mxu0 0
      %2324 = vmatpush2.bf16.msra.mxu0 0
      %2325 = vmatprep.subr.bf16.mxu0 0
      %2326 = vmatpush2.bf16.msra.mxu0 0
      %2327 = vmatprep.subr.bf16.mxu0 0
      %2328 = vmatpush2.bf16.msra.mxu0 0
      %2329 = vmatprep.subr.bf16.mxu0 0
      %2330 = vmatpush2.bf16.msra.mxu0 0
      %2331 = vmatprep.subr.bf16.mxu0 0
      %2332 = vmatpush2.bf16.msra.mxu0 0
      %2333 = vmatprep.mubr.bf16.mxu0 0
      %2334 = vmatmul.mubr.bf16.gmra.mxu0 %v2287
      %v2335 = vpop.f32.mrf.mxu0
      %v2336 = vadd.f32 0.0, %v2335
      %v2337 = vpop.f32.mrf.mxu0
      %v2338 = vpop.f32.mrf.mxu0
      %v2339 = vadd.f32 0.0, %v2338
      %v2340 = vpop.f32.mrf.mxu0
      %2341 = vmatprep.mubr.bf16.mxu0 0
      %2342 = vmatmul.mubr.bf16.gmra.mxu0 %v2290
      %v2343 = vpop.f32.mrf.mxu0
      %v2344 = vadd.f32 0.0, %v2343
      %v2345 = vpop.f32.mrf.mxu0
      %v2346 = vpop.f32.mrf.mxu0
      %v2347 = vadd.f32 0.0, %v2346
      %v2348 = vpop.f32.mrf.mxu0
      %2349 = vmatprep.mubr.bf16.mxu0 0
      %2350 = vmatmul.mubr.bf16.gmra.mxu0 %v2293
      %v2351 = vpop.f32.mrf.mxu0
      %v2352 = vadd.f32 0.0, %v2351
      %v2353 = vpop.f32.mrf.mxu0
      %v2354 = vpop.f32.mrf.mxu0
      %v2355 = vadd.f32 0.0, %v2354
      %v2356 = vpop.f32.mrf.mxu0
      %2357 = vmatprep.mubr.bf16.mxu0 0
      %2358 = vmatmul.mubr.bf16.gmra.mxu0 %v2296
      %v2359 = vpop.f32.mrf.mxu0
      %v2360 = vadd.f32 0.0, %v2359
      %v2361 = vpop.f32.mrf.mxu0
      %v2362 = vpop.f32.mrf.mxu0
      %v2363 = vadd.f32 0.0, %v2362
      %v2364 = vpop.f32.mrf.mxu0
      %2365 = vdwg.mxu0
      %v2366 = vadd.f32 %v2183, %v2336
      %v2367 = vadd.f32 %v2186, %v2339
      %v2368 = vadd.f32 %v2191, %v2344
      %v2369 = vadd.f32 %v2194, %v2347
      %v2370 = vadd.f32 %v2199, %v2352
      %v2371 = vadd.f32 %v2202, %v2355
      %v2372 = vadd.f32 %v2207, %v2360
      %v2373 = vadd.f32 %v2210, %v2363
      %v2374 = vld [vmem:[%s1833] sm:$0xf]
      %v2375 = vld [vmem:[%s1833 + $0x8] sm:$0xf]
      %v2376 = vld [vmem:[%s1833 + $0x10] sm:$0xf]
      %v2377 = vld [vmem:[%s1833 + $0x18] sm:$0xf]
      %v2378 = vld [vmem:[%s1833 + $0x20] sm:$0xf]
      %v2379 = vld [vmem:[%s1833 + $0x28] sm:$0xf]
      %v2380 = vld [vmem:[%s1833 + $0x30] sm:$0xf]
      %v2381 = vld [vmem:[%s1833 + $0x38] sm:$0xf]
      %s2382 = scalar_lea.vmem %s3, 12
      %v2383 = vld [vmem:[%s2382] sm:$0xf]
      %v2392 = vunpack.c.l.b16 %v2374
      %v2393 = vunpack.c.l.b16 %v2375
      %v2394 = vunpack.c.l.b16 %v2376
      %v2395 = vunpack.c.l.b16 %v2377
      %v2396 = vunpack.c.l.b16 %v2378
      %v2397 = vunpack.c.l.b16 %v2379
      %v2398 = vunpack.c.l.b16 %v2380
      %v2399 = vunpack.c.l.b16 %v2381
      %v2400 = vpack.c.b16 %v2393, %v2392
      %v2401 = vpack.c.b16 %v2395, %v2394
      %v2402 = vpack.c.b16 %v2397, %v2396
      %v2403 = vpack.c.b16 %v2399, %v2398
      %v2405 = vsel %vm2031, %v2400, 0
      %v2408 = vsel %vm2031, %v2401, 0
      %v2411 = vsel %vm2031, %v2402, 0
      %v2414 = vsel %vm2031, %v2403, 0
      %v2417 = vsel %vm2044, %v2383, 0
      %2419 = vmatprep.subr.bf16.mxu0 0
      %2420 = vmatpush1.bf16.msra.mxu0 0
      %2421 = vmatprep.subr.bf16.mxu0 0
      %2422 = vmatpush1.bf16.msra.mxu0 0
      %2423 = vmatprep.subr.bf16.mxu0 0
      %2424 = vmatpush1.bf16.msra.mxu0 0
      %2425 = vmatprep.subr.bf16.mxu0 0
      %2426 = vmatpush1.bf16.msra.mxu0 0
      %2427 = vmatprep.subr.bf16.mxu0 0
      %2428 = vmatpush1.bf16.msra.mxu0 0
      %2429 = vmatprep.subr.bf16.mxu0 0
      %2430 = vmatpush1.bf16.msra.mxu0 0
      %2431 = vmatprep.subr.bf16.mxu0 0
      %2432 = vmatpush1.bf16.msra.mxu0 0
      %2433 = vmatprep.subr.bf16.mxu0 0
      %2434 = vmatpush1.bf16.msra.mxu0 %v2417
      %2435 = vmatprep.subr.bf16.mxu0 0
      %2436 = vmatpush2.bf16.msra.mxu0 0
      %2437 = vmatprep.subr.bf16.mxu0 0
      %2438 = vmatpush2.bf16.msra.mxu0 0
      %2439 = vmatprep.subr.bf16.mxu0 0
      %2440 = vmatpush2.bf16.msra.mxu0 0
      %2441 = vmatprep.subr.bf16.mxu0 0
      %2442 = vmatpush2.bf16.msra.mxu0 0
      %2443 = vmatprep.subr.bf16.mxu0 0
      %2444 = vmatpush2.bf16.msra.mxu0 0
      %2445 = vmatprep.subr.bf16.mxu0 0
      %2446 = vmatpush2.bf16.msra.mxu0 0
      %2447 = vmatprep.subr.bf16.mxu0 0
      %2448 = vmatpush2.bf16.msra.mxu0 0
      %2449 = vmatprep.subr.bf16.mxu0 0
      %2450 = vmatpush2.bf16.msra.mxu0 0
      %2451 = vmatprep.mubr.bf16.mxu0 0
      %2452 = vmatmul.mubr.bf16.gmra.mxu0 %v2405
      %v2453 = vpop.f32.mrf.mxu0
      %v2454 = vadd.f32 0.0, %v2453
      %v2455 = vpop.f32.mrf.mxu0
      %v2456 = vpop.f32.mrf.mxu0
      %v2457 = vadd.f32 0.0, %v2456
      %v2458 = vpop.f32.mrf.mxu0
      %2459 = vmatprep.mubr.bf16.mxu0 0
      %2460 = vmatmul.mubr.bf16.gmra.mxu0 %v2408
      %v2461 = vpop.f32.mrf.mxu0
      %v2462 = vadd.f32 0.0, %v2461
      %v2463 = vpop.f32.mrf.mxu0
      %v2464 = vpop.f32.mrf.mxu0
      %v2465 = vadd.f32 0.0, %v2464
      %v2466 = vpop.f32.mrf.mxu0
      %2467 = vmatprep.mubr.bf16.mxu0 0
      %2468 = vmatmul.mubr.bf16.gmra.mxu0 %v2411
      %v2469 = vpop.f32.mrf.mxu0
      %v2470 = vadd.f32 0.0, %v2469
      %v2471 = vpop.f32.mrf.mxu0
      %v2472 = vpop.f32.mrf.mxu0
      %v2473 = vadd.f32 0.0, %v2472
      %v2474 = vpop.f32.mrf.mxu0
      %2475 = vmatprep.mubr.bf16.mxu0 0
      %2476 = vmatmul.mubr.bf16.gmra.mxu0 %v2414
      %v2477 = vpop.f32.mrf.mxu0
      %v2478 = vadd.f32 0.0, %v2477
      %v2479 = vpop.f32.mrf.mxu0
      %v2480 = vpop.f32.mrf.mxu0
      %v2481 = vadd.f32 0.0, %v2480
      %v2482 = vpop.f32.mrf.mxu0
      %2483 = vdwg.mxu0
      %v2484 = vadd.f32 %v2366, %v2454
      %v2485 = vadd.f32 %v2367, %v2457
      %v2486 = vadd.f32 %v2368, %v2462
      %v2487 = vadd.f32 %v2369, %v2465
      %v2488 = vadd.f32 %v2370, %v2470
      %v2489 = vadd.f32 %v2371, %v2473
      %v2490 = vadd.f32 %v2372, %v2478
      %v2491 = vadd.f32 %v2373, %v2481
      %v2492 = vld [vmem:[%s1833] sm:$0xf]
      %v2493 = vld [vmem:[%s1833 + $0x4] sm:$0x1]
      %v2494 = vld [vmem:[%s1833 + $0x8] sm:$0xf]
      %v2495 = vld [vmem:[%s1833 + $0xc] sm:$0x1]
      %v2496 = vld [vmem:[%s1833 + $0x10] sm:$0xf]
      %v2497 = vld [vmem:[%s1833 + $0x14] sm:$0x1]
      %v2498 = vld [vmem:[%s1833 + $0x18] sm:$0xf]
      %v2499 = vld [vmem:[%s1833 + $0x1c] sm:$0x1]
      %v2500 = vld [vmem:[%s1833 + $0x20] sm:$0xf]
      %v2501 = vld [vmem:[%s1833 + $0x24] sm:$0x1]
      %v2502 = vld [vmem:[%s1833 + $0x28] sm:$0xf]
      %v2503 = vld [vmem:[%s1833 + $0x2c] sm:$0x1]
      %v2504 = vld [vmem:[%s1833 + $0x30] sm:$0xf]
      %v2505 = vld [vmem:[%s1833 + $0x34] sm:$0x1]
      %v2506 = vld [vmem:[%s1833 + $0x38] sm:$0xf]
      %v2507 = vld [vmem:[%s1833 + $0x3c] sm:$0x1]
      %v2509 = vshrl.u32 %v2492, 16
      %v2511 = vrot.slane %v2509, 4
      %v2512 = vshll.u32 %v2492, 16
      %v2514 = vrot.slane %v2512, 5
      %v2515 = vor.u32 %v2511, %v2514
      %v2516 = vrot.slane %v2515, 4
      %v2518 = vshll.u32 %v2493, 16
      %v2520 = vrot.slane %v2518, 5
      %v2521 = vsel %vm525, %v2516, %v2520
      %v2523 = vshrl.u32 %v2494, 16
      %v2525 = vrot.slane %v2523, 4
      %v2526 = vshll.u32 %v2494, 16
      %v2528 = vrot.slane %v2526, 5
      %v2529 = vor.u32 %v2525, %v2528
      %v2530 = vrot.slane %v2529, 4
      %v2532 = vshll.u32 %v2495, 16
      %v2534 = vrot.slane %v2532, 5
      %v2535 = vsel %vm525, %v2530, %v2534
      %v2537 = vshrl.u32 %v2496, 16
      %v2539 = vrot.slane %v2537, 4
      %v2540 = vshll.u32 %v2496, 16
      %v2542 = vrot.slane %v2540, 5
      %v2543 = vor.u32 %v2539, %v2542
      %v2544 = vrot.slane %v2543, 4
      %v2546 = vshll.u32 %v2497, 16
      %v2548 = vrot.slane %v2546, 5
      %v2549 = vsel %vm525, %v2544, %v2548
      %v2551 = vshrl.u32 %v2498, 16
      %v2553 = vrot.slane %v2551, 4
      %v2554 = vshll.u32 %v2498, 16
      %v2556 = vrot.slane %v2554, 5
      %v2557 = vor.u32 %v2553, %v2556
      %v2558 = vrot.slane %v2557, 4
      %v2560 = vshll.u32 %v2499, 16
      %v2562 = vrot.slane %v2560, 5
      %v2563 = vsel %vm525, %v2558, %v2562
      %v2565 = vshrl.u32 %v2500, 16
      %v2567 = vrot.slane %v2565, 4
      %v2568 = vshll.u32 %v2500, 16
      %v2570 = vrot.slane %v2568, 5
      %v2571 = vor.u32 %v2567, %v2570
      %v2572 = vrot.slane %v2571, 4
      %v2574 = vshll.u32 %v2501, 16
      %v2576 = vrot.slane %v2574, 5
      %v2577 = vsel %vm525, %v2572, %v2576
      %v2579 = vshrl.u32 %v2502, 16
      %v2581 = vrot.slane %v2579, 4
      %v2582 = vshll.u32 %v2502, 16
      %v2584 = vrot.slane %v2582, 5
      %v2585 = vor.u32 %v2581, %v2584
      %v2586 = vrot.slane %v2585, 4
      %v2588 = vshll.u32 %v2503, 16
      %v2590 = vrot.slane %v2588, 5
      %v2591 = vsel %vm525, %v2586, %v2590
      %v2593 = vshrl.u32 %v2504, 16
      %v2595 = vrot.slane %v2593, 4
      %v2596 = vshll.u32 %v2504, 16
      %v2598 = vrot.slane %v2596, 5
      %v2599 = vor.u32 %v2595, %v2598
      %v2600 = vrot.slane %v2599, 4
      %v2602 = vshll.u32 %v2505, 16
      %v2604 = vrot.slane %v2602, 5
      %v2605 = vsel %vm525, %v2600, %v2604
      %v2607 = vshrl.u32 %v2506, 16
      %v2609 = vrot.slane %v2607, 4
      %v2610 = vshll.u32 %v2506, 16
      %v2612 = vrot.slane %v2610, 5
      %v2613 = vor.u32 %v2609, %v2612
      %v2614 = vrot.slane %v2613, 4
      %v2616 = vshll.u32 %v2507, 16
      %v2618 = vrot.slane %v2616, 5
      %v2619 = vsel %vm525, %v2614, %v2618
      %s2620 = scalar_lea.vmem %s3, 16
      %v2621 = vld [vmem:[%s2620] sm:$0xf]
      %v2622 = vunpack.c.l.b16 %v2521
      %v2623 = vunpack.c.l.b16 %v2535
      %v2624 = vunpack.c.l.b16 %v2549
      %v2625 = vunpack.c.l.b16 %v2563
      %v2626 = vunpack.c.l.b16 %v2577
      %v2627 = vunpack.c.l.b16 %v2591
      %v2628 = vunpack.c.l.b16 %v2605
      %v2629 = vunpack.c.l.b16 %v2619
      %v2630 = vpack.c.b16 %v2623, %v2622
      %v2631 = vpack.c.b16 %v2625, %v2624
      %v2632 = vpack.c.b16 %v2627, %v2626
      %v2633 = vpack.c.b16 %v2629, %v2628
      %v2635 = vsel %vm2031, %v2630, 0
      %v2638 = vsel %vm2031, %v2631, 0
      %v2641 = vsel %vm2031, %v2632, 0
      %v2644 = vsel %vm2031, %v2633, 0
      %v2647 = vsel %vm2044, %v2621, 0
      %2649 = vmatprep.subr.bf16.mxu0 0
      %2650 = vmatpush1.bf16.msra.mxu0 0
      %2651 = vmatprep.subr.bf16.mxu0 0
      %2652 = vmatpush1.bf16.msra.mxu0 0
      %2653 = vmatprep.subr.bf16.mxu0 0
      %2654 = vmatpush1.bf16.msra.mxu0 0
      %2655 = vmatprep.subr.bf16.mxu0 0
      %2656 = vmatpush1.bf16.msra.mxu0 0
      %2657 = vmatprep.subr.bf16.mxu0 0
      %2658 = vmatpush1.bf16.msra.mxu0 0
      %2659 = vmatprep.subr.bf16.mxu0 0
      %2660 = vmatpush1.bf16.msra.mxu0 0
      %2661 = vmatprep.subr.bf16.mxu0 0
      %2662 = vmatpush1.bf16.msra.mxu0 0
      %2663 = vmatprep.subr.bf16.mxu0 0
      %2664 = vmatpush1.bf16.msra.mxu0 %v2647
      %2665 = vmatprep.subr.bf16.mxu0 0
      %2666 = vmatpush2.bf16.msra.mxu0 0
      %2667 = vmatprep.subr.bf16.mxu0 0
      %2668 = vmatpush2.bf16.msra.mxu0 0
      %2669 = vmatprep.subr.bf16.mxu0 0
      %2670 = vmatpush2.bf16.msra.mxu0 0
      %2671 = vmatprep.subr.bf16.mxu0 0
      %2672 = vmatpush2.bf16.msra.mxu0 0
      %2673 = vmatprep.subr.bf16.mxu0 0
      %2674 = vmatpush2.bf16.msra.mxu0 0
      %2675 = vmatprep.subr.bf16.mxu0 0
      %2676 = vmatpush2.bf16.msra.mxu0 0
      %2677 = vmatprep.subr.bf16.mxu0 0
      %2678 = vmatpush2.bf16.msra.mxu0 0
      %2679 = vmatprep.subr.bf16.mxu0 0
      %2680 = vmatpush2.bf16.msra.mxu0 0
      %2681 = vmatprep.mubr.bf16.mxu0 0
      %2682 = vmatmul.mubr.bf16.gmra.mxu0 %v2635
      %v2683 = vpop.f32.mrf.mxu0
      %v2684 = vadd.f32 0.0, %v2683
      %v2685 = vpop.f32.mrf.mxu0
      %v2686 = vpop.f32.mrf.mxu0
      %v2687 = vadd.f32 0.0, %v2686
      %v2688 = vpop.f32.mrf.mxu0
      %2689 = vmatprep.mubr.bf16.mxu0 0
      %2690 = vmatmul.mubr.bf16.gmra.mxu0 %v2638
      %v2691 = vpop.f32.mrf.mxu0
      %v2692 = vadd.f32 0.0, %v2691
      %v2693 = vpop.f32.mrf.mxu0
      %v2694 = vpop.f32.mrf.mxu0
      %v2695 = vadd.f32 0.0, %v2694
      %v2696 = vpop.f32.mrf.mxu0
      %2697 = vmatprep.mubr.bf16.mxu0 0
      %2698 = vmatmul.mubr.bf16.gmra.mxu0 %v2641
      %v2699 = vpop.f32.mrf.mxu0
      %v2700 = vadd.f32 0.0, %v2699
      %v2701 = vpop.f32.mrf.mxu0
      %v2702 = vpop.f32.mrf.mxu0
      %v2703 = vadd.f32 0.0, %v2702
      %v2704 = vpop.f32.mrf.mxu0
      %2705 = vmatprep.mubr.bf16.mxu0 0
      %2706 = vmatmul.mubr.bf16.gmra.mxu0 %v2644
      %v2707 = vpop.f32.mrf.mxu0
      %v2708 = vadd.f32 0.0, %v2707
      %v2709 = vpop.f32.mrf.mxu0
      %v2710 = vpop.f32.mrf.mxu0
      %v2711 = vadd.f32 0.0, %v2710
      %v2712 = vpop.f32.mrf.mxu0
      %2713 = vdwg.mxu0
      %v2714 = vadd.f32 %v2484, %v2684
      %v2715 = vadd.f32 %v2485, %v2687
      %v2716 = vadd.f32 %v2486, %v2692
      %v2717 = vadd.f32 %v2487, %v2695
      %v2718 = vadd.f32 %v2488, %v2700
      %v2719 = vadd.f32 %v2489, %v2703
      %v2720 = vadd.f32 %v2490, %v2708
      %v2721 = vadd.f32 %v2491, %v2711
      %v2722 = vld [vmem:[%s1833] sm:$0xe]
      %v2723 = vld [vmem:[%s1833 + $0x8] sm:$0xe]
      %v2724 = vld [vmem:[%s1833 + $0x10] sm:$0xe]
      %v2725 = vld [vmem:[%s1833 + $0x18] sm:$0xe]
      %v2726 = vld [vmem:[%s1833 + $0x20] sm:$0xe]
      %v2727 = vld [vmem:[%s1833 + $0x28] sm:$0xe]
      %v2728 = vld [vmem:[%s1833 + $0x30] sm:$0xe]
      %v2729 = vld [vmem:[%s1833 + $0x38] sm:$0xe]
      %v2746 = vrot.slane %v2722, 5
      %v2747 = vrot.slane %v2746, 4
      %v2748 = vrot.slane %v2493, 5
      %v2749 = vsel %vm2239, %v2747, %v2748
      %v2750 = vrot.slane %v2723, 5
      %v2751 = vrot.slane %v2750, 4
      %v2752 = vrot.slane %v2495, 5
      %v2753 = vsel %vm2239, %v2751, %v2752
      %v2754 = vrot.slane %v2724, 5
      %v2755 = vrot.slane %v2754, 4
      %v2756 = vrot.slane %v2497, 5
      %v2757 = vsel %vm2239, %v2755, %v2756
      %v2758 = vrot.slane %v2725, 5
      %v2759 = vrot.slane %v2758, 4
      %v2760 = vrot.slane %v2499, 5
      %v2761 = vsel %vm2239, %v2759, %v2760
      %v2762 = vrot.slane %v2726, 5
      %v2763 = vrot.slane %v2762, 4
      %v2764 = vrot.slane %v2501, 5
      %v2765 = vsel %vm2239, %v2763, %v2764
      %v2766 = vrot.slane %v2727, 5
      %v2767 = vrot.slane %v2766, 4
      %v2768 = vrot.slane %v2503, 5
      %v2769 = vsel %vm2239, %v2767, %v2768
      %v2770 = vrot.slane %v2728, 5
      %v2771 = vrot.slane %v2770, 4
      %v2772 = vrot.slane %v2505, 5
      %v2773 = vsel %vm2239, %v2771, %v2772
      %v2774 = vrot.slane %v2729, 5
      %v2775 = vrot.slane %v2774, 4
      %v2776 = vrot.slane %v2507, 5
      %v2777 = vsel %vm2239, %v2775, %v2776
      %s2778 = scalar_lea.vmem %s3, 20
      %v2779 = vld [vmem:[%s2778] sm:$0xf]
      %v2780 = vunpack.c.l.b16 %v2749
      %v2781 = vunpack.c.l.b16 %v2753
      %v2782 = vunpack.c.l.b16 %v2757
      %v2783 = vunpack.c.l.b16 %v2761
      %v2784 = vunpack.c.l.b16 %v2765
      %v2785 = vunpack.c.l.b16 %v2769
      %v2786 = vunpack.c.l.b16 %v2773
      %v2787 = vunpack.c.l.b16 %v2777
      %v2788 = vpack.c.b16 %v2781, %v2780
      %v2789 = vpack.c.b16 %v2783, %v2782
      %v2790 = vpack.c.b16 %v2785, %v2784
      %v2791 = vpack.c.b16 %v2787, %v2786
      %v2793 = vsel %vm2031, %v2788, 0
      %v2796 = vsel %vm2031, %v2789, 0
      %v2799 = vsel %vm2031, %v2790, 0
      %v2802 = vsel %vm2031, %v2791, 0
      %v2805 = vsel %vm2044, %v2779, 0
      %2807 = vmatprep.subr.bf16.mxu0 0
      %2808 = vmatpush1.bf16.msra.mxu0 0
      %2809 = vmatprep.subr.bf16.mxu0 0
      %2810 = vmatpush1.bf16.msra.mxu0 0
      %2811 = vmatprep.subr.bf16.mxu0 0
      %2812 = vmatpush1.bf16.msra.mxu0 0
      %2813 = vmatprep.subr.bf16.mxu0 0
      %2814 = vmatpush1.bf16.msra.mxu0 0
      %2815 = vmatprep.subr.bf16.mxu0 0
      %2816 = vmatpush1.bf16.msra.mxu0 0
      %2817 = vmatprep.subr.bf16.mxu0 0
      %2818 = vmatpush1.bf16.msra.mxu0 0
      %2819 = vmatprep.subr.bf16.mxu0 0
      %2820 = vmatpush1.bf16.msra.mxu0 0
      %2821 = vmatprep.subr.bf16.mxu0 0
      %2822 = vmatpush1.bf16.msra.mxu0 %v2805
      %2823 = vmatprep.subr.bf16.mxu0 0
      %2824 = vmatpush2.bf16.msra.mxu0 0
      %2825 = vmatprep.subr.bf16.mxu0 0
      %2826 = vmatpush2.bf16.msra.mxu0 0
      %2827 = vmatprep.subr.bf16.mxu0 0
      %2828 = vmatpush2.bf16.msra.mxu0 0
      %2829 = vmatprep.subr.bf16.mxu0 0
      %2830 = vmatpush2.bf16.msra.mxu0 0
      %2831 = vmatprep.subr.bf16.mxu0 0
      %2832 = vmatpush2.bf16.msra.mxu0 0
      %2833 = vmatprep.subr.bf16.mxu0 0
      %2834 = vmatpush2.bf16.msra.mxu0 0
      %2835 = vmatprep.subr.bf16.mxu0 0
      %2836 = vmatpush2.bf16.msra.mxu0 0
      %2837 = vmatprep.subr.bf16.mxu0 0
      %2838 = vmatpush2.bf16.msra.mxu0 0
      %2839 = vmatprep.mubr.bf16.mxu0 0
      %2840 = vmatmul.mubr.bf16.gmra.mxu0 %v2793
      %v2841 = vpop.f32.mrf.mxu0
      %v2842 = vadd.f32 0.0, %v2841
      %v2843 = vpop.f32.mrf.mxu0
      %v2844 = vpop.f32.mrf.mxu0
      %v2845 = vadd.f32 0.0, %v2844
      %v2846 = vpop.f32.mrf.mxu0
      %2847 = vmatprep.mubr.bf16.mxu0 0
      %2848 = vmatmul.mubr.bf16.gmra.mxu0 %v2796
      %v2849 = vpop.f32.mrf.mxu0
      %v2850 = vadd.f32 0.0, %v2849
      %v2851 = vpop.f32.mrf.mxu0
      %v2852 = vpop.f32.mrf.mxu0
      %v2853 = vadd.f32 0.0, %v2852
      %v2854 = vpop.f32.mrf.mxu0
      %2855 = vmatprep.mubr.bf16.mxu0 0
      %2856 = vmatmul.mubr.bf16.gmra.mxu0 %v2799
      %v2857 = vpop.f32.mrf.mxu0
      %v2858 = vadd.f32 0.0, %v2857
      %v2859 = vpop.f32.mrf.mxu0
      %v2860 = vpop.f32.mrf.mxu0
      %v2861 = vadd.f32 0.0, %v2860
      %v2862 = vpop.f32.mrf.mxu0
      %2863 = vmatprep.mubr.bf16.mxu0 0
      %2864 = vmatmul.mubr.bf16.gmra.mxu0 %v2802
      %v2865 = vpop.f32.mrf.mxu0
      %v2866 = vadd.f32 0.0, %v2865
      %v2867 = vpop.f32.mrf.mxu0
      %v2868 = vpop.f32.mrf.mxu0
      %v2869 = vadd.f32 0.0, %v2868
      %v2870 = vpop.f32.mrf.mxu0
      %2871 = vdwg.mxu0
      %v2872 = vadd.f32 %v2714, %v2842
      %v2873 = vadd.f32 %v2715, %v2845
      %v2874 = vadd.f32 %v2716, %v2850
      %v2875 = vadd.f32 %v2717, %v2853
      %v2876 = vadd.f32 %v2718, %v2858
      %v2877 = vadd.f32 %v2719, %v2861
      %v2878 = vadd.f32 %v2720, %v2866
      %v2879 = vadd.f32 %v2721, %v2869
      %s2880 = scalar_lea.vmem [#allocation2], 16
      %v2881 = vld [vmem:[%s2880] sm:$0xf]
      %v2882 = vld [vmem:[%s2880 + $0x8] sm:$0xf]
      %v2883 = vld [vmem:[%s2880 + $0x10] sm:$0xf]
      %v2884 = vld [vmem:[%s2880 + $0x18] sm:$0xf]
      %v2885 = vld [vmem:[%s2880 + $0x20] sm:$0xf]
      %v2886 = vld [vmem:[%s2880 + $0x28] sm:$0xf]
      %v2887 = vld [vmem:[%s2880 + $0x30] sm:$0xf]
      %v2888 = vld [vmem:[%s2880 + $0x38] sm:$0xf]
      %s2889 = scalar_lea.vmem %s3, 24
      %v2890 = vld [vmem:[%s2889] sm:$0xf]
      %v2899 = vunpack.c.l.b16 %v2881
      %v2900 = vunpack.c.l.b16 %v2882
      %v2901 = vunpack.c.l.b16 %v2883
      %v2902 = vunpack.c.l.b16 %v2884
      %v2903 = vunpack.c.l.b16 %v2885
      %v2904 = vunpack.c.l.b16 %v2886
      %v2905 = vunpack.c.l.b16 %v2887
      %v2906 = vunpack.c.l.b16 %v2888
      %v2907 = vpack.c.b16 %v2900, %v2899
      %v2908 = vpack.c.b16 %v2902, %v2901
      %v2909 = vpack.c.b16 %v2904, %v2903
      %v2910 = vpack.c.b16 %v2906, %v2905
      %v2912 = vsel %vm2031, %v2907, 0
      %v2915 = vsel %vm2031, %v2908, 0
      %v2918 = vsel %vm2031, %v2909, 0
      %v2921 = vsel %vm2031, %v2910, 0
      %v2924 = vsel %vm2044, %v2890, 0
      %2926 = vmatprep.subr.bf16.mxu0 0
      %2927 = vmatpush1.bf16.msra.mxu0 0
      %2928 = vmatprep.subr.bf16.mxu0 0
      %2929 = vmatpush1.bf16.msra.mxu0 0
      %2930 = vmatprep.subr.bf16.mxu0 0
      %2931 = vmatpush1.bf16.msra.mxu0 0
      %2932 = vmatprep.subr.bf16.mxu0 0
      %2933 = vmatpush1.bf16.msra.mxu0 0
      %2934 = vmatprep.subr.bf16.mxu0 0
      %2935 = vmatpush1.bf16.msra.mxu0 0
      %2936 = vmatprep.subr.bf16.mxu0 0
      %2937 = vmatpush1.bf16.msra.mxu0 0
      %2938 = vmatprep.subr.bf16.mxu0 0
      %2939 = vmatpush1.bf16.msra.mxu0 0
      %2940 = vmatprep.subr.bf16.mxu0 0
      %2941 = vmatpush1.bf16.msra.mxu0 %v2924
      %2942 = vmatprep.subr.bf16.mxu0 0
      %2943 = vmatpush2.bf16.msra.mxu0 0
      %2944 = vmatprep.subr.bf16.mxu0 0
      %2945 = vmatpush2.bf16.msra.mxu0 0
      %2946 = vmatprep.subr.bf16.mxu0 0
      %2947 = vmatpush2.bf16.msra.mxu0 0
      %2948 = vmatprep.subr.bf16.mxu0 0
      %2949 = vmatpush2.bf16.msra.mxu0 0
      %2950 = vmatprep.subr.bf16.mxu0 0
      %2951 = vmatpush2.bf16.msra.mxu0 0
      %2952 = vmatprep.subr.bf16.mxu0 0
      %2953 = vmatpush2.bf16.msra.mxu0 0
      %2954 = vmatprep.subr.bf16.mxu0 0
      %2955 = vmatpush2.bf16.msra.mxu0 0
      %2956 = vmatprep.subr.bf16.mxu0 0
      %2957 = vmatpush2.bf16.msra.mxu0 0
      %2958 = vmatprep.mubr.bf16.mxu0 0
      %2959 = vmatmul.mubr.bf16.gmra.mxu0 %v2912
      %v2960 = vpop.f32.mrf.mxu0
      %v2961 = vadd.f32 0.0, %v2960
      %v2962 = vpop.f32.mrf.mxu0
      %v2963 = vpop.f32.mrf.mxu0
      %v2964 = vadd.f32 0.0, %v2963
      %v2965 = vpop.f32.mrf.mxu0
      %2966 = vmatprep.mubr.bf16.mxu0 0
      %2967 = vmatmul.mubr.bf16.gmra.mxu0 %v2915
      %v2968 = vpop.f32.mrf.mxu0
      %v2969 = vadd.f32 0.0, %v2968
      %v2970 = vpop.f32.mrf.mxu0
      %v2971 = vpop.f32.mrf.mxu0
      %v2972 = vadd.f32 0.0, %v2971
      %v2973 = vpop.f32.mrf.mxu0
      %2974 = vmatprep.mubr.bf16.mxu0 0
      %2975 = vmatmul.mubr.bf16.gmra.mxu0 %v2918
      %v2976 = vpop.f32.mrf.mxu0
      %v2977 = vadd.f32 0.0, %v2976
      %v2978 = vpop.f32.mrf.mxu0
      %v2979 = vpop.f32.mrf.mxu0
      %v2980 = vadd.f32 0.0, %v2979
      %v2981 = vpop.f32.mrf.mxu0
      %2982 = vmatprep.mubr.bf16.mxu0 0
      %2983 = vmatmul.mubr.bf16.gmra.mxu0 %v2921
      %v2984 = vpop.f32.mrf.mxu0
      %v2985 = vadd.f32 0.0, %v2984
      %v2986 = vpop.f32.mrf.mxu0
      %v2987 = vpop.f32.mrf.mxu0
      %v2988 = vadd.f32 0.0, %v2987
      %v2989 = vpop.f32.mrf.mxu0
      %2990 = vdwg.mxu0
      %v2991 = vadd.f32 %v2872, %v2961
      %v2992 = vadd.f32 %v2873, %v2964
      %v2993 = vadd.f32 %v2874, %v2969
      %v2994 = vadd.f32 %v2875, %v2972
      %v2995 = vadd.f32 %v2876, %v2977
      %v2996 = vadd.f32 %v2877, %v2980
      %v2997 = vadd.f32 %v2878, %v2985
      %v2998 = vadd.f32 %v2879, %v2988
      %v2999 = vld [vmem:[%s2880] sm:$0xf]
      %v3000 = vld [vmem:[%s2880 + $0x4] sm:$0x1]
      %v3001 = vld [vmem:[%s2880 + $0x8] sm:$0xf]
      %v3002 = vld [vmem:[%s2880 + $0xc] sm:$0x1]
      %v3003 = vld [vmem:[%s2880 + $0x10] sm:$0xf]
      %v3004 = vld [vmem:[%s2880 + $0x14] sm:$0x1]
      %v3005 = vld [vmem:[%s2880 + $0x18] sm:$0xf]
      %v3006 = vld [vmem:[%s2880 + $0x1c] sm:$0x1]
      %v3007 = vld [vmem:[%s2880 + $0x20] sm:$0xf]
      %v3008 = vld [vmem:[%s2880 + $0x24] sm:$0x1]
      %v3009 = vld [vmem:[%s2880 + $0x28] sm:$0xf]
      %v3010 = vld [vmem:[%s2880 + $0x2c] sm:$0x1]
      %v3011 = vld [vmem:[%s2880 + $0x30] sm:$0xf]
      %v3012 = vld [vmem:[%s2880 + $0x34] sm:$0x1]
      %v3013 = vld [vmem:[%s2880 + $0x38] sm:$0xf]
      %v3014 = vld [vmem:[%s2880 + $0x3c] sm:$0x1]
      %v3016 = vshrl.u32 %v2999, 16
      %v3018 = vrot.slane %v3016, 4
      %v3019 = vshll.u32 %v2999, 16
      %v3021 = vrot.slane %v3019, 5
      %v3022 = vor.u32 %v3018, %v3021
      %v3023 = vrot.slane %v3022, 4
      %v3025 = vshll.u32 %v3000, 16
      %v3027 = vrot.slane %v3025, 5
      %v3028 = vsel %vm525, %v3023, %v3027
      %v3030 = vshrl.u32 %v3001, 16
      %v3032 = vrot.slane %v3030, 4
      %v3033 = vshll.u32 %v3001, 16
      %v3035 = vrot.slane %v3033, 5
      %v3036 = vor.u32 %v3032, %v3035
      %v3037 = vrot.slane %v3036, 4
      %v3039 = vshll.u32 %v3002, 16
      %v3041 = vrot.slane %v3039, 5
      %v3042 = vsel %vm525, %v3037, %v3041
      %v3044 = vshrl.u32 %v3003, 16
      %v3046 = vrot.slane %v3044, 4
      %v3047 = vshll.u32 %v3003, 16
      %v3049 = vrot.slane %v3047, 5
      %v3050 = vor.u32 %v3046, %v3049
      %v3051 = vrot.slane %v3050, 4
      %v3053 = vshll.u32 %v3004, 16
      %v3055 = vrot.slane %v3053, 5
      %v3056 = vsel %vm525, %v3051, %v3055
      %v3058 = vshrl.u32 %v3005, 16
      %v3060 = vrot.slane %v3058, 4
      %v3061 = vshll.u32 %v3005, 16
      %v3063 = vrot.slane %v3061, 5
      %v3064 = vor.u32 %v3060, %v3063
      %v3065 = vrot.slane %v3064, 4
      %v3067 = vshll.u32 %v3006, 16
      %v3069 = vrot.slane %v3067, 5
      %v3070 = vsel %vm525, %v3065, %v3069
      %v3072 = vshrl.u32 %v3007, 16
      %v3074 = vrot.slane %v3072, 4
      %v3075 = vshll.u32 %v3007, 16
      %v3077 = vrot.slane %v3075, 5
      %v3078 = vor.u32 %v3074, %v3077
      %v3079 = vrot.slane %v3078, 4
      %v3081 = vshll.u32 %v3008, 16
      %v3083 = vrot.slane %v3081, 5
      %v3084 = vsel %vm525, %v3079, %v3083
      %v3086 = vshrl.u32 %v3009, 16
      %v3088 = vrot.slane %v3086, 4
      %v3089 = vshll.u32 %v3009, 16
      %v3091 = vrot.slane %v3089, 5
      %v3092 = vor.u32 %v3088, %v3091
      %v3093 = vrot.slane %v3092, 4
      %v3095 = vshll.u32 %v3010, 16
      %v3097 = vrot.slane %v3095, 5
      %v3098 = vsel %vm525, %v3093, %v3097
      %v3100 = vshrl.u32 %v3011, 16
      %v3102 = vrot.slane %v3100, 4
      %v3103 = vshll.u32 %v3011, 16
      %v3105 = vrot.slane %v3103, 5
      %v3106 = vor.u32 %v3102, %v3105
      %v3107 = vrot.slane %v3106, 4
      %v3109 = vshll.u32 %v3012, 16
      %v3111 = vrot.slane %v3109, 5
      %v3112 = vsel %vm525, %v3107, %v3111
      %v3114 = vshrl.u32 %v3013, 16
      %v3116 = vrot.slane %v3114, 4
      %v3117 = vshll.u32 %v3013, 16
      %v3119 = vrot.slane %v3117, 5
      %v3120 = vor.u32 %v3116, %v3119
      %v3121 = vrot.slane %v3120, 4
      %v3123 = vshll.u32 %v3014, 16
      %v3125 = vrot.slane %v3123, 5
      %v3126 = vsel %vm525, %v3121, %v3125
      %s3127 = scalar_lea.vmem %s3, 28
      %v3128 = vld [vmem:[%s3127] sm:$0xf]
      %v3129 = vunpack.c.l.b16 %v3028
      %v3130 = vunpack.c.l.b16 %v3042
      %v3131 = vunpack.c.l.b16 %v3056
      %v3132 = vunpack.c.l.b16 %v3070
      %v3133 = vunpack.c.l.b16 %v3084
      %v3134 = vunpack.c.l.b16 %v3098
      %v3135 = vunpack.c.l.b16 %v3112
      %v3136 = vunpack.c.l.b16 %v3126
      %v3137 = vpack.c.b16 %v3130, %v3129
      %v3138 = vpack.c.b16 %v3132, %v3131
      %v3139 = vpack.c.b16 %v3134, %v3133
      %v3140 = vpack.c.b16 %v3136, %v3135
      %v3142 = vsel %vm2031, %v3137, 0
      %v3145 = vsel %vm2031, %v3138, 0
      %v3148 = vsel %vm2031, %v3139, 0
      %v3151 = vsel %vm2031, %v3140, 0
      %v3154 = vsel %vm2044, %v3128, 0
      %3156 = vmatprep.subr.bf16.mxu0 0
      %3157 = vmatpush1.bf16.msra.mxu0 0
      %3158 = vmatprep.subr.bf16.mxu0 0
      %3159 = vmatpush1.bf16.msra.mxu0 0
      %3160 = vmatprep.subr.bf16.mxu0 0
      %3161 = vmatpush1.bf16.msra.mxu0 0
      %3162 = vmatprep.subr.bf16.mxu0 0
      %3163 = vmatpush1.bf16.msra.mxu0 0
      %3164 = vmatprep.subr.bf16.mxu0 0
      %3165 = vmatpush1.bf16.msra.mxu0 0
      %3166 = vmatprep.subr.bf16.mxu0 0
      %3167 = vmatpush1.bf16.msra.mxu0 0
      %3168 = vmatprep.subr.bf16.mxu0 0
      %3169 = vmatpush1.bf16.msra.mxu0 0
      %3170 = vmatprep.subr.bf16.mxu0 0
      %3171 = vmatpush1.bf16.msra.mxu0 %v3154
      %3172 = vmatprep.subr.bf16.mxu0 0
      %3173 = vmatpush2.bf16.msra.mxu0 0
      %3174 = vmatprep.subr.bf16.mxu0 0
      %3175 = vmatpush2.bf16.msra.mxu0 0
      %3176 = vmatprep.subr.bf16.mxu0 0
      %3177 = vmatpush2.bf16.msra.mxu0 0
      %3178 = vmatprep.subr.bf16.mxu0 0
      %3179 = vmatpush2.bf16.msra.mxu0 0
      %3180 = vmatprep.subr.bf16.mxu0 0
      %3181 = vmatpush2.bf16.msra.mxu0 0
      %3182 = vmatprep.subr.bf16.mxu0 0
      %3183 = vmatpush2.bf16.msra.mxu0 0
      %3184 = vmatprep.subr.bf16.mxu0 0
      %3185 = vmatpush2.bf16.msra.mxu0 0
      %3186 = vmatprep.subr.bf16.mxu0 0
      %3187 = vmatpush2.bf16.msra.mxu0 0
      %3188 = vmatprep.mubr.bf16.mxu0 0
      %3189 = vmatmul.mubr.bf16.gmra.mxu0 %v3142
      %v3190 = vpop.f32.mrf.mxu0
      %v3191 = vadd.f32 0.0, %v3190
      %v3192 = vpop.f32.mrf.mxu0
      %v3193 = vpop.f32.mrf.mxu0
      %v3194 = vadd.f32 0.0, %v3193
      %v3195 = vpop.f32.mrf.mxu0
      %3196 = vmatprep.mubr.bf16.mxu0 0
      %3197 = vmatmul.mubr.bf16.gmra.mxu0 %v3145
      %v3198 = vpop.f32.mrf.mxu0
      %v3199 = vadd.f32 0.0, %v3198
      %v3200 = vpop.f32.mrf.mxu0
      %v3201 = vpop.f32.mrf.mxu0
      %v3202 = vadd.f32 0.0, %v3201
      %v3203 = vpop.f32.mrf.mxu0
      %3204 = vmatprep.mubr.bf16.mxu0 0
      %3205 = vmatmul.mubr.bf16.gmra.mxu0 %v3148
      %v3206 = vpop.f32.mrf.mxu0
      %v3207 = vadd.f32 0.0, %v3206
      %v3208 = vpop.f32.mrf.mxu0
      %v3209 = vpop.f32.mrf.mxu0
      %v3210 = vadd.f32 0.0, %v3209
      %v3211 = vpop.f32.mrf.mxu0
      %3212 = vmatprep.mubr.bf16.mxu0 0
      %3213 = vmatmul.mubr.bf16.gmra.mxu0 %v3151
      %v3214 = vpop.f32.mrf.mxu0
      %v3215 = vadd.f32 0.0, %v3214
      %v3216 = vpop.f32.mrf.mxu0
      %v3217 = vpop.f32.mrf.mxu0
      %v3218 = vadd.f32 0.0, %v3217
      %v3219 = vpop.f32.mrf.mxu0
      %3220 = vdwg.mxu0
      %v3221 = vadd.f32 %v2991, %v3191
      %v3222 = vadd.f32 %v2992, %v3194
      %v3223 = vadd.f32 %v2993, %v3199
      %v3224 = vadd.f32 %v2994, %v3202
      %v3225 = vadd.f32 %v2995, %v3207
      %v3226 = vadd.f32 %v2996, %v3210
      %v3227 = vadd.f32 %v2997, %v3215
      %v3228 = vadd.f32 %v2998, %v3218
      %v3229 = vld [vmem:[%s2880] sm:$0xe]
      %v3230 = vld [vmem:[%s2880 + $0x8] sm:$0xe]
      %v3231 = vld [vmem:[%s2880 + $0x10] sm:$0xe]
      %v3232 = vld [vmem:[%s2880 + $0x18] sm:$0xe]
      %v3233 = vld [vmem:[%s2880 + $0x20] sm:$0xe]
      %v3234 = vld [vmem:[%s2880 + $0x28] sm:$0xe]
      %v3235 = vld [vmem:[%s2880 + $0x30] sm:$0xe]
      %v3236 = vld [vmem:[%s2880 + $0x38] sm:$0xe]
      %v3253 = vrot.slane %v3229, 5
      %v3254 = vrot.slane %v3253, 4
      %v3255 = vrot.slane %v3000, 5
      %v3256 = vsel %vm2239, %v3254, %v3255
      %v3257 = vrot.slane %v3230, 5
      %v3258 = vrot.slane %v3257, 4
      %v3259 = vrot.slane %v3002, 5
      %v3260 = vsel %vm2239, %v3258, %v3259
      %v3261 = vrot.slane %v3231, 5
      %v3262 = vrot.slane %v3261, 4
      %v3263 = vrot.slane %v3004, 5
      %v3264 = vsel %vm2239, %v3262, %v3263
      %v3265 = vrot.slane %v3232, 5
      %v3266 = vrot.slane %v3265, 4
      %v3267 = vrot.slane %v3006, 5
      %v3268 = vsel %vm2239, %v3266, %v3267
      %v3269 = vrot.slane %v3233, 5
      %v3270 = vrot.slane %v3269, 4
      %v3271 = vrot.slane %v3008, 5
      %v3272 = vsel %vm2239, %v3270, %v3271
      %v3273 = vrot.slane %v3234, 5
      %v3274 = vrot.slane %v3273, 4
      %v3275 = vrot.slane %v3010, 5
      %v3276 = vsel %vm2239, %v3274, %v3275
      %v3277 = vrot.slane %v3235, 5
      %v3278 = vrot.slane %v3277, 4
      %v3279 = vrot.slane %v3012, 5
      %v3280 = vsel %vm2239, %v3278, %v3279
      %v3281 = vrot.slane %v3236, 5
      %v3282 = vrot.slane %v3281, 4
      %v3283 = vrot.slane %v3014, 5
      %v3284 = vsel %vm2239, %v3282, %v3283
      %s3285 = scalar_lea.vmem %s3, 32
      %v3286 = vld [vmem:[%s3285] sm:$0xf]
      %v3287 = vunpack.c.l.b16 %v3256
      %v3288 = vunpack.c.l.b16 %v3260
      %v3289 = vunpack.c.l.b16 %v3264
      %v3290 = vunpack.c.l.b16 %v3268
      %v3291 = vunpack.c.l.b16 %v3272
      %v3292 = vunpack.c.l.b16 %v3276
      %v3293 = vunpack.c.l.b16 %v3280
      %v3294 = vunpack.c.l.b16 %v3284
      %v3295 = vpack.c.b16 %v3288, %v3287
      %v3296 = vpack.c.b16 %v3290, %v3289
      %v3297 = vpack.c.b16 %v3292, %v3291
      %v3298 = vpack.c.b16 %v3294, %v3293
      %v3300 = vsel %vm2031, %v3295, 0
      %v3303 = vsel %vm2031, %v3296, 0
      %v3306 = vsel %vm2031, %v3297, 0
      %v3309 = vsel %vm2031, %v3298, 0
      %v3312 = vsel %vm2044, %v3286, 0
      %3314 = vmatprep.subr.bf16.mxu0 0
      %3315 = vmatpush1.bf16.msra.mxu0 0
      %3316 = vmatprep.subr.bf16.mxu0 0
      %3317 = vmatpush1.bf16.msra.mxu0 0
      %3318 = vmatprep.subr.bf16.mxu0 0
      %3319 = vmatpush1.bf16.msra.mxu0 0
      %3320 = vmatprep.subr.bf16.mxu0 0
      %3321 = vmatpush1.bf16.msra.mxu0 0
      %3322 = vmatprep.subr.bf16.mxu0 0
      %3323 = vmatpush1.bf16.msra.mxu0 0
      %3324 = vmatprep.subr.bf16.mxu0 0
      %3325 = vmatpush1.bf16.msra.mxu0 0
      %3326 = vmatprep.subr.bf16.mxu0 0
      %3327 = vmatpush1.bf16.msra.mxu0 0
      %3328 = vmatprep.subr.bf16.mxu0 0
      %3329 = vmatpush1.bf16.msra.mxu0 %v3312
      %3330 = vmatprep.subr.bf16.mxu0 0
      %3331 = vmatpush2.bf16.msra.mxu0 0
      %3332 = vmatprep.subr.bf16.mxu0 0
      %3333 = vmatpush2.bf16.msra.mxu0 0
      %3334 = vmatprep.subr.bf16.mxu0 0
      %3335 = vmatpush2.bf16.msra.mxu0 0
      %3336 = vmatprep.subr.bf16.mxu0 0
      %3337 = vmatpush2.bf16.msra.mxu0 0
      %3338 = vmatprep.subr.bf16.mxu0 0
      %3339 = vmatpush2.bf16.msra.mxu0 0
      %3340 = vmatprep.subr.bf16.mxu0 0
      %3341 = vmatpush2.bf16.msra.mxu0 0
      %3342 = vmatprep.subr.bf16.mxu0 0
      %3343 = vmatpush2.bf16.msra.mxu0 0
      %3344 = vmatprep.subr.bf16.mxu0 0
      %3345 = vmatpush2.bf16.msra.mxu0 0
      %3346 = vmatprep.mubr.bf16.mxu0 0
      %3347 = vmatmul.mubr.bf16.gmra.mxu0 %v3300
      %v3348 = vpop.f32.mrf.mxu0
      %v3349 = vadd.f32 0.0, %v3348
      %v3350 = vpop.f32.mrf.mxu0
      %v3351 = vpop.f32.mrf.mxu0
      %v3352 = vadd.f32 0.0, %v3351
      %v3353 = vpop.f32.mrf.mxu0
      %3354 = vmatprep.mubr.bf16.mxu0 0
      %3355 = vmatmul.mubr.bf16.gmra.mxu0 %v3303
      %v3356 = vpop.f32.mrf.mxu0
      %v3357 = vadd.f32 0.0, %v3356
      %v3358 = vpop.f32.mrf.mxu0
      %v3359 = vpop.f32.mrf.mxu0
      %v3360 = vadd.f32 0.0, %v3359
      %v3361 = vpop.f32.mrf.mxu0
      %3362 = vmatprep.mubr.bf16.mxu0 0
      %3363 = vmatmul.mubr.bf16.gmra.mxu0 %v3306
      %v3364 = vpop.f32.mrf.mxu0
      %v3365 = vadd.f32 0.0, %v3364
      %v3366 = vpop.f32.mrf.mxu0
      %v3367 = vpop.f32.mrf.mxu0
      %v3368 = vadd.f32 0.0, %v3367
      %v3369 = vpop.f32.mrf.mxu0
      %3370 = vmatprep.mubr.bf16.mxu0 0
      %3371 = vmatmul.mubr.bf16.gmra.mxu0 %v3309
      %v3372 = vpop.f32.mrf.mxu0
      %v3373 = vadd.f32 0.0, %v3372
      %v3374 = vpop.f32.mrf.mxu0
      %v3375 = vpop.f32.mrf.mxu0
      %v3376 = vadd.f32 0.0, %v3375
      %v3377 = vpop.f32.mrf.mxu0
      %3378 = vdwg.mxu0
      %v3379 = vadd.f32 %v3221, %v3349
      %v3380 = vadd.f32 %v3222, %v3352
      %v3381 = vadd.f32 %v3223, %v3357
      %v3382 = vadd.f32 %v3224, %v3360
      %v3383 = vadd.f32 %v3225, %v3365
      %v3384 = vadd.f32 %v3226, %v3368
      %v3385 = vadd.f32 %v3227, %v3373
      %v3386 = vadd.f32 %v3228, %v3376
      %v3387 = vld [vmem:[%s4] sm:$0x1]
      %v3389 = vlaneseq
      %v3390 = vshrl.u32 %v3389, 7
      %v3391 = vsub.s32 0, %v3390
      %v3392 = vrot.slane %v3387, %v3391
      %v3394 = vadd.f32 %v3379, %v3392
      %v3395 = vadd.f32 %v3380, %v3392
      %v3396 = vadd.f32 %v3381, %v3392
      %v3397 = vadd.f32 %v3382, %v3392
      %v3398 = vadd.f32 %v3383, %v3392
      %v3399 = vadd.f32 %v3384, %v3392
      %v3400 = vadd.f32 %v3385, %v3392
      %v3401 = vadd.f32 %v3386, %v3392
      %v3402 = vld [vmem:[%s5] sm:$0x3]
      %v3403 = vld [vmem:[%s6] sm:$0x1]
      %v3405 = vlaneseq
      %v3406 = vshrl.u32 %v3405, 7
      %v3407 = vsub.s32 0, %v3406
      %v3408 = vrot.slane %v3403, %v3407
      %v3411 = vsel %vm338, %v3402, 0
      %3413 = vmatprep.subr.bf16.mxu0 0
      %3414 = vmatpush1.bf16.msra.mxu0 0
      %3415 = vmatprep.subr.bf16.mxu0 0
      %3416 = vmatpush1.bf16.msra.mxu0 0
      %3417 = vmatprep.subr.bf16.mxu0 0
      %3418 = vmatpush1.bf16.msra.mxu0 0
      %3419 = vmatprep.subr.bf16.mxu0 0
      %3420 = vmatpush1.bf16.msra.mxu0 0
      %3421 = vmatprep.subr.bf16.mxu0 0
      %3422 = vmatpush1.bf16.msra.mxu0 0
      %3423 = vmatprep.subr.bf16.mxu0 0
      %3424 = vmatpush1.bf16.msra.mxu0 0
      %3425 = vmatprep.subr.bf16.mxu0 0
      %3426 = vmatpush1.bf16.msra.mxu0 0
      %3427 = vmatprep.subr.bf16.mxu0 0
      %3428 = vmatpush1.bf16.msra.mxu0 %v3411
      %3429 = vmatprep.subr.bf16.mxu0 0
      %3430 = vmatpush2.bf16.msra.mxu0 0
      %3431 = vmatprep.subr.bf16.mxu0 0
      %3432 = vmatpush2.bf16.msra.mxu0 0
      %3433 = vmatprep.subr.bf16.mxu0 0
      %3434 = vmatpush2.bf16.msra.mxu0 0
      %3435 = vmatprep.subr.bf16.mxu0 0
      %3436 = vmatpush2.bf16.msra.mxu0 0
      %3437 = vmatprep.subr.bf16.mxu0 0
      %3438 = vmatpush2.bf16.msra.mxu0 0
      %3439 = vmatprep.subr.bf16.mxu0 0
      %3440 = vmatpush2.bf16.msra.mxu0 0
      %3441 = vmatprep.subr.bf16.mxu0 0
      %3442 = vmatpush2.bf16.msra.mxu0 0
      %3443 = vmatprep.subr.bf16.mxu0 0
      %3444 = vmatpush2.bf16.msra.mxu0 0
      %3445 = vmatprep.mubr.bf16.mxu0 0
      %3446 = vmatmul.mubr.bf16.gmra.mxu0 %v891
      %v3447 = vpop.f32.mrf.mxu0
      %v3448 = vadd.f32 %v3408, %v3447
      %v3449 = vpop.f32.mrf.mxu0
      %v3450 = vpop.f32.mrf.mxu0
      %v3451 = vadd.f32 %v3408, %v3450
      %v3452 = vpop.f32.mrf.mxu0
      %3453 = vmatprep.mubr.bf16.mxu0 0
      %3454 = vmatmul.mubr.bf16.gmra.mxu0 %v894
      %v3455 = vpop.f32.mrf.mxu0
      %v3456 = vadd.f32 %v3408, %v3455
      %v3457 = vpop.f32.mrf.mxu0
      %v3458 = vpop.f32.mrf.mxu0
      %v3459 = vadd.f32 %v3408, %v3458
      %v3460 = vpop.f32.mrf.mxu0
      %3461 = vmatprep.mubr.bf16.mxu0 0
      %3462 = vmatmul.mubr.bf16.gmra.mxu0 %v897
      %v3463 = vpop.f32.mrf.mxu0
      %v3464 = vadd.f32 %v3408, %v3463
      %v3465 = vpop.f32.mrf.mxu0
      %v3466 = vpop.f32.mrf.mxu0
      %v3467 = vadd.f32 %v3408, %v3466
      %v3468 = vpop.f32.mrf.mxu0
      %3469 = vmatprep.mubr.bf16.mxu0 0
      %3470 = vmatmul.mubr.bf16.gmra.mxu0 %v900
      %v3471 = vpop.f32.mrf.mxu0
      %v3472 = vadd.f32 %v3408, %v3471
      %v3473 = vpop.f32.mrf.mxu0
      %v3474 = vpop.f32.mrf.mxu0
      %v3475 = vadd.f32 %v3408, %v3474
      %v3476 = vpop.f32.mrf.mxu0
      %3477 = vdwg.mxu0
      %v3478 = vadd.f32 %v3394, %v3448
      %v3479 = vadd.f32 %v3395, %v3451
      %v3480 = vadd.f32 %v3396, %v3456
      %v3481 = vadd.f32 %v3397, %v3459
      %v3482 = vadd.f32 %v3398, %v3464
      %v3483 = vadd.f32 %v3399, %v3467
      %v3484 = vadd.f32 %v3400, %v3472
      %v3485 = vadd.f32 %v3401, %v3475
      %v3486 = vmax.f32 %v3478, 0.0
      %v3487 = vmax.f32 %v3479, 0.0
      %v3488 = vmax.f32 %v3480, 0.0
      %v3489 = vmax.f32 %v3481, 0.0
      %v3490 = vmax.f32 %v3482, 0.0
      %v3491 = vmax.f32 %v3483, 0.0
      %v3492 = vmax.f32 %v3484, 0.0
      %v3493 = vmax.f32 %v3485, 0.0
      %3494 = vst.msk [vmem:[%s283] sm:$0xff] %vm2031, %v3486
      %3495 = vst.msk [vmem:[%s283 + $0x8] sm:$0xff] %vm2031, %v3487
      %3496 = vst.msk [vmem:[%s283 + $0x10] sm:$0xff] %vm2031, %v3488
      %3497 = vst.msk [vmem:[%s283 + $0x18] sm:$0xff] %vm2031, %v3489
      %3498 = vst.msk [vmem:[%s283 + $0x20] sm:$0xff] %vm2031, %v3490
      %3499 = vst.msk [vmem:[%s283 + $0x28] sm:$0xff] %vm2031, %v3491
      %3500 = vst.msk [vmem:[%s283 + $0x30] sm:$0xff] %vm2031, %v3492
      %3501 = vst.msk [vmem:[%s283 + $0x38] sm:$0xff] %vm2031, %v3493
      %p3502 = scmp.lt.s32.totalorder %s18, 1
      %s3503 = scalar_select %p3502, %s18, 1
      %s3504 = smul.addr %s3503, 8
      %s3505 = smul.addr %s3504, 8
      %s3506 = scalar_lea.vmem %s7, %s3505
      // Predicated region
      $region49: #{basic_block_forward.1} parent=47 // pred_check
        %p3507 = pneg %p188
      $region50: #{basic_block_forward.1} parent=47 // pred_check_branch
        %3509 = sbr.rel (%p3507) target = $region52
      $region51: #{basic_block_forward.1} parent=47 // pred_region
        _
      $region52: #{basic_block_forward.1} parent=47 // pred_fallthru
        _
    $region48: #{basic_block_forward.1} parent=5 // pred_fallthru
      _
    %p3510 = scmp.le.s32.totalorder 2, %s13
    // Predicated region
    $region53: #{basic_block_forward.1} parent=5 // pred_check
      %p3511 = pneg %p3510
    $region54: #{basic_block_forward.1} parent=5 // pred_check_branch
      %3513 = sbr.rel (%p3511) target = $region56
    $region55: #{basic_block_forward.1} parent=5 // pred_region
      %s3514 = ssub.s32 %s13, 2
      // Predicated region
      $region57: #{basic_block_forward.1} parent=55 // pred_check
        %p3515 = pneg %p194
      $region58: #{basic_block_forward.1} parent=55 // pred_check_branch
        %3517 = sbr.rel (%p3515) target = $region60
      $region59: #{basic_block_forward.1} parent=55 // pred_region
        %p3518 = scmp.lt.s32.totalorder %s19, 1
        %s3519 = scalar_select %p3518, %s19, 1
        %s3520 = smul.addr %s3519, 8
        %s3521 = smul.addr %s3520, 8
        %s3522 = scalar_lea.vmem %s7, %s3521
      $region60: #{basic_block_forward.1} parent=55 // pred_fallthru
        _
    $region56: #{basic_block_forward.1} parent=5 // pred_fallthru
      _
  $region6: #{basic_block_forward.1} parent=0 // loop_footer
    %s17 = sadd.s32 1, %s13
  $region7: #{basic_block_forward.1} parent=0 // loop_footer_branch
    %12 = sbr.rel target = $region3
  $region8: #{basic_block_forward.1} parent=0 // loop_exit
    _

</llo_original>
